<compile_context>
chip_gen: v6e
topology: v6e:2x2x1
jax: 0.10.0
libtpu: 0.0.40
codegen_flags: <defaults>
</compile_context>

<pallas_src>
import jax
import jax.numpy as jnp
from jax.experimental import pallas as pl
from jax.experimental.pallas import tpu as pltpu


SUB = 8            # sublanes per batch slab (full f32 vreg tile height)
SLAB_LANE = 512    # lanes per in-kernel slab (4 vregs wide)
MAX_SLABS = 16     # slabs per grid step -> up to 8 * 16 * 512 = 65536 rows / step


def _l2_kernel(x_ref, w1_ref, b1_ref, w2_ref, b2_ref, o_ref):
    """Fused Linear(1->n_unit) -> ReLU -> Linear(n_unit->1); batch on (sublane, lane).

    x_ref, o_ref : (SUB, LANES) f32 VMEM  -- one batch block
    w1_ref, b1_ref, w2_ref : (n_unit,) f32 SMEM
    b2_ref : (1,) f32 SMEM
    """
    n_unit = w1_ref.shape[0]
    lanes = x_ref.shape[1]
    n_slabs = lanes // SLAB_LANE
    b2 = b2_ref[0]

    @pl.loop(0, n_slabs)
    def _(j):
        off = pl.multiple_of(j * SLAB_LANE, SLAB_LANE)
        x = x_ref[:, pl.ds(off, SLAB_LANE)]                 # (SUB, SLAB_LANE)
        acc = jnp.full(x.shape, b2, jnp.float32)            # fold output bias into init
        # Per-unit fused accumulate: hidden tensor is never materialized.
        for u in range(n_unit):                             # unrolled; ~5 VALU ops/unit/vreg
            h = jnp.maximum(w1_ref[u] * x + b1_ref[u], 0.0)
            acc = acc + h * w2_ref[u]
        o_ref[:, pl.ds(off, SLAB_LANE)] = acc


def _block_config(batch):
    """Static (python) choice of grid length and lanes-per-block for a batch size."""
    slabs_total = pl.cdiv(max(batch, 1), SUB * SLAB_LANE)
    # Prefer >= 2 grid steps when there is enough work (v7x has 2 TensorCores),
    # but cap the block at MAX_SLABS slabs so VMEM stays small and DMAs pipeline.
    slabs_per_block = max(1, min(MAX_SLABS, pl.cdiv(slabs_total, 2)))
    num_tiles = pl.cdiv(slabs_total, slabs_per_block)
    return num_tiles, slabs_per_block * SLAB_LANE


def l2_prepare_params(w1, b1, w2, b2):
    """One-time re-layout of PyTorch nn.Linear parameters (flat f32, SMEM-friendly).

    w1: [n_unit, n_in=1], b1: [n_unit], w2: [n_out=1, n_unit], b2: [n_out=1].
    """
    n_unit = w1.shape[0]
    if w1.shape[1] != 1 or w2.shape[0] != 1:
        # TODO(synk): general n_in/n_out would need a tiled MXU matmul path; L2's spec is 1->80->1.
        raise NotImplementedError("kernel is specialized for n_in == n_out == 1")
    w1c = jnp.asarray(w1, jnp.float32).reshape(n_unit)
    b1c = jnp.asarray(b1, jnp.float32).reshape(n_unit)
    w2c = jnp.asarray(w2, jnp.float32).reshape(n_unit)
    b2c = jnp.asarray(b2, jnp.float32).reshape(1)
    return w1c, b1c, w2c, b2c


@jax.jit
def l2_forward(x, params):
    """x: [B, 1] f32 -> [B, 1] f32  (== fc_out(relu(fc_in(x))))."""
    w1c, b1c, w2c, b2c = params
    B = x.shape[0]
    num_tiles, lanes = _block_config(B)
    b_pad = num_tiles * SUB * lanes

    xf = jnp.asarray(x, jnp.float32).reshape(B)
    if b_pad != B:
        xf = jnp.pad(xf, (0, b_pad - B))         # only copies when B isn't tile-aligned
    x2 = xf.reshape(num_tiles * SUB, lanes)      # batch on the lane axis (lane-dense)

    smem = pl.BlockSpec(memory_space=pltpu.MemorySpace.SMEM)
    out2 = pl.pallas_call(
        _l2_kernel,
        out_shape=jax.ShapeDtypeStruct((num_tiles * SUB, lanes), jnp.float32),
        grid=(num_tiles,),
        in_specs=[
            pl.BlockSpec((SUB, lanes), lambda i: (i, 0)),   # x block (auto double-buffered)
            smem, smem, smem, smem,                         # w1, b1, w2, b2 (scalars)
        ],
        out_specs=pl.BlockSpec((SUB, lanes), lambda i: (i, 0)),
        compiler_params=pltpu.CompilerParams(
            dimension_semantics=("parallel",),
        ),
    )(x2, w1c, b1c, w2c, b2c)

    out = out2.reshape(b_pad)
    if b_pad != B:
        out = out[:B]
    return out.reshape(B, 1)


def init_params(key, n_in=1, n_out=1, n_unit=80):
    """Deterministic init mimicking torch.nn.Linear default (U(-1/sqrt(fan_in), +))."""
    k1, k2, k3, k4 = jax.random.split(key, 4)
    lim1 = 1.0 / jnp.sqrt(jnp.float32(n_in))
    lim2 = 1.0 / jnp.sqrt(jnp.float32(n_unit))
    w1 = jax.random.uniform(k1, (n_unit, n_in), jnp.float32, -lim1, lim1)
    b1 = jax.random.uniform(k2, (n_unit,), jnp.float32, -lim1, lim1)
    w2 = jax.random.uniform(k3, (n_out, n_unit), jnp.float32, -lim2, lim2)
    b2 = jax.random.uniform(k4, (n_out,), jnp.float32, -lim2, lim2)
    return w1, b1, w2, b2


def _reference(x, w1, b1, w2, b2):
    # Pure-JAX elementwise reference of the same math (avoids MXU precision noise).
    h = jnp.maximum(x[:, 0:1] * w1[:, 0][None, :] + b1[None, :], 0.0)      # [B, n_unit]
    return jnp.sum(h * w2[0][None, :], axis=-1, keepdims=True) + b2[None, :]


if __name__ == "__main__":
    key = jax.random.PRNGKey(0)
    kx, kx2, kp = jax.random.split(key, 3)

    n_in, n_out, n_unit = 1, 1, 80
    w1, b1, w2, b2 = init_params(kp, n_in=n_in, n_out=n_out, n_unit=n_unit)
    params = l2_prepare_params(w1, b1, w2, b2)          # one-time layout prep (hoisted)

    # Small batch (single grid tile, exercises padded ragged tail).
    B1 = 300
    x1 = jax.random.normal(kx, (B1, n_in), jnp.float32)
    out1 = jax.block_until_ready(l2_forward(x1, params))
    ref1 = _reference(x1, w1, b1, w2, b2)
    assert out1.shape == (B1, n_out)
    assert jnp.allclose(out1, ref1, atol=1e-4, rtol=1e-5), float(jnp.max(jnp.abs(out1 - ref1)))

    # Larger batch (>=2 grid tiles, multiple in-kernel slabs).
    B2 = 10_000
    x2 = jax.random.normal(kx2, (B2, n_in), jnp.float32)
    out2 = jax.block_until_ready(l2_forward(x2, params))
    ref2 = _reference(x2, w1, b1, w2, b2)
    assert out2.shape == (B2, n_out)
    assert jnp.allclose(out2, ref2, atol=1e-4, rtol=1e-5), float(jnp.max(jnp.abs(out2 - ref2)))

    print("KERNEL_OK")
</pallas_src>

<mosaic_0001>
module attributes {stable_mosaic.version = 11 : i64} {
  func.func @_l2_kernel(%arg0: i32, %arg1: memref<8x512xf32, #tpu.memory_space<vmem>>, %arg2: memref<80xf32, #tpu.memory_space<smem>>, %arg3: memref<80xf32, #tpu.memory_space<smem>>, %arg4: memref<80xf32, #tpu.memory_space<smem>>, %arg5: memref<1xf32, #tpu.memory_space<smem>>, %arg6: memref<8x512xf32, #tpu.memory_space<vmem>>) attributes {dimension_semantics = [#tpu.dimension_semantics<parallel>], iteration_bounds = array<i64: 1>, scalar_prefetch = 0 : i64, scratch_operands = 0 : i64, tpu.core_type = #tpu.core_type<tc>, window_params = [{transform_indices = @transform_0, window_bounds = array<i64: 8, 512>}, {transform_indices = @transform_1, window_bounds = array<i64: 80>}, {transform_indices = @transform_2, window_bounds = array<i64: 80>}, {transform_indices = @transform_3, window_bounds = array<i64: 80>}, {transform_indices = @transform_4, window_bounds = array<i64: 1>}, {transform_indices = @transform_5, window_bounds = array<i64: 8, 512>}]} {
    %c0 = arith.constant 0 : index
    %0 = memref.load %arg5[%c0] : memref<1xf32, #tpu.memory_space<smem>>
    %c0_i32 = arith.constant 0 : i32
    %c1_i32 = arith.constant 1 : i32
    %1 = arith.muli %c0_i32, %c1_i32 : i32
    %c0_i32_0 = arith.constant 0 : i32
    %2 = arith.addi %c0_i32_0, %1 : i32
    %c512_i32 = arith.constant 512 : i32
    %3 = arith.muli %2, %c512_i32 : i32
    %4 = tpu.assume_multiple %3, 512 : i32
    %c0_1 = arith.constant 0 : index
    %5 = arith.index_cast %4 : i32 to index
    %6 = vector.load %arg1[%c0_1, %5] : memref<8x512xf32, #tpu.memory_space<vmem>>, vector<8x512xf32>
    %7 = vector.broadcast %0 : f32 to vector<8x512xf32>
    %c0_2 = arith.constant 0 : index
    %8 = memref.load %arg2[%c0_2] : memref<80xf32, #tpu.memory_space<smem>>
    %9 = vector.broadcast %8 : f32 to vector<8x512xf32>
    %10 = arith.mulf %9, %6 : vector<8x512xf32>
    %c0_3 = arith.constant 0 : index
    %11 = memref.load %arg3[%c0_3] : memref<80xf32, #tpu.memory_space<smem>>
    %12 = vector.broadcast %11 : f32 to vector<8x512xf32>
    %13 = arith.addf %10, %12 : vector<8x512xf32>
    %cst = arith.constant 0.000000e+00 : f32
    %14 = vector.broadcast %cst : f32 to vector<8x512xf32>
    %15 = arith.maximumf %13, %14 : vector<8x512xf32>
    %c0_4 = arith.constant 0 : index
    %16 = memref.load %arg4[%c0_4] : memref<80xf32, #tpu.memory_space<smem>>
    %17 = vector.broadcast %16 : f32 to vector<8x512xf32>
    %18 = arith.mulf %15, %17 : vector<8x512xf32>
    %19 = arith.addf %7, %18 : vector<8x512xf32>
    %c1 = arith.constant 1 : index
    %20 = memref.load %arg2[%c1] : memref<80xf32, #tpu.memory_space<smem>>
    %21 = vector.broadcast %20 : f32 to vector<8x512xf32>
    %22 = arith.mulf %21, %6 : vector<8x512xf32>
    %c1_5 = arith.constant 1 : index
    %23 = memref.load %arg3[%c1_5] : memref<80xf32, #tpu.memory_space<smem>>
    %24 = vector.broadcast %23 : f32 to vector<8x512xf32>
    %25 = arith.addf %22, %24 : vector<8x512xf32>
    %cst_6 = arith.constant 0.000000e+00 : f32
    %26 = vector.broadcast %cst_6 : f32 to vector<8x512xf32>
    %27 = arith.maximumf %25, %26 : vector<8x512xf32>
    %c1_7 = arith.constant 1 : index
    %28 = memref.load %arg4[%c1_7] : memref<80xf32, #tpu.memory_space<smem>>
    %29 = vector.broadcast %28 : f32 to vector<8x512xf32>
    %30 = arith.mulf %27, %29 : vector<8x512xf32>
    %31 = arith.addf %19, %30 : vector<8x512xf32>
    %c2 = arith.constant 2 : index
    %32 = memref.load %arg2[%c2] : memref<80xf32, #tpu.memory_space<smem>>
    %33 = vector.broadcast %32 : f32 to vector<8x512xf32>
    %34 = arith.mulf %33, %6 : vector<8x512xf32>
    %c2_8 = arith.constant 2 : index
    %35 = memref.load %arg3[%c2_8] : memref<80xf32, #tpu.memory_space<smem>>
    %36 = vector.broadcast %35 : f32 to vector<8x512xf32>
    %37 = arith.addf %34, %36 : vector<8x512xf32>
    %cst_9 = arith.constant 0.000000e+00 : f32
    %38 = vector.broadcast %cst_9 : f32 to vector<8x512xf32>
    %39 = arith.maximumf %37, %38 : vector<8x512xf32>
    %c2_10 = arith.constant 2 : index
    %40 = memref.load %arg4[%c2_10] : memref<80xf32, #tpu.memory_space<smem>>
    %41 = vector.broadcast %40 : f32 to vector<8x512xf32>
    %42 = arith.mulf %39, %41 : vector<8x512xf32>
    %43 = arith.addf %31, %42 : vector<8x512xf32>
    %c3 = arith.constant 3 : index
    %44 = memref.load %arg2[%c3] : memref<80xf32, #tpu.memory_space<smem>>
    %45 = vector.broadcast %44 : f32 to vector<8x512xf32>
    %46 = arith.mulf %45, %6 : vector<8x512xf32>
    %c3_11 = arith.constant 3 : index
    %47 = memref.load %arg3[%c3_11] : memref<80xf32, #tpu.memory_space<smem>>
    %48 = vector.broadcast %47 : f32 to vector<8x512xf32>
    %49 = arith.addf %46, %48 : vector<8x512xf32>
    %cst_12 = arith.constant 0.000000e+00 : f32
    %50 = vector.broadcast %cst_12 : f32 to vector<8x512xf32>
    %51 = arith.maximumf %49, %50 : vector<8x512xf32>
    %c3_13 = arith.constant 3 : index
    %52 = memref.load %arg4[%c3_13] : memref<80xf32, #tpu.memory_space<smem>>
    %53 = vector.broadcast %52 : f32 to vector<8x512xf32>
    %54 = arith.mulf %51, %53 : vector<8x512xf32>
    %55 = arith.addf %43, %54 : vector<8x512xf32>
    %c4 = arith.constant 4 : index
    %56 = memref.load %arg2[%c4] : memref<80xf32, #tpu.memory_space<smem>>
    %57 = vector.broadcast %56 : f32 to vector<8x512xf32>
    %58 = arith.mulf %57, %6 : vector<8x512xf32>
    %c4_14 = arith.constant 4 : index
    %59 = memref.load %arg3[%c4_14] : memref<80xf32, #tpu.memory_space<smem>>
    %60 = vector.broadcast %59 : f32 to vector<8x512xf32>
    %61 = arith.addf %58, %60 : vector<8x512xf32>
    %cst_15 = arith.constant 0.000000e+00 : f32
    %62 = vector.broadcast %cst_15 : f32 to vector<8x512xf32>
    %63 = arith.maximumf %61, %62 : vector<8x512xf32>
    %c4_16 = arith.constant 4 : index
    %64 = memref.load %arg4[%c4_16] : memref<80xf32, #tpu.memory_space<smem>>
    %65 = vector.broadcast %64 : f32 to vector<8x512xf32>
    %66 = arith.mulf %63, %65 : vector<8x512xf32>
    %67 = arith.addf %55, %66 : vector<8x512xf32>
    %c5 = arith.constant 5 : index
    %68 = memref.load %arg2[%c5] : memref<80xf32, #tpu.memory_space<smem>>
    %69 = vector.broadcast %68 : f32 to vector<8x512xf32>
    %70 = arith.mulf %69, %6 : vector<8x512xf32>
    %c5_17 = arith.constant 5 : index
    %71 = memref.load %arg3[%c5_17] : memref<80xf32, #tpu.memory_space<smem>>
    %72 = vector.broadcast %71 : f32 to vector<8x512xf32>
    %73 = arith.addf %70, %72 : vector<8x512xf32>
    %cst_18 = arith.constant 0.000000e+00 : f32
    %74 = vector.broadcast %cst_18 : f32 to vector<8x512xf32>
    %75 = arith.maximumf %73, %74 : vector<8x512xf32>
    %c5_19 = arith.constant 5 : index
    %76 = memref.load %arg4[%c5_19] : memref<80xf32, #tpu.memory_space<smem>>
    %77 = vector.broadcast %76 : f32 to vector<8x512xf32>
    %78 = arith.mulf %75, %77 : vector<8x512xf32>
    %79 = arith.addf %67, %78 : vector<8x512xf32>
    %c6 = arith.constant 6 : index
    %80 = memref.load %arg2[%c6] : memref<80xf32, #tpu.memory_space<smem>>
    %81 = vector.broadcast %80 : f32 to vector<8x512xf32>
    %82 = arith.mulf %81, %6 : vector<8x512xf32>
    %c6_20 = arith.constant 6 : index
    %83 = memref.load %arg3[%c6_20] : memref<80xf32, #tpu.memory_space<smem>>
    %84 = vector.broadcast %83 : f32 to vector<8x512xf32>
    %85 = arith.addf %82, %84 : vector<8x512xf32>
    %cst_21 = arith.constant 0.000000e+00 : f32
    %86 = vector.broadcast %cst_21 : f32 to vector<8x512xf32>
    %87 = arith.maximumf %85, %86 : vector<8x512xf32>
    %c6_22 = arith.constant 6 : index
    %88 = memref.load %arg4[%c6_22] : memref<80xf32, #tpu.memory_space<smem>>
    %89 = vector.broadcast %88 : f32 to vector<8x512xf32>
    %90 = arith.mulf %87, %89 : vector<8x512xf32>
    %91 = arith.addf %79, %90 : vector<8x512xf32>
    %c7 = arith.constant 7 : index
    %92 = memref.load %arg2[%c7] : memref<80xf32, #tpu.memory_space<smem>>
    %93 = vector.broadcast %92 : f32 to vector<8x512xf32>
    %94 = arith.mulf %93, %6 : vector<8x512xf32>
    %c7_23 = arith.constant 7 : index
    %95 = memref.load %arg3[%c7_23] : memref<80xf32, #tpu.memory_space<smem>>
    %96 = vector.broadcast %95 : f32 to vector<8x512xf32>
    %97 = arith.addf %94, %96 : vector<8x512xf32>
    %cst_24 = arith.constant 0.000000e+00 : f32
    %98 = vector.broadcast %cst_24 : f32 to vector<8x512xf32>
    %99 = arith.maximumf %97, %98 : vector<8x512xf32>
    %c7_25 = arith.constant 7 : index
    %100 = memref.load %arg4[%c7_25] : memref<80xf32, #tpu.memory_space<smem>>
    %101 = vector.broadcast %100 : f32 to vector<8x512xf32>
    %102 = arith.mulf %99, %101 : vector<8x512xf32>
    %103 = arith.addf %91, %102 : vector<8x512xf32>
    %c8 = arith.constant 8 : index
    %104 = memref.load %arg2[%c8] : memref<80xf32, #tpu.memory_space<smem>>
    %105 = vector.broadcast %104 : f32 to vector<8x512xf32>
    %106 = arith.mulf %105, %6 : vector<8x512xf32>
    %c8_26 = arith.constant 8 : index
    %107 = memref.load %arg3[%c8_26] : memref<80xf32, #tpu.memory_space<smem>>
    %108 = vector.broadcast %107 : f32 to vector<8x512xf32>
    %109 = arith.addf %106, %108 : vector<8x512xf32>
    %cst_27 = arith.constant 0.000000e+00 : f32
    %110 = vector.broadcast %cst_27 : f32 to vector<8x512xf32>
    %111 = arith.maximumf %109, %110 : vector<8x512xf32>
    %c8_28 = arith.constant 8 : index
    %112 = memref.load %arg4[%c8_28] : memref<80xf32, #tpu.memory_space<smem>>
    %113 = vector.broadcast %112 : f32 to vector<8x512xf32>
    %114 = arith.mulf %111, %113 : vector<8x512xf32>
    %115 = arith.addf %103, %114 : vector<8x512xf32>
    %c9 = arith.constant 9 : index
    %116 = memref.load %arg2[%c9] : memref<80xf32, #tpu.memory_space<smem>>
    %117 = vector.broadcast %116 : f32 to vector<8x512xf32>
    %118 = arith.mulf %117, %6 : vector<8x512xf32>
    %c9_29 = arith.constant 9 : index
    %119 = memref.load %arg3[%c9_29] : memref<80xf32, #tpu.memory_space<smem>>
    %120 = vector.broadcast %119 : f32 to vector<8x512xf32>
    %121 = arith.addf %118, %120 : vector<8x512xf32>
    %cst_30 = arith.constant 0.000000e+00 : f32
    %122 = vector.broadcast %cst_30 : f32 to vector<8x512xf32>
    %123 = arith.maximumf %121, %122 : vector<8x512xf32>
    %c9_31 = arith.constant 9 : index
    %124 = memref.load %arg4[%c9_31] : memref<80xf32, #tpu.memory_space<smem>>
    %125 = vector.broadcast %124 : f32 to vector<8x512xf32>
    %126 = arith.mulf %123, %125 : vector<8x512xf32>
    %127 = arith.addf %115, %126 : vector<8x512xf32>
    %c10 = arith.constant 10 : index
    %128 = memref.load %arg2[%c10] : memref<80xf32, #tpu.memory_space<smem>>
    %129 = vector.broadcast %128 : f32 to vector<8x512xf32>
    %130 = arith.mulf %129, %6 : vector<8x512xf32>
    %c10_32 = arith.constant 10 : index
    %131 = memref.load %arg3[%c10_32] : memref<80xf32, #tpu.memory_space<smem>>
    %132 = vector.broadcast %131 : f32 to vector<8x512xf32>
    %133 = arith.addf %130, %132 : vector<8x512xf32>
    %cst_33 = arith.constant 0.000000e+00 : f32
    %134 = vector.broadcast %cst_33 : f32 to vector<8x512xf32>
    %135 = arith.maximumf %133, %134 : vector<8x512xf32>
    %c10_34 = arith.constant 10 : index
    %136 = memref.load %arg4[%c10_34] : memref<80xf32, #tpu.memory_space<smem>>
    %137 = vector.broadcast %136 : f32 to vector<8x512xf32>
    %138 = arith.mulf %135, %137 : vector<8x512xf32>
    %139 = arith.addf %127, %138 : vector<8x512xf32>
    %c11 = arith.constant 11 : index
    %140 = memref.load %arg2[%c11] : memref<80xf32, #tpu.memory_space<smem>>
    %141 = vector.broadcast %140 : f32 to vector<8x512xf32>
    %142 = arith.mulf %141, %6 : vector<8x512xf32>
    %c11_35 = arith.constant 11 : index
    %143 = memref.load %arg3[%c11_35] : memref<80xf32, #tpu.memory_space<smem>>
    %144 = vector.broadcast %143 : f32 to vector<8x512xf32>
    %145 = arith.addf %142, %144 : vector<8x512xf32>
    %cst_36 = arith.constant 0.000000e+00 : f32
    %146 = vector.broadcast %cst_36 : f32 to vector<8x512xf32>
    %147 = arith.maximumf %145, %146 : vector<8x512xf32>
    %c11_37 = arith.constant 11 : index
    %148 = memref.load %arg4[%c11_37] : memref<80xf32, #tpu.memory_space<smem>>
    %149 = vector.broadcast %148 : f32 to vector<8x512xf32>
    %150 = arith.mulf %147, %149 : vector<8x512xf32>
    %151 = arith.addf %139, %150 : vector<8x512xf32>
    %c12 = arith.constant 12 : index
    %152 = memref.load %arg2[%c12] : memref<80xf32, #tpu.memory_space<smem>>
    %153 = vector.broadcast %152 : f32 to vector<8x512xf32>
    %154 = arith.mulf %153, %6 : vector<8x512xf32>
    %c12_38 = arith.constant 12 : index
    %155 = memref.load %arg3[%c12_38] : memref<80xf32, #tpu.memory_space<smem>>
    %156 = vector.broadcast %155 : f32 to vector<8x512xf32>
    %157 = arith.addf %154, %156 : vector<8x512xf32>
    %cst_39 = arith.constant 0.000000e+00 : f32
    %158 = vector.broadcast %cst_39 : f32 to vector<8x512xf32>
    %159 = arith.maximumf %157, %158 : vector<8x512xf32>
    %c12_40 = arith.constant 12 : index
    %160 = memref.load %arg4[%c12_40] : memref<80xf32, #tpu.memory_space<smem>>
    %161 = vector.broadcast %160 : f32 to vector<8x512xf32>
    %162 = arith.mulf %159, %161 : vector<8x512xf32>
    %163 = arith.addf %151, %162 : vector<8x512xf32>
    %c13 = arith.constant 13 : index
    %164 = memref.load %arg2[%c13] : memref<80xf32, #tpu.memory_space<smem>>
    %165 = vector.broadcast %164 : f32 to vector<8x512xf32>
    %166 = arith.mulf %165, %6 : vector<8x512xf32>
    %c13_41 = arith.constant 13 : index
    %167 = memref.load %arg3[%c13_41] : memref<80xf32, #tpu.memory_space<smem>>
    %168 = vector.broadcast %167 : f32 to vector<8x512xf32>
    %169 = arith.addf %166, %168 : vector<8x512xf32>
    %cst_42 = arith.constant 0.000000e+00 : f32
    %170 = vector.broadcast %cst_42 : f32 to vector<8x512xf32>
    %171 = arith.maximumf %169, %170 : vector<8x512xf32>
    %c13_43 = arith.constant 13 : index
    %172 = memref.load %arg4[%c13_43] : memref<80xf32, #tpu.memory_space<smem>>
    %173 = vector.broadcast %172 : f32 to vector<8x512xf32>
    %174 = arith.mulf %171, %173 : vector<8x512xf32>
    %175 = arith.addf %163, %174 : vector<8x512xf32>
    %c14 = arith.constant 14 : index
    %176 = memref.load %arg2[%c14] : memref<80xf32, #tpu.memory_space<smem>>
    %177 = vector.broadcast %176 : f32 to vector<8x512xf32>
    %178 = arith.mulf %177, %6 : vector<8x512xf32>
    %c14_44 = arith.constant 14 : index
    %179 = memref.load %arg3[%c14_44] : memref<80xf32, #tpu.memory_space<smem>>
    %180 = vector.broadcast %179 : f32 to vector<8x512xf32>
    %181 = arith.addf %178, %180 : vector<8x512xf32>
    %cst_45 = arith.constant 0.000000e+00 : f32
    %182 = vector.broadcast %cst_45 : f32 to vector<8x512xf32>
    %183 = arith.maximumf %181, %182 : vector<8x512xf32>
    %c14_46 = arith.constant 14 : index
    %184 = memref.load %arg4[%c14_46] : memref<80xf32, #tpu.memory_space<smem>>
    %185 = vector.broadcast %184 : f32 to vector<8x512xf32>
    %186 = arith.mulf %183, %185 : vector<8x512xf32>
    %187 = arith.addf %175, %186 : vector<8x512xf32>
    %c15 = arith.constant 15 : index
    %188 = memref.load %arg2[%c15] : memref<80xf32, #tpu.memory_space<smem>>
    %189 = vector.broadcast %188 : f32 to vector<8x512xf32>
    %190 = arith.mulf %189, %6 : vector<8x512xf32>
    %c15_47 = arith.constant 15 : index
    %191 = memref.load %arg3[%c15_47] : memref<80xf32, #tpu.memory_space<smem>>
    %192 = vector.broadcast %191 : f32 to vector<8x512xf32>
    %193 = arith.addf %190, %192 : vector<8x512xf32>
    %cst_48 = arith.constant 0.000000e+00 : f32
    %194 = vector.broadcast %cst_48 : f32 to vector<8x512xf32>
    %195 = arith.maximumf %193, %194 : vector<8x512xf32>
    %c15_49 = arith.constant 15 : index
    %196 = memref.load %arg4[%c15_49] : memref<80xf32, #tpu.memory_space<smem>>
    %197 = vector.broadcast %196 : f32 to vector<8x512xf32>
    %198 = arith.mulf %195, %197 : vector<8x512xf32>
    %199 = arith.addf %187, %198 : vector<8x512xf32>
    %c16 = arith.constant 16 : index
    %200 = memref.load %arg2[%c16] : memref<80xf32, #tpu.memory_space<smem>>
    %201 = vector.broadcast %200 : f32 to vector<8x512xf32>
    %202 = arith.mulf %201, %6 : vector<8x512xf32>
    %c16_50 = arith.constant 16 : index
    %203 = memref.load %arg3[%c16_50] : memref<80xf32, #tpu.memory_space<smem>>
    %204 = vector.broadcast %203 : f32 to vector<8x512xf32>
    %205 = arith.addf %202, %204 : vector<8x512xf32>
    %cst_51 = arith.constant 0.000000e+00 : f32
    %206 = vector.broadcast %cst_51 : f32 to vector<8x512xf32>
    %207 = arith.maximumf %205, %206 : vector<8x512xf32>
    %c16_52 = arith.constant 16 : index
    %208 = memref.load %arg4[%c16_52] : memref<80xf32, #tpu.memory_space<smem>>
    %209 = vector.broadcast %208 : f32 to vector<8x512xf32>
    %210 = arith.mulf %207, %209 : vector<8x512xf32>
    %211 = arith.addf %199, %210 : vector<8x512xf32>
    %c17 = arith.constant 17 : index
    %212 = memref.load %arg2[%c17] : memref<80xf32, #tpu.memory_space<smem>>
    %213 = vector.broadcast %212 : f32 to vector<8x512xf32>
    %214 = arith.mulf %213, %6 : vector<8x512xf32>
    %c17_53 = arith.constant 17 : index
    %215 = memref.load %arg3[%c17_53] : memref<80xf32, #tpu.memory_space<smem>>
    %216 = vector.broadcast %215 : f32 to vector<8x512xf32>
    %217 = arith.addf %214, %216 : vector<8x512xf32>
    %cst_54 = arith.constant 0.000000e+00 : f32
    %218 = vector.broadcast %cst_54 : f32 to vector<8x512xf32>
    %219 = arith.maximumf %217, %218 : vector<8x512xf32>
    %c17_55 = arith.constant 17 : index
    %220 = memref.load %arg4[%c17_55] : memref<80xf32, #tpu.memory_space<smem>>
    %221 = vector.broadcast %220 : f32 to vector<8x512xf32>
    %222 = arith.mulf %219, %221 : vector<8x512xf32>
    %223 = arith.addf %211, %222 : vector<8x512xf32>
    %c18 = arith.constant 18 : index
    %224 = memref.load %arg2[%c18] : memref<80xf32, #tpu.memory_space<smem>>
    %225 = vector.broadcast %224 : f32 to vector<8x512xf32>
    %226 = arith.mulf %225, %6 : vector<8x512xf32>
    %c18_56 = arith.constant 18 : index
    %227 = memref.load %arg3[%c18_56] : memref<80xf32, #tpu.memory_space<smem>>
    %228 = vector.broadcast %227 : f32 to vector<8x512xf32>
    %229 = arith.addf %226, %228 : vector<8x512xf32>
    %cst_57 = arith.constant 0.000000e+00 : f32
    %230 = vector.broadcast %cst_57 : f32 to vector<8x512xf32>
    %231 = arith.maximumf %229, %230 : vector<8x512xf32>
    %c18_58 = arith.constant 18 : index
    %232 = memref.load %arg4[%c18_58] : memref<80xf32, #tpu.memory_space<smem>>
    %233 = vector.broadcast %232 : f32 to vector<8x512xf32>
    %234 = arith.mulf %231, %233 : vector<8x512xf32>
    %235 = arith.addf %223, %234 : vector<8x512xf32>
    %c19 = arith.constant 19 : index
    %236 = memref.load %arg2[%c19] : memref<80xf32, #tpu.memory_space<smem>>
    %237 = vector.broadcast %236 : f32 to vector<8x512xf32>
    %238 = arith.mulf %237, %6 : vector<8x512xf32>
    %c19_59 = arith.constant 19 : index
    %239 = memref.load %arg3[%c19_59] : memref<80xf32, #tpu.memory_space<smem>>
    %240 = vector.broadcast %239 : f32 to vector<8x512xf32>
    %241 = arith.addf %238, %240 : vector<8x512xf32>
    %cst_60 = arith.constant 0.000000e+00 : f32
    %242 = vector.broadcast %cst_60 : f32 to vector<8x512xf32>
    %243 = arith.maximumf %241, %242 : vector<8x512xf32>
    %c19_61 = arith.constant 19 : index
    %244 = memref.load %arg4[%c19_61] : memref<80xf32, #tpu.memory_space<smem>>
    %245 = vector.broadcast %244 : f32 to vector<8x512xf32>
    %246 = arith.mulf %243, %245 : vector<8x512xf32>
    %247 = arith.addf %235, %246 : vector<8x512xf32>
    %c20 = arith.constant 20 : index
    %248 = memref.load %arg2[%c20] : memref<80xf32, #tpu.memory_space<smem>>
    %249 = vector.broadcast %248 : f32 to vector<8x512xf32>
    %250 = arith.mulf %249, %6 : vector<8x512xf32>
    %c20_62 = arith.constant 20 : index
    %251 = memref.load %arg3[%c20_62] : memref<80xf32, #tpu.memory_space<smem>>
    %252 = vector.broadcast %251 : f32 to vector<8x512xf32>
    %253 = arith.addf %250, %252 : vector<8x512xf32>
    %cst_63 = arith.constant 0.000000e+00 : f32
    %254 = vector.broadcast %cst_63 : f32 to vector<8x512xf32>
    %255 = arith.maximumf %253, %254 : vector<8x512xf32>
    %c20_64 = arith.constant 20 : index
    %256 = memref.load %arg4[%c20_64] : memref<80xf32, #tpu.memory_space<smem>>
    %257 = vector.broadcast %256 : f32 to vector<8x512xf32>
    %258 = arith.mulf %255, %257 : vector<8x512xf32>
    %259 = arith.addf %247, %258 : vector<8x512xf32>
    %c21 = arith.constant 21 : index
    %260 = memref.load %arg2[%c21] : memref<80xf32, #tpu.memory_space<smem>>
    %261 = vector.broadcast %260 : f32 to vector<8x512xf32>
    %262 = arith.mulf %261, %6 : vector<8x512xf32>
    %c21_65 = arith.constant 21 : index
    %263 = memref.load %arg3[%c21_65] : memref<80xf32, #tpu.memory_space<smem>>
    %264 = vector.broadcast %263 : f32 to vector<8x512xf32>
    %265 = arith.addf %262, %264 : vector<8x512xf32>
    %cst_66 = arith.constant 0.000000e+00 : f32
    %266 = vector.broadcast %cst_66 : f32 to vector<8x512xf32>
    %267 = arith.maximumf %265, %266 : vector<8x512xf32>
    %c21_67 = arith.constant 21 : index
    %268 = memref.load %arg4[%c21_67] : memref<80xf32, #tpu.memory_space<smem>>
    %269 = vector.broadcast %268 : f32 to vector<8x512xf32>
    %270 = arith.mulf %267, %269 : vector<8x512xf32>
    %271 = arith.addf %259, %270 : vector<8x512xf32>
    %c22 = arith.constant 22 : index
    %272 = memref.load %arg2[%c22] : memref<80xf32, #tpu.memory_space<smem>>
    %273 = vector.broadcast %272 : f32 to vector<8x512xf32>
    %274 = arith.mulf %273, %6 : vector<8x512xf32>
    %c22_68 = arith.constant 22 : index
    %275 = memref.load %arg3[%c22_68] : memref<80xf32, #tpu.memory_space<smem>>
    %276 = vector.broadcast %275 : f32 to vector<8x512xf32>
    %277 = arith.addf %274, %276 : vector<8x512xf32>
    %cst_69 = arith.constant 0.000000e+00 : f32
    %278 = vector.broadcast %cst_69 : f32 to vector<8x512xf32>
    %279 = arith.maximumf %277, %278 : vector<8x512xf32>
    %c22_70 = arith.constant 22 : index
    %280 = memref.load %arg4[%c22_70] : memref<80xf32, #tpu.memory_space<smem>>
    %281 = vector.broadcast %280 : f32 to vector<8x512xf32>
    %282 = arith.mulf %279, %281 : vector<8x512xf32>
    %283 = arith.addf %271, %282 : vector<8x512xf32>
    %c23 = arith.constant 23 : index
    %284 = memref.load %arg2[%c23] : memref<80xf32, #tpu.memory_space<smem>>
    %285 = vector.broadcast %284 : f32 to vector<8x512xf32>
    %286 = arith.mulf %285, %6 : vector<8x512xf32>
    %c23_71 = arith.constant 23 : index
    %287 = memref.load %arg3[%c23_71] : memref<80xf32, #tpu.memory_space<smem>>
    %288 = vector.broadcast %287 : f32 to vector<8x512xf32>
    %289 = arith.addf %286, %288 : vector<8x512xf32>
    %cst_72 = arith.constant 0.000000e+00 : f32
    %290 = vector.broadcast %cst_72 : f32 to vector<8x512xf32>
    %291 = arith.maximumf %289, %290 : vector<8x512xf32>
    %c23_73 = arith.constant 23 : index
    %292 = memref.load %arg4[%c23_73] : memref<80xf32, #tpu.memory_space<smem>>
    %293 = vector.broadcast %292 : f32 to vector<8x512xf32>
    %294 = arith.mulf %291, %293 : vector<8x512xf32>
    %295 = arith.addf %283, %294 : vector<8x512xf32>
    %c24 = arith.constant 24 : index
    %296 = memref.load %arg2[%c24] : memref<80xf32, #tpu.memory_space<smem>>
    %297 = vector.broadcast %296 : f32 to vector<8x512xf32>
    %298 = arith.mulf %297, %6 : vector<8x512xf32>
    %c24_74 = arith.constant 24 : index
    %299 = memref.load %arg3[%c24_74] : memref<80xf32, #tpu.memory_space<smem>>
    %300 = vector.broadcast %299 : f32 to vector<8x512xf32>
    %301 = arith.addf %298, %300 : vector<8x512xf32>
    %cst_75 = arith.constant 0.000000e+00 : f32
    %302 = vector.broadcast %cst_75 : f32 to vector<8x512xf32>
    %303 = arith.maximumf %301, %302 : vector<8x512xf32>
    %c24_76 = arith.constant 24 : index
    %304 = memref.load %arg4[%c24_76] : memref<80xf32, #tpu.memory_space<smem>>
    %305 = vector.broadcast %304 : f32 to vector<8x512xf32>
    %306 = arith.mulf %303, %305 : vector<8x512xf32>
    %307 = arith.addf %295, %306 : vector<8x512xf32>
    %c25 = arith.constant 25 : index
    %308 = memref.load %arg2[%c25] : memref<80xf32, #tpu.memory_space<smem>>
    %309 = vector.broadcast %308 : f32 to vector<8x512xf32>
    %310 = arith.mulf %309, %6 : vector<8x512xf32>
    %c25_77 = arith.constant 25 : index
    %311 = memref.load %arg3[%c25_77] : memref<80xf32, #tpu.memory_space<smem>>
    %312 = vector.broadcast %311 : f32 to vector<8x512xf32>
    %313 = arith.addf %310, %312 : vector<8x512xf32>
    %cst_78 = arith.constant 0.000000e+00 : f32
    %314 = vector.broadcast %cst_78 : f32 to vector<8x512xf32>
    %315 = arith.maximumf %313, %314 : vector<8x512xf32>
    %c25_79 = arith.constant 25 : index
    %316 = memref.load %arg4[%c25_79] : memref<80xf32, #tpu.memory_space<smem>>
    %317 = vector.broadcast %316 : f32 to vector<8x512xf32>
    %318 = arith.mulf %315, %317 : vector<8x512xf32>
    %319 = arith.addf %307, %318 : vector<8x512xf32>
    %c26 = arith.constant 26 : index
    %320 = memref.load %arg2[%c26] : memref<80xf32, #tpu.memory_space<smem>>
    %321 = vector.broadcast %320 : f32 to vector<8x512xf32>
    %322 = arith.mulf %321, %6 : vector<8x512xf32>
    %c26_80 = arith.constant 26 : index
    %323 = memref.load %arg3[%c26_80] : memref<80xf32, #tpu.memory_space<smem>>
    %324 = vector.broadcast %323 : f32 to vector<8x512xf32>
    %325 = arith.addf %322, %324 : vector<8x512xf32>
    %cst_81 = arith.constant 0.000000e+00 : f32
    %326 = vector.broadcast %cst_81 : f32 to vector<8x512xf32>
    %327 = arith.maximumf %325, %326 : vector<8x512xf32>
    %c26_82 = arith.constant 26 : index
    %328 = memref.load %arg4[%c26_82] : memref<80xf32, #tpu.memory_space<smem>>
    %329 = vector.broadcast %328 : f32 to vector<8x512xf32>
    %330 = arith.mulf %327, %329 : vector<8x512xf32>
    %331 = arith.addf %319, %330 : vector<8x512xf32>
    %c27 = arith.constant 27 : index
    %332 = memref.load %arg2[%c27] : memref<80xf32, #tpu.memory_space<smem>>
    %333 = vector.broadcast %332 : f32 to vector<8x512xf32>
    %334 = arith.mulf %333, %6 : vector<8x512xf32>
    %c27_83 = arith.constant 27 : index
    %335 = memref.load %arg3[%c27_83] : memref<80xf32, #tpu.memory_space<smem>>
    %336 = vector.broadcast %335 : f32 to vector<8x512xf32>
    %337 = arith.addf %334, %336 : vector<8x512xf32>
    %cst_84 = arith.constant 0.000000e+00 : f32
    %338 = vector.broadcast %cst_84 : f32 to vector<8x512xf32>
    %339 = arith.maximumf %337, %338 : vector<8x512xf32>
    %c27_85 = arith.constant 27 : index
    %340 = memref.load %arg4[%c27_85] : memref<80xf32, #tpu.memory_space<smem>>
    %341 = vector.broadcast %340 : f32 to vector<8x512xf32>
    %342 = arith.mulf %339, %341 : vector<8x512xf32>
    %343 = arith.addf %331, %342 : vector<8x512xf32>
    %c28 = arith.constant 28 : index
    %344 = memref.load %arg2[%c28] : memref<80xf32, #tpu.memory_space<smem>>
    %345 = vector.broadcast %344 : f32 to vector<8x512xf32>
    %346 = arith.mulf %345, %6 : vector<8x512xf32>
    %c28_86 = arith.constant 28 : index
    %347 = memref.load %arg3[%c28_86] : memref<80xf32, #tpu.memory_space<smem>>
    %348 = vector.broadcast %347 : f32 to vector<8x512xf32>
    %349 = arith.addf %346, %348 : vector<8x512xf32>
    %cst_87 = arith.constant 0.000000e+00 : f32
    %350 = vector.broadcast %cst_87 : f32 to vector<8x512xf32>
    %351 = arith.maximumf %349, %350 : vector<8x512xf32>
    %c28_88 = arith.constant 28 : index
    %352 = memref.load %arg4[%c28_88] : memref<80xf32, #tpu.memory_space<smem>>
    %353 = vector.broadcast %352 : f32 to vector<8x512xf32>
    %354 = arith.mulf %351, %353 : vector<8x512xf32>
    %355 = arith.addf %343, %354 : vector<8x512xf32>
    %c29 = arith.constant 29 : index
    %356 = memref.load %arg2[%c29] : memref<80xf32, #tpu.memory_space<smem>>
    %357 = vector.broadcast %356 : f32 to vector<8x512xf32>
    %358 = arith.mulf %357, %6 : vector<8x512xf32>
    %c29_89 = arith.constant 29 : index
    %359 = memref.load %arg3[%c29_89] : memref<80xf32, #tpu.memory_space<smem>>
    %360 = vector.broadcast %359 : f32 to vector<8x512xf32>
    %361 = arith.addf %358, %360 : vector<8x512xf32>
    %cst_90 = arith.constant 0.000000e+00 : f32
    %362 = vector.broadcast %cst_90 : f32 to vector<8x512xf32>
    %363 = arith.maximumf %361, %362 : vector<8x512xf32>
    %c29_91 = arith.constant 29 : index
    %364 = memref.load %arg4[%c29_91] : memref<80xf32, #tpu.memory_space<smem>>
    %365 = vector.broadcast %364 : f32 to vector<8x512xf32>
    %366 = arith.mulf %363, %365 : vector<8x512xf32>
    %367 = arith.addf %355, %366 : vector<8x512xf32>
    %c30 = arith.constant 30 : index
    %368 = memref.load %arg2[%c30] : memref<80xf32, #tpu.memory_space<smem>>
    %369 = vector.broadcast %368 : f32 to vector<8x512xf32>
    %370 = arith.mulf %369, %6 : vector<8x512xf32>
    %c30_92 = arith.constant 30 : index
    %371 = memref.load %arg3[%c30_92] : memref<80xf32, #tpu.memory_space<smem>>
    %372 = vector.broadcast %371 : f32 to vector<8x512xf32>
    %373 = arith.addf %370, %372 : vector<8x512xf32>
    %cst_93 = arith.constant 0.000000e+00 : f32
    %374 = vector.broadcast %cst_93 : f32 to vector<8x512xf32>
    %375 = arith.maximumf %373, %374 : vector<8x512xf32>
    %c30_94 = arith.constant 30 : index
    %376 = memref.load %arg4[%c30_94] : memref<80xf32, #tpu.memory_space<smem>>
    %377 = vector.broadcast %376 : f32 to vector<8x512xf32>
    %378 = arith.mulf %375, %377 : vector<8x512xf32>
    %379 = arith.addf %367, %378 : vector<8x512xf32>
    %c31 = arith.constant 31 : index
    %380 = memref.load %arg2[%c31] : memref<80xf32, #tpu.memory_space<smem>>
    %381 = vector.broadcast %380 : f32 to vector<8x512xf32>
    %382 = arith.mulf %381, %6 : vector<8x512xf32>
    %c31_95 = arith.constant 31 : index
    %383 = memref.load %arg3[%c31_95] : memref<80xf32, #tpu.memory_space<smem>>
    %384 = vector.broadcast %383 : f32 to vector<8x512xf32>
    %385 = arith.addf %382, %384 : vector<8x512xf32>
    %cst_96 = arith.constant 0.000000e+00 : f32
    %386 = vector.broadcast %cst_96 : f32 to vector<8x512xf32>
    %387 = arith.maximumf %385, %386 : vector<8x512xf32>
    %c31_97 = arith.constant 31 : index
    %388 = memref.load %arg4[%c31_97] : memref<80xf32, #tpu.memory_space<smem>>
    %389 = vector.broadcast %388 : f32 to vector<8x512xf32>
    %390 = arith.mulf %387, %389 : vector<8x512xf32>
    %391 = arith.addf %379, %390 : vector<8x512xf32>
    %c32 = arith.constant 32 : index
    %392 = memref.load %arg2[%c32] : memref<80xf32, #tpu.memory_space<smem>>
    %393 = vector.broadcast %392 : f32 to vector<8x512xf32>
    %394 = arith.mulf %393, %6 : vector<8x512xf32>
    %c32_98 = arith.constant 32 : index
    %395 = memref.load %arg3[%c32_98] : memref<80xf32, #tpu.memory_space<smem>>
    %396 = vector.broadcast %395 : f32 to vector<8x512xf32>
    %397 = arith.addf %394, %396 : vector<8x512xf32>
    %cst_99 = arith.constant 0.000000e+00 : f32
    %398 = vector.broadcast %cst_99 : f32 to vector<8x512xf32>
    %399 = arith.maximumf %397, %398 : vector<8x512xf32>
    %c32_100 = arith.constant 32 : index
    %400 = memref.load %arg4[%c32_100] : memref<80xf32, #tpu.memory_space<smem>>
    %401 = vector.broadcast %400 : f32 to vector<8x512xf32>
    %402 = arith.mulf %399, %401 : vector<8x512xf32>
    %403 = arith.addf %391, %402 : vector<8x512xf32>
    %c33 = arith.constant 33 : index
    %404 = memref.load %arg2[%c33] : memref<80xf32, #tpu.memory_space<smem>>
    %405 = vector.broadcast %404 : f32 to vector<8x512xf32>
    %406 = arith.mulf %405, %6 : vector<8x512xf32>
    %c33_101 = arith.constant 33 : index
    %407 = memref.load %arg3[%c33_101] : memref<80xf32, #tpu.memory_space<smem>>
    %408 = vector.broadcast %407 : f32 to vector<8x512xf32>
    %409 = arith.addf %406, %408 : vector<8x512xf32>
    %cst_102 = arith.constant 0.000000e+00 : f32
    %410 = vector.broadcast %cst_102 : f32 to vector<8x512xf32>
    %411 = arith.maximumf %409, %410 : vector<8x512xf32>
    %c33_103 = arith.constant 33 : index
    %412 = memref.load %arg4[%c33_103] : memref<80xf32, #tpu.memory_space<smem>>
    %413 = vector.broadcast %412 : f32 to vector<8x512xf32>
    %414 = arith.mulf %411, %413 : vector<8x512xf32>
    %415 = arith.addf %403, %414 : vector<8x512xf32>
    %c34 = arith.constant 34 : index
    %416 = memref.load %arg2[%c34] : memref<80xf32, #tpu.memory_space<smem>>
    %417 = vector.broadcast %416 : f32 to vector<8x512xf32>
    %418 = arith.mulf %417, %6 : vector<8x512xf32>
    %c34_104 = arith.constant 34 : index
    %419 = memref.load %arg3[%c34_104] : memref<80xf32, #tpu.memory_space<smem>>
    %420 = vector.broadcast %419 : f32 to vector<8x512xf32>
    %421 = arith.addf %418, %420 : vector<8x512xf32>
    %cst_105 = arith.constant 0.000000e+00 : f32
    %422 = vector.broadcast %cst_105 : f32 to vector<8x512xf32>
    %423 = arith.maximumf %421, %422 : vector<8x512xf32>
    %c34_106 = arith.constant 34 : index
    %424 = memref.load %arg4[%c34_106] : memref<80xf32, #tpu.memory_space<smem>>
    %425 = vector.broadcast %424 : f32 to vector<8x512xf32>
    %426 = arith.mulf %423, %425 : vector<8x512xf32>
    %427 = arith.addf %415, %426 : vector<8x512xf32>
    %c35 = arith.constant 35 : index
    %428 = memref.load %arg2[%c35] : memref<80xf32, #tpu.memory_space<smem>>
    %429 = vector.broadcast %428 : f32 to vector<8x512xf32>
    %430 = arith.mulf %429, %6 : vector<8x512xf32>
    %c35_107 = arith.constant 35 : index
    %431 = memref.load %arg3[%c35_107] : memref<80xf32, #tpu.memory_space<smem>>
    %432 = vector.broadcast %431 : f32 to vector<8x512xf32>
    %433 = arith.addf %430, %432 : vector<8x512xf32>
    %cst_108 = arith.constant 0.000000e+00 : f32
    %434 = vector.broadcast %cst_108 : f32 to vector<8x512xf32>
    %435 = arith.maximumf %433, %434 : vector<8x512xf32>
    %c35_109 = arith.constant 35 : index
    %436 = memref.load %arg4[%c35_109] : memref<80xf32, #tpu.memory_space<smem>>
    %437 = vector.broadcast %436 : f32 to vector<8x512xf32>
    %438 = arith.mulf %435, %437 : vector<8x512xf32>
    %439 = arith.addf %427, %438 : vector<8x512xf32>
    %c36 = arith.constant 36 : index
    %440 = memref.load %arg2[%c36] : memref<80xf32, #tpu.memory_space<smem>>
    %441 = vector.broadcast %440 : f32 to vector<8x512xf32>
    %442 = arith.mulf %441, %6 : vector<8x512xf32>
    %c36_110 = arith.constant 36 : index
    %443 = memref.load %arg3[%c36_110] : memref<80xf32, #tpu.memory_space<smem>>
    %444 = vector.broadcast %443 : f32 to vector<8x512xf32>
    %445 = arith.addf %442, %444 : vector<8x512xf32>
    %cst_111 = arith.constant 0.000000e+00 : f32
    %446 = vector.broadcast %cst_111 : f32 to vector<8x512xf32>
    %447 = arith.maximumf %445, %446 : vector<8x512xf32>
    %c36_112 = arith.constant 36 : index
    %448 = memref.load %arg4[%c36_112] : memref<80xf32, #tpu.memory_space<smem>>
    %449 = vector.broadcast %448 : f32 to vector<8x512xf32>
    %450 = arith.mulf %447, %449 : vector<8x512xf32>
    %451 = arith.addf %439, %450 : vector<8x512xf32>
    %c37 = arith.constant 37 : index
    %452 = memref.load %arg2[%c37] : memref<80xf32, #tpu.memory_space<smem>>
    %453 = vector.broadcast %452 : f32 to vector<8x512xf32>
    %454 = arith.mulf %453, %6 : vector<8x512xf32>
    %c37_113 = arith.constant 37 : index
    %455 = memref.load %arg3[%c37_113] : memref<80xf32, #tpu.memory_space<smem>>
    %456 = vector.broadcast %455 : f32 to vector<8x512xf32>
    %457 = arith.addf %454, %456 : vector<8x512xf32>
    %cst_114 = arith.constant 0.000000e+00 : f32
    %458 = vector.broadcast %cst_114 : f32 to vector<8x512xf32>
    %459 = arith.maximumf %457, %458 : vector<8x512xf32>
    %c37_115 = arith.constant 37 : index
    %460 = memref.load %arg4[%c37_115] : memref<80xf32, #tpu.memory_space<smem>>
    %461 = vector.broadcast %460 : f32 to vector<8x512xf32>
    %462 = arith.mulf %459, %461 : vector<8x512xf32>
    %463 = arith.addf %451, %462 : vector<8x512xf32>
    %c38 = arith.constant 38 : index
    %464 = memref.load %arg2[%c38] : memref<80xf32, #tpu.memory_space<smem>>
    %465 = vector.broadcast %464 : f32 to vector<8x512xf32>
    %466 = arith.mulf %465, %6 : vector<8x512xf32>
    %c38_116 = arith.constant 38 : index
    %467 = memref.load %arg3[%c38_116] : memref<80xf32, #tpu.memory_space<smem>>
    %468 = vector.broadcast %467 : f32 to vector<8x512xf32>
    %469 = arith.addf %466, %468 : vector<8x512xf32>
    %cst_117 = arith.constant 0.000000e+00 : f32
    %470 = vector.broadcast %cst_117 : f32 to vector<8x512xf32>
    %471 = arith.maximumf %469, %470 : vector<8x512xf32>
    %c38_118 = arith.constant 38 : index
    %472 = memref.load %arg4[%c38_118] : memref<80xf32, #tpu.memory_space<smem>>
    %473 = vector.broadcast %472 : f32 to vector<8x512xf32>
    %474 = arith.mulf %471, %473 : vector<8x512xf32>
    %475 = arith.addf %463, %474 : vector<8x512xf32>
    %c39 = arith.constant 39 : index
    %476 = memref.load %arg2[%c39] : memref<80xf32, #tpu.memory_space<smem>>
    %477 = vector.broadcast %476 : f32 to vector<8x512xf32>
    %478 = arith.mulf %477, %6 : vector<8x512xf32>
    %c39_119 = arith.constant 39 : index
    %479 = memref.load %arg3[%c39_119] : memref<80xf32, #tpu.memory_space<smem>>
    %480 = vector.broadcast %479 : f32 to vector<8x512xf32>
    %481 = arith.addf %478, %480 : vector<8x512xf32>
    %cst_120 = arith.constant 0.000000e+00 : f32
    %482 = vector.broadcast %cst_120 : f32 to vector<8x512xf32>
    %483 = arith.maximumf %481, %482 : vector<8x512xf32>
    %c39_121 = arith.constant 39 : index
    %484 = memref.load %arg4[%c39_121] : memref<80xf32, #tpu.memory_space<smem>>
    %485 = vector.broadcast %484 : f32 to vector<8x512xf32>
    %486 = arith.mulf %483, %485 : vector<8x512xf32>
    %487 = arith.addf %475, %486 : vector<8x512xf32>
    %c40 = arith.constant 40 : index
    %488 = memref.load %arg2[%c40] : memref<80xf32, #tpu.memory_space<smem>>
    %489 = vector.broadcast %488 : f32 to vector<8x512xf32>
    %490 = arith.mulf %489, %6 : vector<8x512xf32>
    %c40_122 = arith.constant 40 : index
    %491 = memref.load %arg3[%c40_122] : memref<80xf32, #tpu.memory_space<smem>>
    %492 = vector.broadcast %491 : f32 to vector<8x512xf32>
    %493 = arith.addf %490, %492 : vector<8x512xf32>
    %cst_123 = arith.constant 0.000000e+00 : f32
    %494 = vector.broadcast %cst_123 : f32 to vector<8x512xf32>
    %495 = arith.maximumf %493, %494 : vector<8x512xf32>
    %c40_124 = arith.constant 40 : index
    %496 = memref.load %arg4[%c40_124] : memref<80xf32, #tpu.memory_space<smem>>
    %497 = vector.broadcast %496 : f32 to vector<8x512xf32>
    %498 = arith.mulf %495, %497 : vector<8x512xf32>
    %499 = arith.addf %487, %498 : vector<8x512xf32>
    %c41 = arith.constant 41 : index
    %500 = memref.load %arg2[%c41] : memref<80xf32, #tpu.memory_space<smem>>
    %501 = vector.broadcast %500 : f32 to vector<8x512xf32>
    %502 = arith.mulf %501, %6 : vector<8x512xf32>
    %c41_125 = arith.constant 41 : index
    %503 = memref.load %arg3[%c41_125] : memref<80xf32, #tpu.memory_space<smem>>
    %504 = vector.broadcast %503 : f32 to vector<8x512xf32>
    %505 = arith.addf %502, %504 : vector<8x512xf32>
    %cst_126 = arith.constant 0.000000e+00 : f32
    %506 = vector.broadcast %cst_126 : f32 to vector<8x512xf32>
    %507 = arith.maximumf %505, %506 : vector<8x512xf32>
    %c41_127 = arith.constant 41 : index
    %508 = memref.load %arg4[%c41_127] : memref<80xf32, #tpu.memory_space<smem>>
    %509 = vector.broadcast %508 : f32 to vector<8x512xf32>
    %510 = arith.mulf %507, %509 : vector<8x512xf32>
    %511 = arith.addf %499, %510 : vector<8x512xf32>
    %c42 = arith.constant 42 : index
    %512 = memref.load %arg2[%c42] : memref<80xf32, #tpu.memory_space<smem>>
    %513 = vector.broadcast %512 : f32 to vector<8x512xf32>
    %514 = arith.mulf %513, %6 : vector<8x512xf32>
    %c42_128 = arith.constant 42 : index
    %515 = memref.load %arg3[%c42_128] : memref<80xf32, #tpu.memory_space<smem>>
    %516 = vector.broadcast %515 : f32 to vector<8x512xf32>
    %517 = arith.addf %514, %516 : vector<8x512xf32>
    %cst_129 = arith.constant 0.000000e+00 : f32
    %518 = vector.broadcast %cst_129 : f32 to vector<8x512xf32>
    %519 = arith.maximumf %517, %518 : vector<8x512xf32>
    %c42_130 = arith.constant 42 : index
    %520 = memref.load %arg4[%c42_130] : memref<80xf32, #tpu.memory_space<smem>>
    %521 = vector.broadcast %520 : f32 to vector<8x512xf32>
    %522 = arith.mulf %519, %521 : vector<8x512xf32>
    %523 = arith.addf %511, %522 : vector<8x512xf32>
    %c43 = arith.constant 43 : index
    %524 = memref.load %arg2[%c43] : memref<80xf32, #tpu.memory_space<smem>>
    %525 = vector.broadcast %524 : f32 to vector<8x512xf32>
    %526 = arith.mulf %525, %6 : vector<8x512xf32>
    %c43_131 = arith.constant 43 : index
    %527 = memref.load %arg3[%c43_131] : memref<80xf32, #tpu.memory_space<smem>>
    %528 = vector.broadcast %527 : f32 to vector<8x512xf32>
    %529 = arith.addf %526, %528 : vector<8x512xf32>
    %cst_132 = arith.constant 0.000000e+00 : f32
    %530 = vector.broadcast %cst_132 : f32 to vector<8x512xf32>
    %531 = arith.maximumf %529, %530 : vector<8x512xf32>
    %c43_133 = arith.constant 43 : index
    %532 = memref.load %arg4[%c43_133] : memref<80xf32, #tpu.memory_space<smem>>
    %533 = vector.broadcast %532 : f32 to vector<8x512xf32>
    %534 = arith.mulf %531, %533 : vector<8x512xf32>
    %535 = arith.addf %523, %534 : vector<8x512xf32>
    %c44 = arith.constant 44 : index
    %536 = memref.load %arg2[%c44] : memref<80xf32, #tpu.memory_space<smem>>
    %537 = vector.broadcast %536 : f32 to vector<8x512xf32>
    %538 = arith.mulf %537, %6 : vector<8x512xf32>
    %c44_134 = arith.constant 44 : index
    %539 = memref.load %arg3[%c44_134] : memref<80xf32, #tpu.memory_space<smem>>
    %540 = vector.broadcast %539 : f32 to vector<8x512xf32>
    %541 = arith.addf %538, %540 : vector<8x512xf32>
    %cst_135 = arith.constant 0.000000e+00 : f32
    %542 = vector.broadcast %cst_135 : f32 to vector<8x512xf32>
    %543 = arith.maximumf %541, %542 : vector<8x512xf32>
    %c44_136 = arith.constant 44 : index
    %544 = memref.load %arg4[%c44_136] : memref<80xf32, #tpu.memory_space<smem>>
    %545 = vector.broadcast %544 : f32 to vector<8x512xf32>
    %546 = arith.mulf %543, %545 : vector<8x512xf32>
    %547 = arith.addf %535, %546 : vector<8x512xf32>
    %c45 = arith.constant 45 : index
    %548 = memref.load %arg2[%c45] : memref<80xf32, #tpu.memory_space<smem>>
    %549 = vector.broadcast %548 : f32 to vector<8x512xf32>
    %550 = arith.mulf %549, %6 : vector<8x512xf32>
    %c45_137 = arith.constant 45 : index
    %551 = memref.load %arg3[%c45_137] : memref<80xf32, #tpu.memory_space<smem>>
    %552 = vector.broadcast %551 : f32 to vector<8x512xf32>
    %553 = arith.addf %550, %552 : vector<8x512xf32>
    %cst_138 = arith.constant 0.000000e+00 : f32
    %554 = vector.broadcast %cst_138 : f32 to vector<8x512xf32>
    %555 = arith.maximumf %553, %554 : vector<8x512xf32>
    %c45_139 = arith.constant 45 : index
    %556 = memref.load %arg4[%c45_139] : memref<80xf32, #tpu.memory_space<smem>>
    %557 = vector.broadcast %556 : f32 to vector<8x512xf32>
    %558 = arith.mulf %555, %557 : vector<8x512xf32>
    %559 = arith.addf %547, %558 : vector<8x512xf32>
    %c46 = arith.constant 46 : index
    %560 = memref.load %arg2[%c46] : memref<80xf32, #tpu.memory_space<smem>>
    %561 = vector.broadcast %560 : f32 to vector<8x512xf32>
    %562 = arith.mulf %561, %6 : vector<8x512xf32>
    %c46_140 = arith.constant 46 : index
    %563 = memref.load %arg3[%c46_140] : memref<80xf32, #tpu.memory_space<smem>>
    %564 = vector.broadcast %563 : f32 to vector<8x512xf32>
    %565 = arith.addf %562, %564 : vector<8x512xf32>
    %cst_141 = arith.constant 0.000000e+00 : f32
    %566 = vector.broadcast %cst_141 : f32 to vector<8x512xf32>
    %567 = arith.maximumf %565, %566 : vector<8x512xf32>
    %c46_142 = arith.constant 46 : index
    %568 = memref.load %arg4[%c46_142] : memref<80xf32, #tpu.memory_space<smem>>
    %569 = vector.broadcast %568 : f32 to vector<8x512xf32>
    %570 = arith.mulf %567, %569 : vector<8x512xf32>
    %571 = arith.addf %559, %570 : vector<8x512xf32>
    %c47 = arith.constant 47 : index
    %572 = memref.load %arg2[%c47] : memref<80xf32, #tpu.memory_space<smem>>
    %573 = vector.broadcast %572 : f32 to vector<8x512xf32>
    %574 = arith.mulf %573, %6 : vector<8x512xf32>
    %c47_143 = arith.constant 47 : index
    %575 = memref.load %arg3[%c47_143] : memref<80xf32, #tpu.memory_space<smem>>
    %576 = vector.broadcast %575 : f32 to vector<8x512xf32>
    %577 = arith.addf %574, %576 : vector<8x512xf32>
    %cst_144 = arith.constant 0.000000e+00 : f32
    %578 = vector.broadcast %cst_144 : f32 to vector<8x512xf32>
    %579 = arith.maximumf %577, %578 : vector<8x512xf32>
    %c47_145 = arith.constant 47 : index
    %580 = memref.load %arg4[%c47_145] : memref<80xf32, #tpu.memory_space<smem>>
    %581 = vector.broadcast %580 : f32 to vector<8x512xf32>
    %582 = arith.mulf %579, %581 : vector<8x512xf32>
    %583 = arith.addf %571, %582 : vector<8x512xf32>
    %c48 = arith.constant 48 : index
    %584 = memref.load %arg2[%c48] : memref<80xf32, #tpu.memory_space<smem>>
    %585 = vector.broadcast %584 : f32 to vector<8x512xf32>
    %586 = arith.mulf %585, %6 : vector<8x512xf32>
    %c48_146 = arith.constant 48 : index
    %587 = memref.load %arg3[%c48_146] : memref<80xf32, #tpu.memory_space<smem>>
    %588 = vector.broadcast %587 : f32 to vector<8x512xf32>
    %589 = arith.addf %586, %588 : vector<8x512xf32>
    %cst_147 = arith.constant 0.000000e+00 : f32
    %590 = vector.broadcast %cst_147 : f32 to vector<8x512xf32>
    %591 = arith.maximumf %589, %590 : vector<8x512xf32>
    %c48_148 = arith.constant 48 : index
    %592 = memref.load %arg4[%c48_148] : memref<80xf32, #tpu.memory_space<smem>>
    %593 = vector.broadcast %592 : f32 to vector<8x512xf32>
    %594 = arith.mulf %591, %593 : vector<8x512xf32>
    %595 = arith.addf %583, %594 : vector<8x512xf32>
    %c49 = arith.constant 49 : index
    %596 = memref.load %arg2[%c49] : memref<80xf32, #tpu.memory_space<smem>>
    %597 = vector.broadcast %596 : f32 to vector<8x512xf32>
    %598 = arith.mulf %597, %6 : vector<8x512xf32>
    %c49_149 = arith.constant 49 : index
    %599 = memref.load %arg3[%c49_149] : memref<80xf32, #tpu.memory_space<smem>>
    %600 = vector.broadcast %599 : f32 to vector<8x512xf32>
    %601 = arith.addf %598, %600 : vector<8x512xf32>
    %cst_150 = arith.constant 0.000000e+00 : f32
    %602 = vector.broadcast %cst_150 : f32 to vector<8x512xf32>
    %603 = arith.maximumf %601, %602 : vector<8x512xf32>
    %c49_151 = arith.constant 49 : index
    %604 = memref.load %arg4[%c49_151] : memref<80xf32, #tpu.memory_space<smem>>
    %605 = vector.broadcast %604 : f32 to vector<8x512xf32>
    %606 = arith.mulf %603, %605 : vector<8x512xf32>
    %607 = arith.addf %595, %606 : vector<8x512xf32>
    %c50 = arith.constant 50 : index
    %608 = memref.load %arg2[%c50] : memref<80xf32, #tpu.memory_space<smem>>
    %609 = vector.broadcast %608 : f32 to vector<8x512xf32>
    %610 = arith.mulf %609, %6 : vector<8x512xf32>
    %c50_152 = arith.constant 50 : index
    %611 = memref.load %arg3[%c50_152] : memref<80xf32, #tpu.memory_space<smem>>
    %612 = vector.broadcast %611 : f32 to vector<8x512xf32>
    %613 = arith.addf %610, %612 : vector<8x512xf32>
    %cst_153 = arith.constant 0.000000e+00 : f32
    %614 = vector.broadcast %cst_153 : f32 to vector<8x512xf32>
    %615 = arith.maximumf %613, %614 : vector<8x512xf32>
    %c50_154 = arith.constant 50 : index
    %616 = memref.load %arg4[%c50_154] : memref<80xf32, #tpu.memory_space<smem>>
    %617 = vector.broadcast %616 : f32 to vector<8x512xf32>
    %618 = arith.mulf %615, %617 : vector<8x512xf32>
    %619 = arith.addf %607, %618 : vector<8x512xf32>
    %c51 = arith.constant 51 : index
    %620 = memref.load %arg2[%c51] : memref<80xf32, #tpu.memory_space<smem>>
    %621 = vector.broadcast %620 : f32 to vector<8x512xf32>
    %622 = arith.mulf %621, %6 : vector<8x512xf32>
    %c51_155 = arith.constant 51 : index
    %623 = memref.load %arg3[%c51_155] : memref<80xf32, #tpu.memory_space<smem>>
    %624 = vector.broadcast %623 : f32 to vector<8x512xf32>
    %625 = arith.addf %622, %624 : vector<8x512xf32>
    %cst_156 = arith.constant 0.000000e+00 : f32
    %626 = vector.broadcast %cst_156 : f32 to vector<8x512xf32>
    %627 = arith.maximumf %625, %626 : vector<8x512xf32>
    %c51_157 = arith.constant 51 : index
    %628 = memref.load %arg4[%c51_157] : memref<80xf32, #tpu.memory_space<smem>>
    %629 = vector.broadcast %628 : f32 to vector<8x512xf32>
    %630 = arith.mulf %627, %629 : vector<8x512xf32>
    %631 = arith.addf %619, %630 : vector<8x512xf32>
    %c52 = arith.constant 52 : index
    %632 = memref.load %arg2[%c52] : memref<80xf32, #tpu.memory_space<smem>>
    %633 = vector.broadcast %632 : f32 to vector<8x512xf32>
    %634 = arith.mulf %633, %6 : vector<8x512xf32>
    %c52_158 = arith.constant 52 : index
    %635 = memref.load %arg3[%c52_158] : memref<80xf32, #tpu.memory_space<smem>>
    %636 = vector.broadcast %635 : f32 to vector<8x512xf32>
    %637 = arith.addf %634, %636 : vector<8x512xf32>
    %cst_159 = arith.constant 0.000000e+00 : f32
    %638 = vector.broadcast %cst_159 : f32 to vector<8x512xf32>
    %639 = arith.maximumf %637, %638 : vector<8x512xf32>
    %c52_160 = arith.constant 52 : index
    %640 = memref.load %arg4[%c52_160] : memref<80xf32, #tpu.memory_space<smem>>
    %641 = vector.broadcast %640 : f32 to vector<8x512xf32>
    %642 = arith.mulf %639, %641 : vector<8x512xf32>
    %643 = arith.addf %631, %642 : vector<8x512xf32>
    %c53 = arith.constant 53 : index
    %644 = memref.load %arg2[%c53] : memref<80xf32, #tpu.memory_space<smem>>
    %645 = vector.broadcast %644 : f32 to vector<8x512xf32>
    %646 = arith.mulf %645, %6 : vector<8x512xf32>
    %c53_161 = arith.constant 53 : index
    %647 = memref.load %arg3[%c53_161] : memref<80xf32, #tpu.memory_space<smem>>
    %648 = vector.broadcast %647 : f32 to vector<8x512xf32>
    %649 = arith.addf %646, %648 : vector<8x512xf32>
    %cst_162 = arith.constant 0.000000e+00 : f32
    %650 = vector.broadcast %cst_162 : f32 to vector<8x512xf32>
    %651 = arith.maximumf %649, %650 : vector<8x512xf32>
    %c53_163 = arith.constant 53 : index
    %652 = memref.load %arg4[%c53_163] : memref<80xf32, #tpu.memory_space<smem>>
    %653 = vector.broadcast %652 : f32 to vector<8x512xf32>
    %654 = arith.mulf %651, %653 : vector<8x512xf32>
    %655 = arith.addf %643, %654 : vector<8x512xf32>
    %c54 = arith.constant 54 : index
    %656 = memref.load %arg2[%c54] : memref<80xf32, #tpu.memory_space<smem>>
    %657 = vector.broadcast %656 : f32 to vector<8x512xf32>
    %658 = arith.mulf %657, %6 : vector<8x512xf32>
    %c54_164 = arith.constant 54 : index
    %659 = memref.load %arg3[%c54_164] : memref<80xf32, #tpu.memory_space<smem>>
    %660 = vector.broadcast %659 : f32 to vector<8x512xf32>
    %661 = arith.addf %658, %660 : vector<8x512xf32>
    %cst_165 = arith.constant 0.000000e+00 : f32
    %662 = vector.broadcast %cst_165 : f32 to vector<8x512xf32>
    %663 = arith.maximumf %661, %662 : vector<8x512xf32>
    %c54_166 = arith.constant 54 : index
    %664 = memref.load %arg4[%c54_166] : memref<80xf32, #tpu.memory_space<smem>>
    %665 = vector.broadcast %664 : f32 to vector<8x512xf32>
    %666 = arith.mulf %663, %665 : vector<8x512xf32>
    %667 = arith.addf %655, %666 : vector<8x512xf32>
    %c55 = arith.constant 55 : index
    %668 = memref.load %arg2[%c55] : memref<80xf32, #tpu.memory_space<smem>>
    %669 = vector.broadcast %668 : f32 to vector<8x512xf32>
    %670 = arith.mulf %669, %6 : vector<8x512xf32>
    %c55_167 = arith.constant 55 : index
    %671 = memref.load %arg3[%c55_167] : memref<80xf32, #tpu.memory_space<smem>>
    %672 = vector.broadcast %671 : f32 to vector<8x512xf32>
    %673 = arith.addf %670, %672 : vector<8x512xf32>
    %cst_168 = arith.constant 0.000000e+00 : f32
    %674 = vector.broadcast %cst_168 : f32 to vector<8x512xf32>
    %675 = arith.maximumf %673, %674 : vector<8x512xf32>
    %c55_169 = arith.constant 55 : index
    %676 = memref.load %arg4[%c55_169] : memref<80xf32, #tpu.memory_space<smem>>
    %677 = vector.broadcast %676 : f32 to vector<8x512xf32>
    %678 = arith.mulf %675, %677 : vector<8x512xf32>
    %679 = arith.addf %667, %678 : vector<8x512xf32>
    %c56 = arith.constant 56 : index
    %680 = memref.load %arg2[%c56] : memref<80xf32, #tpu.memory_space<smem>>
    %681 = vector.broadcast %680 : f32 to vector<8x512xf32>
    %682 = arith.mulf %681, %6 : vector<8x512xf32>
    %c56_170 = arith.constant 56 : index
    %683 = memref.load %arg3[%c56_170] : memref<80xf32, #tpu.memory_space<smem>>
    %684 = vector.broadcast %683 : f32 to vector<8x512xf32>
    %685 = arith.addf %682, %684 : vector<8x512xf32>
    %cst_171 = arith.constant 0.000000e+00 : f32
    %686 = vector.broadcast %cst_171 : f32 to vector<8x512xf32>
    %687 = arith.maximumf %685, %686 : vector<8x512xf32>
    %c56_172 = arith.constant 56 : index
    %688 = memref.load %arg4[%c56_172] : memref<80xf32, #tpu.memory_space<smem>>
    %689 = vector.broadcast %688 : f32 to vector<8x512xf32>
    %690 = arith.mulf %687, %689 : vector<8x512xf32>
    %691 = arith.addf %679, %690 : vector<8x512xf32>
    %c57 = arith.constant 57 : index
    %692 = memref.load %arg2[%c57] : memref<80xf32, #tpu.memory_space<smem>>
    %693 = vector.broadcast %692 : f32 to vector<8x512xf32>
    %694 = arith.mulf %693, %6 : vector<8x512xf32>
    %c57_173 = arith.constant 57 : index
    %695 = memref.load %arg3[%c57_173] : memref<80xf32, #tpu.memory_space<smem>>
    %696 = vector.broadcast %695 : f32 to vector<8x512xf32>
    %697 = arith.addf %694, %696 : vector<8x512xf32>
    %cst_174 = arith.constant 0.000000e+00 : f32
    %698 = vector.broadcast %cst_174 : f32 to vector<8x512xf32>
    %699 = arith.maximumf %697, %698 : vector<8x512xf32>
    %c57_175 = arith.constant 57 : index
    %700 = memref.load %arg4[%c57_175] : memref<80xf32, #tpu.memory_space<smem>>
    %701 = vector.broadcast %700 : f32 to vector<8x512xf32>
    %702 = arith.mulf %699, %701 : vector<8x512xf32>
    %703 = arith.addf %691, %702 : vector<8x512xf32>
    %c58 = arith.constant 58 : index
    %704 = memref.load %arg2[%c58] : memref<80xf32, #tpu.memory_space<smem>>
    %705 = vector.broadcast %704 : f32 to vector<8x512xf32>
    %706 = arith.mulf %705, %6 : vector<8x512xf32>
    %c58_176 = arith.constant 58 : index
    %707 = memref.load %arg3[%c58_176] : memref<80xf32, #tpu.memory_space<smem>>
    %708 = vector.broadcast %707 : f32 to vector<8x512xf32>
    %709 = arith.addf %706, %708 : vector<8x512xf32>
    %cst_177 = arith.constant 0.000000e+00 : f32
    %710 = vector.broadcast %cst_177 : f32 to vector<8x512xf32>
    %711 = arith.maximumf %709, %710 : vector<8x512xf32>
    %c58_178 = arith.constant 58 : index
    %712 = memref.load %arg4[%c58_178] : memref<80xf32, #tpu.memory_space<smem>>
    %713 = vector.broadcast %712 : f32 to vector<8x512xf32>
    %714 = arith.mulf %711, %713 : vector<8x512xf32>
    %715 = arith.addf %703, %714 : vector<8x512xf32>
    %c59 = arith.constant 59 : index
    %716 = memref.load %arg2[%c59] : memref<80xf32, #tpu.memory_space<smem>>
    %717 = vector.broadcast %716 : f32 to vector<8x512xf32>
    %718 = arith.mulf %717, %6 : vector<8x512xf32>
    %c59_179 = arith.constant 59 : index
    %719 = memref.load %arg3[%c59_179] : memref<80xf32, #tpu.memory_space<smem>>
    %720 = vector.broadcast %719 : f32 to vector<8x512xf32>
    %721 = arith.addf %718, %720 : vector<8x512xf32>
    %cst_180 = arith.constant 0.000000e+00 : f32
    %722 = vector.broadcast %cst_180 : f32 to vector<8x512xf32>
    %723 = arith.maximumf %721, %722 : vector<8x512xf32>
    %c59_181 = arith.constant 59 : index
    %724 = memref.load %arg4[%c59_181] : memref<80xf32, #tpu.memory_space<smem>>
    %725 = vector.broadcast %724 : f32 to vector<8x512xf32>
    %726 = arith.mulf %723, %725 : vector<8x512xf32>
    %727 = arith.addf %715, %726 : vector<8x512xf32>
    %c60 = arith.constant 60 : index
    %728 = memref.load %arg2[%c60] : memref<80xf32, #tpu.memory_space<smem>>
    %729 = vector.broadcast %728 : f32 to vector<8x512xf32>
    %730 = arith.mulf %729, %6 : vector<8x512xf32>
    %c60_182 = arith.constant 60 : index
    %731 = memref.load %arg3[%c60_182] : memref<80xf32, #tpu.memory_space<smem>>
    %732 = vector.broadcast %731 : f32 to vector<8x512xf32>
    %733 = arith.addf %730, %732 : vector<8x512xf32>
    %cst_183 = arith.constant 0.000000e+00 : f32
    %734 = vector.broadcast %cst_183 : f32 to vector<8x512xf32>
    %735 = arith.maximumf %733, %734 : vector<8x512xf32>
    %c60_184 = arith.constant 60 : index
    %736 = memref.load %arg4[%c60_184] : memref<80xf32, #tpu.memory_space<smem>>
    %737 = vector.broadcast %736 : f32 to vector<8x512xf32>
    %738 = arith.mulf %735, %737 : vector<8x512xf32>
    %739 = arith.addf %727, %738 : vector<8x512xf32>
    %c61 = arith.constant 61 : index
    %740 = memref.load %arg2[%c61] : memref<80xf32, #tpu.memory_space<smem>>
    %741 = vector.broadcast %740 : f32 to vector<8x512xf32>
    %742 = arith.mulf %741, %6 : vector<8x512xf32>
    %c61_185 = arith.constant 61 : index
    %743 = memref.load %arg3[%c61_185] : memref<80xf32, #tpu.memory_space<smem>>
    %744 = vector.broadcast %743 : f32 to vector<8x512xf32>
    %745 = arith.addf %742, %744 : vector<8x512xf32>
    %cst_186 = arith.constant 0.000000e+00 : f32
    %746 = vector.broadcast %cst_186 : f32 to vector<8x512xf32>
    %747 = arith.maximumf %745, %746 : vector<8x512xf32>
    %c61_187 = arith.constant 61 : index
    %748 = memref.load %arg4[%c61_187] : memref<80xf32, #tpu.memory_space<smem>>
    %749 = vector.broadcast %748 : f32 to vector<8x512xf32>
    %750 = arith.mulf %747, %749 : vector<8x512xf32>
    %751 = arith.addf %739, %750 : vector<8x512xf32>
    %c62 = arith.constant 62 : index
    %752 = memref.load %arg2[%c62] : memref<80xf32, #tpu.memory_space<smem>>
    %753 = vector.broadcast %752 : f32 to vector<8x512xf32>
    %754 = arith.mulf %753, %6 : vector<8x512xf32>
    %c62_188 = arith.constant 62 : index
    %755 = memref.load %arg3[%c62_188] : memref<80xf32, #tpu.memory_space<smem>>
    %756 = vector.broadcast %755 : f32 to vector<8x512xf32>
    %757 = arith.addf %754, %756 : vector<8x512xf32>
    %cst_189 = arith.constant 0.000000e+00 : f32
    %758 = vector.broadcast %cst_189 : f32 to vector<8x512xf32>
    %759 = arith.maximumf %757, %758 : vector<8x512xf32>
    %c62_190 = arith.constant 62 : index
    %760 = memref.load %arg4[%c62_190] : memref<80xf32, #tpu.memory_space<smem>>
    %761 = vector.broadcast %760 : f32 to vector<8x512xf32>
    %762 = arith.mulf %759, %761 : vector<8x512xf32>
    %763 = arith.addf %751, %762 : vector<8x512xf32>
    %c63 = arith.constant 63 : index
    %764 = memref.load %arg2[%c63] : memref<80xf32, #tpu.memory_space<smem>>
    %765 = vector.broadcast %764 : f32 to vector<8x512xf32>
    %766 = arith.mulf %765, %6 : vector<8x512xf32>
    %c63_191 = arith.constant 63 : index
    %767 = memref.load %arg3[%c63_191] : memref<80xf32, #tpu.memory_space<smem>>
    %768 = vector.broadcast %767 : f32 to vector<8x512xf32>
    %769 = arith.addf %766, %768 : vector<8x512xf32>
    %cst_192 = arith.constant 0.000000e+00 : f32
    %770 = vector.broadcast %cst_192 : f32 to vector<8x512xf32>
    %771 = arith.maximumf %769, %770 : vector<8x512xf32>
    %c63_193 = arith.constant 63 : index
    %772 = memref.load %arg4[%c63_193] : memref<80xf32, #tpu.memory_space<smem>>
    %773 = vector.broadcast %772 : f32 to vector<8x512xf32>
    %774 = arith.mulf %771, %773 : vector<8x512xf32>
    %775 = arith.addf %763, %774 : vector<8x512xf32>
    %c64 = arith.constant 64 : index
    %776 = memref.load %arg2[%c64] : memref<80xf32, #tpu.memory_space<smem>>
    %777 = vector.broadcast %776 : f32 to vector<8x512xf32>
    %778 = arith.mulf %777, %6 : vector<8x512xf32>
    %c64_194 = arith.constant 64 : index
    %779 = memref.load %arg3[%c64_194] : memref<80xf32, #tpu.memory_space<smem>>
    %780 = vector.broadcast %779 : f32 to vector<8x512xf32>
    %781 = arith.addf %778, %780 : vector<8x512xf32>
    %cst_195 = arith.constant 0.000000e+00 : f32
    %782 = vector.broadcast %cst_195 : f32 to vector<8x512xf32>
    %783 = arith.maximumf %781, %782 : vector<8x512xf32>
    %c64_196 = arith.constant 64 : index
    %784 = memref.load %arg4[%c64_196] : memref<80xf32, #tpu.memory_space<smem>>
    %785 = vector.broadcast %784 : f32 to vector<8x512xf32>
    %786 = arith.mulf %783, %785 : vector<8x512xf32>
    %787 = arith.addf %775, %786 : vector<8x512xf32>
    %c65 = arith.constant 65 : index
    %788 = memref.load %arg2[%c65] : memref<80xf32, #tpu.memory_space<smem>>
    %789 = vector.broadcast %788 : f32 to vector<8x512xf32>
    %790 = arith.mulf %789, %6 : vector<8x512xf32>
    %c65_197 = arith.constant 65 : index
    %791 = memref.load %arg3[%c65_197] : memref<80xf32, #tpu.memory_space<smem>>
    %792 = vector.broadcast %791 : f32 to vector<8x512xf32>
    %793 = arith.addf %790, %792 : vector<8x512xf32>
    %cst_198 = arith.constant 0.000000e+00 : f32
    %794 = vector.broadcast %cst_198 : f32 to vector<8x512xf32>
    %795 = arith.maximumf %793, %794 : vector<8x512xf32>
    %c65_199 = arith.constant 65 : index
    %796 = memref.load %arg4[%c65_199] : memref<80xf32, #tpu.memory_space<smem>>
    %797 = vector.broadcast %796 : f32 to vector<8x512xf32>
    %798 = arith.mulf %795, %797 : vector<8x512xf32>
    %799 = arith.addf %787, %798 : vector<8x512xf32>
    %c66 = arith.constant 66 : index
    %800 = memref.load %arg2[%c66] : memref<80xf32, #tpu.memory_space<smem>>
    %801 = vector.broadcast %800 : f32 to vector<8x512xf32>
    %802 = arith.mulf %801, %6 : vector<8x512xf32>
    %c66_200 = arith.constant 66 : index
    %803 = memref.load %arg3[%c66_200] : memref<80xf32, #tpu.memory_space<smem>>
    %804 = vector.broadcast %803 : f32 to vector<8x512xf32>
    %805 = arith.addf %802, %804 : vector<8x512xf32>
    %cst_201 = arith.constant 0.000000e+00 : f32
    %806 = vector.broadcast %cst_201 : f32 to vector<8x512xf32>
    %807 = arith.maximumf %805, %806 : vector<8x512xf32>
    %c66_202 = arith.constant 66 : index
    %808 = memref.load %arg4[%c66_202] : memref<80xf32, #tpu.memory_space<smem>>
    %809 = vector.broadcast %808 : f32 to vector<8x512xf32>
    %810 = arith.mulf %807, %809 : vector<8x512xf32>
    %811 = arith.addf %799, %810 : vector<8x512xf32>
    %c67 = arith.constant 67 : index
    %812 = memref.load %arg2[%c67] : memref<80xf32, #tpu.memory_space<smem>>
    %813 = vector.broadcast %812 : f32 to vector<8x512xf32>
    %814 = arith.mulf %813, %6 : vector<8x512xf32>
    %c67_203 = arith.constant 67 : index
    %815 = memref.load %arg3[%c67_203] : memref<80xf32, #tpu.memory_space<smem>>
    %816 = vector.broadcast %815 : f32 to vector<8x512xf32>
    %817 = arith.addf %814, %816 : vector<8x512xf32>
    %cst_204 = arith.constant 0.000000e+00 : f32
    %818 = vector.broadcast %cst_204 : f32 to vector<8x512xf32>
    %819 = arith.maximumf %817, %818 : vector<8x512xf32>
    %c67_205 = arith.constant 67 : index
    %820 = memref.load %arg4[%c67_205] : memref<80xf32, #tpu.memory_space<smem>>
    %821 = vector.broadcast %820 : f32 to vector<8x512xf32>
    %822 = arith.mulf %819, %821 : vector<8x512xf32>
    %823 = arith.addf %811, %822 : vector<8x512xf32>
    %c68 = arith.constant 68 : index
    %824 = memref.load %arg2[%c68] : memref<80xf32, #tpu.memory_space<smem>>
    %825 = vector.broadcast %824 : f32 to vector<8x512xf32>
    %826 = arith.mulf %825, %6 : vector<8x512xf32>
    %c68_206 = arith.constant 68 : index
    %827 = memref.load %arg3[%c68_206] : memref<80xf32, #tpu.memory_space<smem>>
    %828 = vector.broadcast %827 : f32 to vector<8x512xf32>
    %829 = arith.addf %826, %828 : vector<8x512xf32>
    %cst_207 = arith.constant 0.000000e+00 : f32
    %830 = vector.broadcast %cst_207 : f32 to vector<8x512xf32>
    %831 = arith.maximumf %829, %830 : vector<8x512xf32>
    %c68_208 = arith.constant 68 : index
    %832 = memref.load %arg4[%c68_208] : memref<80xf32, #tpu.memory_space<smem>>
    %833 = vector.broadcast %832 : f32 to vector<8x512xf32>
    %834 = arith.mulf %831, %833 : vector<8x512xf32>
    %835 = arith.addf %823, %834 : vector<8x512xf32>
    %c69 = arith.constant 69 : index
    %836 = memref.load %arg2[%c69] : memref<80xf32, #tpu.memory_space<smem>>
    %837 = vector.broadcast %836 : f32 to vector<8x512xf32>
    %838 = arith.mulf %837, %6 : vector<8x512xf32>
    %c69_209 = arith.constant 69 : index
    %839 = memref.load %arg3[%c69_209] : memref<80xf32, #tpu.memory_space<smem>>
    %840 = vector.broadcast %839 : f32 to vector<8x512xf32>
    %841 = arith.addf %838, %840 : vector<8x512xf32>
    %cst_210 = arith.constant 0.000000e+00 : f32
    %842 = vector.broadcast %cst_210 : f32 to vector<8x512xf32>
    %843 = arith.maximumf %841, %842 : vector<8x512xf32>
    %c69_211 = arith.constant 69 : index
    %844 = memref.load %arg4[%c69_211] : memref<80xf32, #tpu.memory_space<smem>>
    %845 = vector.broadcast %844 : f32 to vector<8x512xf32>
    %846 = arith.mulf %843, %845 : vector<8x512xf32>
    %847 = arith.addf %835, %846 : vector<8x512xf32>
    %c70 = arith.constant 70 : index
    %848 = memref.load %arg2[%c70] : memref<80xf32, #tpu.memory_space<smem>>
    %849 = vector.broadcast %848 : f32 to vector<8x512xf32>
    %850 = arith.mulf %849, %6 : vector<8x512xf32>
    %c70_212 = arith.constant 70 : index
    %851 = memref.load %arg3[%c70_212] : memref<80xf32, #tpu.memory_space<smem>>
    %852 = vector.broadcast %851 : f32 to vector<8x512xf32>
    %853 = arith.addf %850, %852 : vector<8x512xf32>
    %cst_213 = arith.constant 0.000000e+00 : f32
    %854 = vector.broadcast %cst_213 : f32 to vector<8x512xf32>
    %855 = arith.maximumf %853, %854 : vector<8x512xf32>
    %c70_214 = arith.constant 70 : index
    %856 = memref.load %arg4[%c70_214] : memref<80xf32, #tpu.memory_space<smem>>
    %857 = vector.broadcast %856 : f32 to vector<8x512xf32>
    %858 = arith.mulf %855, %857 : vector<8x512xf32>
    %859 = arith.addf %847, %858 : vector<8x512xf32>
    %c71 = arith.constant 71 : index
    %860 = memref.load %arg2[%c71] : memref<80xf32, #tpu.memory_space<smem>>
    %861 = vector.broadcast %860 : f32 to vector<8x512xf32>
    %862 = arith.mulf %861, %6 : vector<8x512xf32>
    %c71_215 = arith.constant 71 : index
    %863 = memref.load %arg3[%c71_215] : memref<80xf32, #tpu.memory_space<smem>>
    %864 = vector.broadcast %863 : f32 to vector<8x512xf32>
    %865 = arith.addf %862, %864 : vector<8x512xf32>
    %cst_216 = arith.constant 0.000000e+00 : f32
    %866 = vector.broadcast %cst_216 : f32 to vector<8x512xf32>
    %867 = arith.maximumf %865, %866 : vector<8x512xf32>
    %c71_217 = arith.constant 71 : index
    %868 = memref.load %arg4[%c71_217] : memref<80xf32, #tpu.memory_space<smem>>
    %869 = vector.broadcast %868 : f32 to vector<8x512xf32>
    %870 = arith.mulf %867, %869 : vector<8x512xf32>
    %871 = arith.addf %859, %870 : vector<8x512xf32>
    %c72 = arith.constant 72 : index
    %872 = memref.load %arg2[%c72] : memref<80xf32, #tpu.memory_space<smem>>
    %873 = vector.broadcast %872 : f32 to vector<8x512xf32>
    %874 = arith.mulf %873, %6 : vector<8x512xf32>
    %c72_218 = arith.constant 72 : index
    %875 = memref.load %arg3[%c72_218] : memref<80xf32, #tpu.memory_space<smem>>
    %876 = vector.broadcast %875 : f32 to vector<8x512xf32>
    %877 = arith.addf %874, %876 : vector<8x512xf32>
    %cst_219 = arith.constant 0.000000e+00 : f32
    %878 = vector.broadcast %cst_219 : f32 to vector<8x512xf32>
    %879 = arith.maximumf %877, %878 : vector<8x512xf32>
    %c72_220 = arith.constant 72 : index
    %880 = memref.load %arg4[%c72_220] : memref<80xf32, #tpu.memory_space<smem>>
    %881 = vector.broadcast %880 : f32 to vector<8x512xf32>
    %882 = arith.mulf %879, %881 : vector<8x512xf32>
    %883 = arith.addf %871, %882 : vector<8x512xf32>
    %c73 = arith.constant 73 : index
    %884 = memref.load %arg2[%c73] : memref<80xf32, #tpu.memory_space<smem>>
    %885 = vector.broadcast %884 : f32 to vector<8x512xf32>
    %886 = arith.mulf %885, %6 : vector<8x512xf32>
    %c73_221 = arith.constant 73 : index
    %887 = memref.load %arg3[%c73_221] : memref<80xf32, #tpu.memory_space<smem>>
    %888 = vector.broadcast %887 : f32 to vector<8x512xf32>
    %889 = arith.addf %886, %888 : vector<8x512xf32>
    %cst_222 = arith.constant 0.000000e+00 : f32
    %890 = vector.broadcast %cst_222 : f32 to vector<8x512xf32>
    %891 = arith.maximumf %889, %890 : vector<8x512xf32>
    %c73_223 = arith.constant 73 : index
    %892 = memref.load %arg4[%c73_223] : memref<80xf32, #tpu.memory_space<smem>>
    %893 = vector.broadcast %892 : f32 to vector<8x512xf32>
    %894 = arith.mulf %891, %893 : vector<8x512xf32>
    %895 = arith.addf %883, %894 : vector<8x512xf32>
    %c74 = arith.constant 74 : index
    %896 = memref.load %arg2[%c74] : memref<80xf32, #tpu.memory_space<smem>>
    %897 = vector.broadcast %896 : f32 to vector<8x512xf32>
    %898 = arith.mulf %897, %6 : vector<8x512xf32>
    %c74_224 = arith.constant 74 : index
    %899 = memref.load %arg3[%c74_224] : memref<80xf32, #tpu.memory_space<smem>>
    %900 = vector.broadcast %899 : f32 to vector<8x512xf32>
    %901 = arith.addf %898, %900 : vector<8x512xf32>
    %cst_225 = arith.constant 0.000000e+00 : f32
    %902 = vector.broadcast %cst_225 : f32 to vector<8x512xf32>
    %903 = arith.maximumf %901, %902 : vector<8x512xf32>
    %c74_226 = arith.constant 74 : index
    %904 = memref.load %arg4[%c74_226] : memref<80xf32, #tpu.memory_space<smem>>
    %905 = vector.broadcast %904 : f32 to vector<8x512xf32>
    %906 = arith.mulf %903, %905 : vector<8x512xf32>
    %907 = arith.addf %895, %906 : vector<8x512xf32>
    %c75 = arith.constant 75 : index
    %908 = memref.load %arg2[%c75] : memref<80xf32, #tpu.memory_space<smem>>
    %909 = vector.broadcast %908 : f32 to vector<8x512xf32>
    %910 = arith.mulf %909, %6 : vector<8x512xf32>
    %c75_227 = arith.constant 75 : index
    %911 = memref.load %arg3[%c75_227] : memref<80xf32, #tpu.memory_space<smem>>
    %912 = vector.broadcast %911 : f32 to vector<8x512xf32>
    %913 = arith.addf %910, %912 : vector<8x512xf32>
    %cst_228 = arith.constant 0.000000e+00 : f32
    %914 = vector.broadcast %cst_228 : f32 to vector<8x512xf32>
    %915 = arith.maximumf %913, %914 : vector<8x512xf32>
    %c75_229 = arith.constant 75 : index
    %916 = memref.load %arg4[%c75_229] : memref<80xf32, #tpu.memory_space<smem>>
    %917 = vector.broadcast %916 : f32 to vector<8x512xf32>
    %918 = arith.mulf %915, %917 : vector<8x512xf32>
    %919 = arith.addf %907, %918 : vector<8x512xf32>
    %c76 = arith.constant 76 : index
    %920 = memref.load %arg2[%c76] : memref<80xf32, #tpu.memory_space<smem>>
    %921 = vector.broadcast %920 : f32 to vector<8x512xf32>
    %922 = arith.mulf %921, %6 : vector<8x512xf32>
    %c76_230 = arith.constant 76 : index
    %923 = memref.load %arg3[%c76_230] : memref<80xf32, #tpu.memory_space<smem>>
    %924 = vector.broadcast %923 : f32 to vector<8x512xf32>
    %925 = arith.addf %922, %924 : vector<8x512xf32>
    %cst_231 = arith.constant 0.000000e+00 : f32
    %926 = vector.broadcast %cst_231 : f32 to vector<8x512xf32>
    %927 = arith.maximumf %925, %926 : vector<8x512xf32>
    %c76_232 = arith.constant 76 : index
    %928 = memref.load %arg4[%c76_232] : memref<80xf32, #tpu.memory_space<smem>>
    %929 = vector.broadcast %928 : f32 to vector<8x512xf32>
    %930 = arith.mulf %927, %929 : vector<8x512xf32>
    %931 = arith.addf %919, %930 : vector<8x512xf32>
    %c77 = arith.constant 77 : index
    %932 = memref.load %arg2[%c77] : memref<80xf32, #tpu.memory_space<smem>>
    %933 = vector.broadcast %932 : f32 to vector<8x512xf32>
    %934 = arith.mulf %933, %6 : vector<8x512xf32>
    %c77_233 = arith.constant 77 : index
    %935 = memref.load %arg3[%c77_233] : memref<80xf32, #tpu.memory_space<smem>>
    %936 = vector.broadcast %935 : f32 to vector<8x512xf32>
    %937 = arith.addf %934, %936 : vector<8x512xf32>
    %cst_234 = arith.constant 0.000000e+00 : f32
    %938 = vector.broadcast %cst_234 : f32 to vector<8x512xf32>
    %939 = arith.maximumf %937, %938 : vector<8x512xf32>
    %c77_235 = arith.constant 77 : index
    %940 = memref.load %arg4[%c77_235] : memref<80xf32, #tpu.memory_space<smem>>
    %941 = vector.broadcast %940 : f32 to vector<8x512xf32>
    %942 = arith.mulf %939, %941 : vector<8x512xf32>
    %943 = arith.addf %931, %942 : vector<8x512xf32>
    %c78 = arith.constant 78 : index
    %944 = memref.load %arg2[%c78] : memref<80xf32, #tpu.memory_space<smem>>
    %945 = vector.broadcast %944 : f32 to vector<8x512xf32>
    %946 = arith.mulf %945, %6 : vector<8x512xf32>
    %c78_236 = arith.constant 78 : index
    %947 = memref.load %arg3[%c78_236] : memref<80xf32, #tpu.memory_space<smem>>
    %948 = vector.broadcast %947 : f32 to vector<8x512xf32>
    %949 = arith.addf %946, %948 : vector<8x512xf32>
    %cst_237 = arith.constant 0.000000e+00 : f32
    %950 = vector.broadcast %cst_237 : f32 to vector<8x512xf32>
    %951 = arith.maximumf %949, %950 : vector<8x512xf32>
    %c78_238 = arith.constant 78 : index
    %952 = memref.load %arg4[%c78_238] : memref<80xf32, #tpu.memory_space<smem>>
    %953 = vector.broadcast %952 : f32 to vector<8x512xf32>
    %954 = arith.mulf %951, %953 : vector<8x512xf32>
    %955 = arith.addf %943, %954 : vector<8x512xf32>
    %c79 = arith.constant 79 : index
    %956 = memref.load %arg2[%c79] : memref<80xf32, #tpu.memory_space<smem>>
    %957 = vector.broadcast %956 : f32 to vector<8x512xf32>
    %958 = arith.mulf %957, %6 : vector<8x512xf32>
    %c79_239 = arith.constant 79 : index
    %959 = memref.load %arg3[%c79_239] : memref<80xf32, #tpu.memory_space<smem>>
    %960 = vector.broadcast %959 : f32 to vector<8x512xf32>
    %961 = arith.addf %958, %960 : vector<8x512xf32>
    %cst_240 = arith.constant 0.000000e+00 : f32
    %962 = vector.broadcast %cst_240 : f32 to vector<8x512xf32>
    %963 = arith.maximumf %961, %962 : vector<8x512xf32>
    %c79_241 = arith.constant 79 : index
    %964 = memref.load %arg4[%c79_241] : memref<80xf32, #tpu.memory_space<smem>>
    %965 = vector.broadcast %964 : f32 to vector<8x512xf32>
    %966 = arith.mulf %963, %965 : vector<8x512xf32>
    %967 = arith.addf %955, %966 : vector<8x512xf32>
    %c0_242 = arith.constant 0 : index
    %968 = arith.index_cast %4 : i32 to index
    %969 = vector.load %arg6[%c0_242, %968] : memref<8x512xf32, #tpu.memory_space<vmem>>, vector<8x512xf32>
    tpu.vector_store %arg6[%c0_242, %968], %967 {strides = array<i32>} : memref<8x512xf32, #tpu.memory_space<vmem>>, vector<8x512xf32>,
    %c1_i32_243 = arith.constant 1 : i32
    return
  }
  func.func @transform_0(%arg0: i32) -> (i32, i32) {
    %c0_i32 = arith.constant 0 : i32
    %c0_i32_0 = arith.constant 0 : i32
    return %arg0, %c0_i32 : i32, i32
  }
  func.func @transform_1(%arg0: i32) -> i32 {
    %c0_i32 = arith.constant 0 : i32
    %c0_i32_0 = arith.constant 0 : i32
    return %c0_i32 : i32
  }
  func.func @transform_2(%arg0: i32) -> i32 {
    %c0_i32 = arith.constant 0 : i32
    %c0_i32_0 = arith.constant 0 : i32
    return %c0_i32 : i32
  }
  func.func @transform_3(%arg0: i32) -> i32 {
    %c0_i32 = arith.constant 0 : i32
    %c0_i32_0 = arith.constant 0 : i32
    return %c0_i32 : i32
  }
  func.func @transform_4(%arg0: i32) -> i32 {
    %c0_i32 = arith.constant 0 : i32
    %c0_i32_0 = arith.constant 0 : i32
    return %c0_i32 : i32
  }
  func.func @transform_5(%arg0: i32) -> (i32, i32) {
    %c0_i32 = arith.constant 0 : i32
    %c0_i32_0 = arith.constant 0 : i32
    return %arg0, %c0_i32 : i32, i32
  }
}

</mosaic_0001>

<llo_original>
// kernel: l2_forward.1
$region0: #{l2_forward.1}
  #allocation0 [shape = 'u32[]', space=smem, size = 0x4, offset = 0x4, fixed_abs, tag = 'smem constant byte address 0x4 - core index']
  #allocation1 [shape = 'u32[144,128]{1,0:T(1,128)}', space=vmem, size = 0x12000, scoped, tag = 'internal scratch']
  #allocation2 [shape = 'f32[1]{0:T(128)S(6)}', space=smem, size = 0x200, scoped, tag = 'scoped memory for l2_forward.1']
  %s0 = inlined_call_operand.vmem [shape: f32[8,512], index: 0, kind: input, shape index: {}]
  %s1 = inlined_call_operand.vmem [shape: f32[80], index: 1, kind: input, shape index: {}]
  %s2 = inlined_call_operand.vmem [shape: f32[80], index: 2, kind: input, shape index: {}]
  %s3 = inlined_call_operand.vmem [shape: f32[80], index: 3, kind: input, shape index: {}]
  %s4 = inlined_call_operand.<no memory space> [shape: f32[1], index: 4, kind: input, shape index: {}]
  %s5 = inlined_call_operand.vmem [shape: f32[8,512], index: 5, kind: output, shape index: {}]
  %s6 = sld [smem:[#allocation0]]
  $region42: #{l2_forward.1} parent=0
    _
  %s8 = ssub.s32 1, %s6
  %s9 = scalar_select 0, %s8, %s6
  %10 = sst [smem:[#allocation2]] %s4
  $region1: #{l2_forward.1} parent=0
    #allocation3 [shape = 'u8[512]{0}', space=smem, size = 0x200, scoped, tag = 'input window, operand 1, single buffered']
    #allocation4 [shape = 's32[1]{0}', space=sflag, size = 0x4, scoped, tag = 'scoped memory for l2_forward.1']
    #allocation5 [shape = 'u8[512]{0}', space=smem, size = 0x200, scoped, tag = 'input window, operand 2, single buffered']
    #allocation6 [shape = 's32[1]{0}', space=sflag, size = 0x4, scoped, tag = 'scoped memory for l2_forward.1']
    #allocation7 [shape = 'u8[512]{0}', space=smem, size = 0x200, scoped, tag = 'input window, operand 3, single buffered']
    %11 = vsyncpa [#allocation4], 0
    %12 = vsyncpa [#allocation6], 0
    // Predicated region
    $region2: #{l2_forward.1} parent=1 // pred_check
      _
    $region3: #{l2_forward.1} parent=1 // pred_check_branch
      %14 = sbr.rel (0) target = $region5
    $region4: #{l2_forward.1} parent=1 // pred_region
      _
    $region5: #{l2_forward.1} parent=1 // pred_fallthru
      _
    // Predicated region
    $region6: #{l2_forward.1} parent=1 // pred_check
      _
    $region7: #{l2_forward.1} parent=1 // pred_check_branch
      %16 = sbr.rel (0) target = $region9
    $region8: #{l2_forward.1} parent=1 // pred_region
      %s18 = ssub.s32 16, 16
      %19 = vsyncadd [#allocation4], %s18
      %s21 = sshll.u32 %s1, 4
      %s22 = int_to_ptr.vmem [resolvable:$true] %s21
      %24 = dma.vmem_to_smem %s22, 16, [#allocation3], [#allocation4]
    $region9: #{l2_forward.1} parent=1 // pred_fallthru
      _
    // Predicated region
    $region10: #{l2_forward.1} parent=1 // pred_check
      _
    $region11: #{l2_forward.1} parent=1 // pred_check_branch
      %26 = sbr.rel (0) target = $region13
    $region12: #{l2_forward.1} parent=1 // pred_region
      %s28 = ssub.s32 16, 16
      %29 = vsyncadd [#allocation6], %s28
      %s31 = sshll.u32 %s2, 4
      %s32 = int_to_ptr.vmem [resolvable:$true] %s31
      %34 = dma.vmem_to_smem %s32, 16, [#allocation5], [#allocation6]
    $region13: #{l2_forward.1} parent=1 // pred_fallthru
      _
    // Predicated region
    $region14: #{l2_forward.1} parent=1 // pred_check
      _
    $region15: #{l2_forward.1} parent=1 // pred_check_branch
      %36 = sbr.rel (0) target = $region17
    $region16: #{l2_forward.1} parent=1 // pred_region
      %s38 = ssub.s32 16, 16
      %39 = vsyncadd [#allocation6], %s38
      %s41 = sshll.u32 %s3, 4
      %s42 = int_to_ptr.vmem [resolvable:$true] %s41
      %44 = dma.vmem_to_smem %s42, 16, [#allocation7], [#allocation6]
    $region17: #{l2_forward.1} parent=1 // pred_fallthru
      _
    // Predicated region
    $region18: #{l2_forward.1} parent=1 // pred_check
      _
    $region19: #{l2_forward.1} parent=1 // pred_check_branch
      %46 = sbr.rel (0) target = $region21
    $region20: #{l2_forward.1} parent=1 // pred_region
      _
    $region21: #{l2_forward.1} parent=1 // pred_fallthru
      _
    // Predicated region
    $region22: #{l2_forward.1} parent=1 // pred_check
      _
    $region23: #{l2_forward.1} parent=1 // pred_check_branch
      %48 = sbr.rel (0) target = $region25
    $region24: #{l2_forward.1} parent=1 // pred_region
      %49 = dma.done [#allocation4], 16
    $region25: #{l2_forward.1} parent=1 // pred_fallthru
      _
    // Predicated region
    $region26: #{l2_forward.1} parent=1 // pred_check
      _
    $region27: #{l2_forward.1} parent=1 // pred_check_branch
      %51 = sbr.rel (0) target = $region29
    $region28: #{l2_forward.1} parent=1 // pred_region
      %52 = dma.done [#allocation6], 16
    $region29: #{l2_forward.1} parent=1 // pred_fallthru
      _
    // Predicated region
    $region30: #{l2_forward.1} parent=1 // pred_check
      _
    $region31: #{l2_forward.1} parent=1 // pred_check_branch
      %54 = sbr.rel (0) target = $region33
    $region32: #{l2_forward.1} parent=1 // pred_region
      %55 = dma.done [#allocation6], 16
    $region33: #{l2_forward.1} parent=1 // pred_fallthru
      _
    %56 = sfence
    %s57 = sld [smem:[#allocation2]]
    %v58 = vld [vmem:[%s0] sm:$0xff]
    %v59 = vld [vmem:[%s0 + $0x8] sm:$0xff]
    %v60 = vld [vmem:[%s0 + $0x10] sm:$0xff]
    %v61 = vld [vmem:[%s0 + $0x18] sm:$0xff]
    %v62 = vstv %s57
    %s63 = sld [smem:[#allocation3]]
    %v64 = vstv %s63
    %v65 = vmul.f32 %v64, %v58
    %v66 = vmul.f32 %v64, %v59
    %v67 = vmul.f32 %v64, %v60
    %v68 = vmul.f32 %v64, %v61
    %s69 = sld [smem:[#allocation5]]
    %v70 = vstv %s69
    %v71 = vadd.f32 %v65, %v70
    %v72 = vadd.f32 %v66, %v70
    %v73 = vadd.f32 %v67, %v70
    %v74 = vadd.f32 %v68, %v70
    %v75 = vmax.f32 %v71, 0.0
    %v76 = vmax.f32 %v72, 0.0
    %v77 = vmax.f32 %v73, 0.0
    %v78 = vmax.f32 %v74, 0.0
    %s79 = sld [smem:[#allocation7]]
    %v80 = vstv %s79
    %v81 = vmul.f32 %v75, %v80
    %v82 = vmul.f32 %v76, %v80
    %v83 = vmul.f32 %v77, %v80
    %v84 = vmul.f32 %v78, %v80
    %v85 = vadd.f32 %v62, %v81
    %v86 = vadd.f32 %v62, %v82
    %v87 = vadd.f32 %v62, %v83
    %v88 = vadd.f32 %v62, %v84
    %s89 = sld [smem:[#allocation3 + $0x1]]
    %v90 = vstv %s89
    %v91 = vmul.f32 %v90, %v58
    %v92 = vmul.f32 %v90, %v59
    %v93 = vmul.f32 %v90, %v60
    %v94 = vmul.f32 %v90, %v61
    %s95 = sld [smem:[#allocation5 + $0x1]]
    %v96 = vstv %s95
    %v97 = vadd.f32 %v91, %v96
    %v98 = vadd.f32 %v92, %v96
    %v99 = vadd.f32 %v93, %v96
    %v100 = vadd.f32 %v94, %v96
    %v101 = vmax.f32 %v97, 0.0
    %v102 = vmax.f32 %v98, 0.0
    %v103 = vmax.f32 %v99, 0.0
    %v104 = vmax.f32 %v100, 0.0
    %s105 = sld [smem:[#allocation7 + $0x1]]
    %v106 = vstv %s105
    %v107 = vmul.f32 %v101, %v106
    %v108 = vmul.f32 %v102, %v106
    %v109 = vmul.f32 %v103, %v106
    %v110 = vmul.f32 %v104, %v106
    %v111 = vadd.f32 %v85, %v107
    %v112 = vadd.f32 %v86, %v108
    %v113 = vadd.f32 %v87, %v109
    %v114 = vadd.f32 %v88, %v110
    %s115 = sld [smem:[#allocation3 + $0x2]]
    %v116 = vstv %s115
    %v117 = vmul.f32 %v116, %v58
    %v118 = vmul.f32 %v116, %v59
    %v119 = vmul.f32 %v116, %v60
    %v120 = vmul.f32 %v116, %v61
    %s121 = sld [smem:[#allocation5 + $0x2]]
    %v122 = vstv %s121
    %v123 = vadd.f32 %v117, %v122
    %v124 = vadd.f32 %v118, %v122
    %v125 = vadd.f32 %v119, %v122
    %v126 = vadd.f32 %v120, %v122
    %v127 = vmax.f32 %v123, 0.0
    %v128 = vmax.f32 %v124, 0.0
    %v129 = vmax.f32 %v125, 0.0
    %v130 = vmax.f32 %v126, 0.0
    %s131 = sld [smem:[#allocation7 + $0x2]]
    %v132 = vstv %s131
    %v133 = vmul.f32 %v127, %v132
    %v134 = vmul.f32 %v128, %v132
    %v135 = vmul.f32 %v129, %v132
    %v136 = vmul.f32 %v130, %v132
    %v137 = vadd.f32 %v111, %v133
    %v138 = vadd.f32 %v112, %v134
    %v139 = vadd.f32 %v113, %v135
    %v140 = vadd.f32 %v114, %v136
    %s141 = sld [smem:[#allocation3 + $0x3]]
    %v142 = vstv %s141
    %v143 = vmul.f32 %v142, %v58
    %v144 = vmul.f32 %v142, %v59
    %v145 = vmul.f32 %v142, %v60
    %v146 = vmul.f32 %v142, %v61
    %s147 = sld [smem:[#allocation5 + $0x3]]
    %v148 = vstv %s147
    %v149 = vadd.f32 %v143, %v148
    %v150 = vadd.f32 %v144, %v148
    %v151 = vadd.f32 %v145, %v148
    %v152 = vadd.f32 %v146, %v148
    %v153 = vmax.f32 %v149, 0.0
    %v154 = vmax.f32 %v150, 0.0
    %v155 = vmax.f32 %v151, 0.0
    %v156 = vmax.f32 %v152, 0.0
    %s157 = sld [smem:[#allocation7 + $0x3]]
    %v158 = vstv %s157
    %v159 = vmul.f32 %v153, %v158
    %v160 = vmul.f32 %v154, %v158
    %v161 = vmul.f32 %v155, %v158
    %v162 = vmul.f32 %v156, %v158
    %v163 = vadd.f32 %v137, %v159
    %v164 = vadd.f32 %v138, %v160
    %v165 = vadd.f32 %v139, %v161
    %v166 = vadd.f32 %v140, %v162
    %s167 = sld [smem:[#allocation3 + $0x4]]
    %v168 = vstv %s167
    %v169 = vmul.f32 %v168, %v58
    %v170 = vmul.f32 %v168, %v59
    %v171 = vmul.f32 %v168, %v60
    %v172 = vmul.f32 %v168, %v61
    %s173 = sld [smem:[#allocation5 + $0x4]]
    %v174 = vstv %s173
    %v175 = vadd.f32 %v169, %v174
    %v176 = vadd.f32 %v170, %v174
    %v177 = vadd.f32 %v171, %v174
    %v178 = vadd.f32 %v172, %v174
    %v179 = vmax.f32 %v175, 0.0
    %v180 = vmax.f32 %v176, 0.0
    %v181 = vmax.f32 %v177, 0.0
    %v182 = vmax.f32 %v178, 0.0
    %s183 = sld [smem:[#allocation7 + $0x4]]
    %v184 = vstv %s183
    %v185 = vmul.f32 %v179, %v184
    %v186 = vmul.f32 %v180, %v184
    %v187 = vmul.f32 %v181, %v184
    %v188 = vmul.f32 %v182, %v184
    %v189 = vadd.f32 %v163, %v185
    %v190 = vadd.f32 %v164, %v186
    %v191 = vadd.f32 %v165, %v187
    %v192 = vadd.f32 %v166, %v188
    %s193 = sld [smem:[#allocation3 + $0x5]]
    %v194 = vstv %s193
    %v195 = vmul.f32 %v194, %v58
    %v196 = vmul.f32 %v194, %v59
    %v197 = vmul.f32 %v194, %v60
    %v198 = vmul.f32 %v194, %v61
    %s199 = sld [smem:[#allocation5 + $0x5]]
    %v200 = vstv %s199
    %v201 = vadd.f32 %v195, %v200
    %v202 = vadd.f32 %v196, %v200
    %v203 = vadd.f32 %v197, %v200
    %v204 = vadd.f32 %v198, %v200
    %v205 = vmax.f32 %v201, 0.0
    %v206 = vmax.f32 %v202, 0.0
    %v207 = vmax.f32 %v203, 0.0
    %v208 = vmax.f32 %v204, 0.0
    %s209 = sld [smem:[#allocation7 + $0x5]]
    %v210 = vstv %s209
    %v211 = vmul.f32 %v205, %v210
    %v212 = vmul.f32 %v206, %v210
    %v213 = vmul.f32 %v207, %v210
    %v214 = vmul.f32 %v208, %v210
    %v215 = vadd.f32 %v189, %v211
    %v216 = vadd.f32 %v190, %v212
    %v217 = vadd.f32 %v191, %v213
    %v218 = vadd.f32 %v192, %v214
    %s219 = sld [smem:[#allocation3 + $0x6]]
    %v220 = vstv %s219
    %v221 = vmul.f32 %v220, %v58
    %v222 = vmul.f32 %v220, %v59
    %v223 = vmul.f32 %v220, %v60
    %v224 = vmul.f32 %v220, %v61
    %s225 = sld [smem:[#allocation5 + $0x6]]
    %v226 = vstv %s225
    %v227 = vadd.f32 %v221, %v226
    %v228 = vadd.f32 %v222, %v226
    %v229 = vadd.f32 %v223, %v226
    %v230 = vadd.f32 %v224, %v226
    %v231 = vmax.f32 %v227, 0.0
    %v232 = vmax.f32 %v228, 0.0
    %v233 = vmax.f32 %v229, 0.0
    %v234 = vmax.f32 %v230, 0.0
    %s235 = sld [smem:[#allocation7 + $0x6]]
    %v236 = vstv %s235
    %v237 = vmul.f32 %v231, %v236
    %v238 = vmul.f32 %v232, %v236
    %v239 = vmul.f32 %v233, %v236
    %v240 = vmul.f32 %v234, %v236
    %v241 = vadd.f32 %v215, %v237
    %v242 = vadd.f32 %v216, %v238
    %v243 = vadd.f32 %v217, %v239
    %v244 = vadd.f32 %v218, %v240
    %s245 = sld [smem:[#allocation3 + $0x7]]
    %v246 = vstv %s245
    %v247 = vmul.f32 %v246, %v58
    %v248 = vmul.f32 %v246, %v59
    %v249 = vmul.f32 %v246, %v60
    %v250 = vmul.f32 %v246, %v61
    %s251 = sld [smem:[#allocation5 + $0x7]]
    %v252 = vstv %s251
    %v253 = vadd.f32 %v247, %v252
    %v254 = vadd.f32 %v248, %v252
    %v255 = vadd.f32 %v249, %v252
    %v256 = vadd.f32 %v250, %v252
    %v257 = vmax.f32 %v253, 0.0
    %v258 = vmax.f32 %v254, 0.0
    %v259 = vmax.f32 %v255, 0.0
    %v260 = vmax.f32 %v256, 0.0
    %s261 = sld [smem:[#allocation7 + $0x7]]
    %v262 = vstv %s261
    %v263 = vmul.f32 %v257, %v262
    %v264 = vmul.f32 %v258, %v262
    %v265 = vmul.f32 %v259, %v262
    %v266 = vmul.f32 %v260, %v262
    %v267 = vadd.f32 %v241, %v263
    %v268 = vadd.f32 %v242, %v264
    %v269 = vadd.f32 %v243, %v265
    %v270 = vadd.f32 %v244, %v266
    %s271 = sld [smem:[#allocation3 + $0x8]]
    %v272 = vstv %s271
    %v273 = vmul.f32 %v272, %v58
    %v274 = vmul.f32 %v272, %v59
    %v275 = vmul.f32 %v272, %v60
    %v276 = vmul.f32 %v272, %v61
    %s277 = sld [smem:[#allocation5 + $0x8]]
    %v278 = vstv %s277
    %v279 = vadd.f32 %v273, %v278
    %v280 = vadd.f32 %v274, %v278
    %v281 = vadd.f32 %v275, %v278
    %v282 = vadd.f32 %v276, %v278
    %v283 = vmax.f32 %v279, 0.0
    %v284 = vmax.f32 %v280, 0.0
    %v285 = vmax.f32 %v281, 0.0
    %v286 = vmax.f32 %v282, 0.0
    %s287 = sld [smem:[#allocation7 + $0x8]]
    %v288 = vstv %s287
    %v289 = vmul.f32 %v283, %v288
    %v290 = vmul.f32 %v284, %v288
    %v291 = vmul.f32 %v285, %v288
    %v292 = vmul.f32 %v286, %v288
    %v293 = vadd.f32 %v267, %v289
    %v294 = vadd.f32 %v268, %v290
    %v295 = vadd.f32 %v269, %v291
    %v296 = vadd.f32 %v270, %v292
    %s297 = sld [smem:[#allocation3 + $0x9]]
    %v298 = vstv %s297
    %v299 = vmul.f32 %v298, %v58
    %v300 = vmul.f32 %v298, %v59
    %v301 = vmul.f32 %v298, %v60
    %v302 = vmul.f32 %v298, %v61
    %s303 = sld [smem:[#allocation5 + $0x9]]
    %v304 = vstv %s303
    %v305 = vadd.f32 %v299, %v304
    %v306 = vadd.f32 %v300, %v304
    %v307 = vadd.f32 %v301, %v304
    %v308 = vadd.f32 %v302, %v304
    %v309 = vmax.f32 %v305, 0.0
    %v310 = vmax.f32 %v306, 0.0
    %v311 = vmax.f32 %v307, 0.0
    %v312 = vmax.f32 %v308, 0.0
    %s313 = sld [smem:[#allocation7 + $0x9]]
    %v314 = vstv %s313
    %v315 = vmul.f32 %v309, %v314
    %v316 = vmul.f32 %v310, %v314
    %v317 = vmul.f32 %v311, %v314
    %v318 = vmul.f32 %v312, %v314
    %v319 = vadd.f32 %v293, %v315
    %v320 = vadd.f32 %v294, %v316
    %v321 = vadd.f32 %v295, %v317
    %v322 = vadd.f32 %v296, %v318
    %s323 = sld [smem:[#allocation3 + $0xa]]
    %v324 = vstv %s323
    %v325 = vmul.f32 %v324, %v58
    %v326 = vmul.f32 %v324, %v59
    %v327 = vmul.f32 %v324, %v60
    %v328 = vmul.f32 %v324, %v61
    %s329 = sld [smem:[#allocation5 + $0xa]]
    %v330 = vstv %s329
    %v331 = vadd.f32 %v325, %v330
    %v332 = vadd.f32 %v326, %v330
    %v333 = vadd.f32 %v327, %v330
    %v334 = vadd.f32 %v328, %v330
    %v335 = vmax.f32 %v331, 0.0
    %v336 = vmax.f32 %v332, 0.0
    %v337 = vmax.f32 %v333, 0.0
    %v338 = vmax.f32 %v334, 0.0
    %s339 = sld [smem:[#allocation7 + $0xa]]
    %v340 = vstv %s339
    %v341 = vmul.f32 %v335, %v340
    %v342 = vmul.f32 %v336, %v340
    %v343 = vmul.f32 %v337, %v340
    %v344 = vmul.f32 %v338, %v340
    %v345 = vadd.f32 %v319, %v341
    %v346 = vadd.f32 %v320, %v342
    %v347 = vadd.f32 %v321, %v343
    %v348 = vadd.f32 %v322, %v344
    %s349 = sld [smem:[#allocation3 + $0xb]]
    %v350 = vstv %s349
    %v351 = vmul.f32 %v350, %v58
    %v352 = vmul.f32 %v350, %v59
    %v353 = vmul.f32 %v350, %v60
    %v354 = vmul.f32 %v350, %v61
    %s355 = sld [smem:[#allocation5 + $0xb]]
    %v356 = vstv %s355
    %v357 = vadd.f32 %v351, %v356
    %v358 = vadd.f32 %v352, %v356
    %v359 = vadd.f32 %v353, %v356
    %v360 = vadd.f32 %v354, %v356
    %v361 = vmax.f32 %v357, 0.0
    %v362 = vmax.f32 %v358, 0.0
    %v363 = vmax.f32 %v359, 0.0
    %v364 = vmax.f32 %v360, 0.0
    %s365 = sld [smem:[#allocation7 + $0xb]]
    %v366 = vstv %s365
    %v367 = vmul.f32 %v361, %v366
    %v368 = vmul.f32 %v362, %v366
    %v369 = vmul.f32 %v363, %v366
    %v370 = vmul.f32 %v364, %v366
    %v371 = vadd.f32 %v345, %v367
    %v372 = vadd.f32 %v346, %v368
    %v373 = vadd.f32 %v347, %v369
    %v374 = vadd.f32 %v348, %v370
    %s375 = sld [smem:[#allocation3 + $0xc]]
    %v376 = vstv %s375
    %v377 = vmul.f32 %v376, %v58
    %v378 = vmul.f32 %v376, %v59
    %v379 = vmul.f32 %v376, %v60
    %v380 = vmul.f32 %v376, %v61
    %s381 = sld [smem:[#allocation5 + $0xc]]
    %v382 = vstv %s381
    %v383 = vadd.f32 %v377, %v382
    %v384 = vadd.f32 %v378, %v382
    %v385 = vadd.f32 %v379, %v382
    %v386 = vadd.f32 %v380, %v382
    %v387 = vmax.f32 %v383, 0.0
    %v388 = vmax.f32 %v384, 0.0
    %v389 = vmax.f32 %v385, 0.0
    %v390 = vmax.f32 %v386, 0.0
    %s391 = sld [smem:[#allocation7 + $0xc]]
    %v392 = vstv %s391
    %v393 = vmul.f32 %v387, %v392
    %v394 = vmul.f32 %v388, %v392
    %v395 = vmul.f32 %v389, %v392
    %v396 = vmul.f32 %v390, %v392
    %v397 = vadd.f32 %v371, %v393
    %v398 = vadd.f32 %v372, %v394
    %v399 = vadd.f32 %v373, %v395
    %v400 = vadd.f32 %v374, %v396
    %s401 = sld [smem:[#allocation3 + $0xd]]
    %v402 = vstv %s401
    %v403 = vmul.f32 %v402, %v58
    %v404 = vmul.f32 %v402, %v59
    %v405 = vmul.f32 %v402, %v60
    %v406 = vmul.f32 %v402, %v61
    %s407 = sld [smem:[#allocation5 + $0xd]]
    %v408 = vstv %s407
    %v409 = vadd.f32 %v403, %v408
    %v410 = vadd.f32 %v404, %v408
    %v411 = vadd.f32 %v405, %v408
    %v412 = vadd.f32 %v406, %v408
    %v413 = vmax.f32 %v409, 0.0
    %v414 = vmax.f32 %v410, 0.0
    %v415 = vmax.f32 %v411, 0.0
    %v416 = vmax.f32 %v412, 0.0
    %s417 = sld [smem:[#allocation7 + $0xd]]
    %v418 = vstv %s417
    %v419 = vmul.f32 %v413, %v418
    %v420 = vmul.f32 %v414, %v418
    %v421 = vmul.f32 %v415, %v418
    %v422 = vmul.f32 %v416, %v418
    %v423 = vadd.f32 %v397, %v419
    %v424 = vadd.f32 %v398, %v420
    %v425 = vadd.f32 %v399, %v421
    %v426 = vadd.f32 %v400, %v422
    %s427 = sld [smem:[#allocation3 + $0xe]]
    %v428 = vstv %s427
    %v429 = vmul.f32 %v428, %v58
    %v430 = vmul.f32 %v428, %v59
    %v431 = vmul.f32 %v428, %v60
    %v432 = vmul.f32 %v428, %v61
    %s433 = sld [smem:[#allocation5 + $0xe]]
    %v434 = vstv %s433
    %v435 = vadd.f32 %v429, %v434
    %v436 = vadd.f32 %v430, %v434
    %v437 = vadd.f32 %v431, %v434
    %v438 = vadd.f32 %v432, %v434
    %v439 = vmax.f32 %v435, 0.0
    %v440 = vmax.f32 %v436, 0.0
    %v441 = vmax.f32 %v437, 0.0
    %v442 = vmax.f32 %v438, 0.0
    %s443 = sld [smem:[#allocation7 + $0xe]]
    %v444 = vstv %s443
    %v445 = vmul.f32 %v439, %v444
    %v446 = vmul.f32 %v440, %v444
    %v447 = vmul.f32 %v441, %v444
    %v448 = vmul.f32 %v442, %v444
    %v449 = vadd.f32 %v423, %v445
    %v450 = vadd.f32 %v424, %v446
    %v451 = vadd.f32 %v425, %v447
    %v452 = vadd.f32 %v426, %v448
    %s453 = sld [smem:[#allocation3 + $0xf]]
    %v454 = vstv %s453
    %v455 = vmul.f32 %v454, %v58
    %v456 = vmul.f32 %v454, %v59
    %v457 = vmul.f32 %v454, %v60
    %v458 = vmul.f32 %v454, %v61
    %s459 = sld [smem:[#allocation5 + $0xf]]
    %v460 = vstv %s459
    %v461 = vadd.f32 %v455, %v460
    %v462 = vadd.f32 %v456, %v460
    %v463 = vadd.f32 %v457, %v460
    %v464 = vadd.f32 %v458, %v460
    %v465 = vmax.f32 %v461, 0.0
    %v466 = vmax.f32 %v462, 0.0
    %v467 = vmax.f32 %v463, 0.0
    %v468 = vmax.f32 %v464, 0.0
    %s469 = sld [smem:[#allocation7 + $0xf]]
    %v470 = vstv %s469
    %v471 = vmul.f32 %v465, %v470
    %v472 = vmul.f32 %v466, %v470
    %v473 = vmul.f32 %v467, %v470
    %v474 = vmul.f32 %v468, %v470
    %v475 = vadd.f32 %v449, %v471
    %v476 = vadd.f32 %v450, %v472
    %v477 = vadd.f32 %v451, %v473
    %v478 = vadd.f32 %v452, %v474
    %s479 = sld [smem:[#allocation3 + $0x10]]
    %v480 = vstv %s479
    %v481 = vmul.f32 %v480, %v58
    %v482 = vmul.f32 %v480, %v59
    %v483 = vmul.f32 %v480, %v60
    %v484 = vmul.f32 %v480, %v61
    %s485 = sld [smem:[#allocation5 + $0x10]]
    %v486 = vstv %s485
    %v487 = vadd.f32 %v481, %v486
    %v488 = vadd.f32 %v482, %v486
    %v489 = vadd.f32 %v483, %v486
    %v490 = vadd.f32 %v484, %v486
    %v491 = vmax.f32 %v487, 0.0
    %v492 = vmax.f32 %v488, 0.0
    %v493 = vmax.f32 %v489, 0.0
    %v494 = vmax.f32 %v490, 0.0
    %s495 = sld [smem:[#allocation7 + $0x10]]
    %v496 = vstv %s495
    %v497 = vmul.f32 %v491, %v496
    %v498 = vmul.f32 %v492, %v496
    %v499 = vmul.f32 %v493, %v496
    %v500 = vmul.f32 %v494, %v496
    %v501 = vadd.f32 %v475, %v497
    %v502 = vadd.f32 %v476, %v498
    %v503 = vadd.f32 %v477, %v499
    %v504 = vadd.f32 %v478, %v500
    %s505 = sld [smem:[#allocation3 + $0x11]]
    %v506 = vstv %s505
    %v507 = vmul.f32 %v506, %v58
    %v508 = vmul.f32 %v506, %v59
    %v509 = vmul.f32 %v506, %v60
    %v510 = vmul.f32 %v506, %v61
    %s511 = sld [smem:[#allocation5 + $0x11]]
    %v512 = vstv %s511
    %v513 = vadd.f32 %v507, %v512
    %v514 = vadd.f32 %v508, %v512
    %v515 = vadd.f32 %v509, %v512
    %v516 = vadd.f32 %v510, %v512
    %v517 = vmax.f32 %v513, 0.0
    %v518 = vmax.f32 %v514, 0.0
    %v519 = vmax.f32 %v515, 0.0
    %v520 = vmax.f32 %v516, 0.0
    %s521 = sld [smem:[#allocation7 + $0x11]]
    %v522 = vstv %s521
    %v523 = vmul.f32 %v517, %v522
    %v524 = vmul.f32 %v518, %v522
    %v525 = vmul.f32 %v519, %v522
    %v526 = vmul.f32 %v520, %v522
    %v527 = vadd.f32 %v501, %v523
    %v528 = vadd.f32 %v502, %v524
    %v529 = vadd.f32 %v503, %v525
    %v530 = vadd.f32 %v504, %v526
    %s531 = sld [smem:[#allocation3 + $0x12]]
    %v532 = vstv %s531
    %v533 = vmul.f32 %v532, %v58
    %v534 = vmul.f32 %v532, %v59
    %v535 = vmul.f32 %v532, %v60
    %v536 = vmul.f32 %v532, %v61
    %s537 = sld [smem:[#allocation5 + $0x12]]
    %v538 = vstv %s537
    %v539 = vadd.f32 %v533, %v538
    %v540 = vadd.f32 %v534, %v538
    %v541 = vadd.f32 %v535, %v538
    %v542 = vadd.f32 %v536, %v538
    %v543 = vmax.f32 %v539, 0.0
    %v544 = vmax.f32 %v540, 0.0
    %v545 = vmax.f32 %v541, 0.0
    %v546 = vmax.f32 %v542, 0.0
    %s547 = sld [smem:[#allocation7 + $0x12]]
    %v548 = vstv %s547
    %v549 = vmul.f32 %v543, %v548
    %v550 = vmul.f32 %v544, %v548
    %v551 = vmul.f32 %v545, %v548
    %v552 = vmul.f32 %v546, %v548
    %v553 = vadd.f32 %v527, %v549
    %v554 = vadd.f32 %v528, %v550
    %v555 = vadd.f32 %v529, %v551
    %v556 = vadd.f32 %v530, %v552
    %s557 = sld [smem:[#allocation3 + $0x13]]
    %v558 = vstv %s557
    %v559 = vmul.f32 %v558, %v58
    %v560 = vmul.f32 %v558, %v59
    %v561 = vmul.f32 %v558, %v60
    %v562 = vmul.f32 %v558, %v61
    %s563 = sld [smem:[#allocation5 + $0x13]]
    %v564 = vstv %s563
    %v565 = vadd.f32 %v559, %v564
    %v566 = vadd.f32 %v560, %v564
    %v567 = vadd.f32 %v561, %v564
    %v568 = vadd.f32 %v562, %v564
    %v569 = vmax.f32 %v565, 0.0
    %v570 = vmax.f32 %v566, 0.0
    %v571 = vmax.f32 %v567, 0.0
    %v572 = vmax.f32 %v568, 0.0
    %s573 = sld [smem:[#allocation7 + $0x13]]
    %v574 = vstv %s573
    %v575 = vmul.f32 %v569, %v574
    %v576 = vmul.f32 %v570, %v574
    %v577 = vmul.f32 %v571, %v574
    %v578 = vmul.f32 %v572, %v574
    %v579 = vadd.f32 %v553, %v575
    %v580 = vadd.f32 %v554, %v576
    %v581 = vadd.f32 %v555, %v577
    %v582 = vadd.f32 %v556, %v578
    %s583 = sld [smem:[#allocation3 + $0x14]]
    %v584 = vstv %s583
    %v585 = vmul.f32 %v584, %v58
    %v586 = vmul.f32 %v584, %v59
    %v587 = vmul.f32 %v584, %v60
    %v588 = vmul.f32 %v584, %v61
    %s589 = sld [smem:[#allocation5 + $0x14]]
    %v590 = vstv %s589
    %v591 = vadd.f32 %v585, %v590
    %v592 = vadd.f32 %v586, %v590
    %v593 = vadd.f32 %v587, %v590
    %v594 = vadd.f32 %v588, %v590
    %v595 = vmax.f32 %v591, 0.0
    %v596 = vmax.f32 %v592, 0.0
    %v597 = vmax.f32 %v593, 0.0
    %v598 = vmax.f32 %v594, 0.0
    %s599 = sld [smem:[#allocation7 + $0x14]]
    %v600 = vstv %s599
    %v601 = vmul.f32 %v595, %v600
    %v602 = vmul.f32 %v596, %v600
    %v603 = vmul.f32 %v597, %v600
    %v604 = vmul.f32 %v598, %v600
    %v605 = vadd.f32 %v579, %v601
    %v606 = vadd.f32 %v580, %v602
    %v607 = vadd.f32 %v581, %v603
    %v608 = vadd.f32 %v582, %v604
    %s609 = sld [smem:[#allocation3 + $0x15]]
    %v610 = vstv %s609
    %v611 = vmul.f32 %v610, %v58
    %v612 = vmul.f32 %v610, %v59
    %v613 = vmul.f32 %v610, %v60
    %v614 = vmul.f32 %v610, %v61
    %s615 = sld [smem:[#allocation5 + $0x15]]
    %v616 = vstv %s615
    %v617 = vadd.f32 %v611, %v616
    %v618 = vadd.f32 %v612, %v616
    %v619 = vadd.f32 %v613, %v616
    %v620 = vadd.f32 %v614, %v616
    %v621 = vmax.f32 %v617, 0.0
    %v622 = vmax.f32 %v618, 0.0
    %v623 = vmax.f32 %v619, 0.0
    %v624 = vmax.f32 %v620, 0.0
    %s625 = sld [smem:[#allocation7 + $0x15]]
    %v626 = vstv %s625
    %v627 = vmul.f32 %v621, %v626
    %v628 = vmul.f32 %v622, %v626
    %v629 = vmul.f32 %v623, %v626
    %v630 = vmul.f32 %v624, %v626
    %v631 = vadd.f32 %v605, %v627
    %v632 = vadd.f32 %v606, %v628
    %v633 = vadd.f32 %v607, %v629
    %v634 = vadd.f32 %v608, %v630
    %s635 = sld [smem:[#allocation3 + $0x16]]
    %v636 = vstv %s635
    %v637 = vmul.f32 %v636, %v58
    %v638 = vmul.f32 %v636, %v59
    %v639 = vmul.f32 %v636, %v60
    %v640 = vmul.f32 %v636, %v61
    %s641 = sld [smem:[#allocation5 + $0x16]]
    %v642 = vstv %s641
    %v643 = vadd.f32 %v637, %v642
    %v644 = vadd.f32 %v638, %v642
    %v645 = vadd.f32 %v639, %v642
    %v646 = vadd.f32 %v640, %v642
    %v647 = vmax.f32 %v643, 0.0
    %v648 = vmax.f32 %v644, 0.0
    %v649 = vmax.f32 %v645, 0.0
    %v650 = vmax.f32 %v646, 0.0
    %s651 = sld [smem:[#allocation7 + $0x16]]
    %v652 = vstv %s651
    %v653 = vmul.f32 %v647, %v652
    %v654 = vmul.f32 %v648, %v652
    %v655 = vmul.f32 %v649, %v652
    %v656 = vmul.f32 %v650, %v652
    %v657 = vadd.f32 %v631, %v653
    %v658 = vadd.f32 %v632, %v654
    %v659 = vadd.f32 %v633, %v655
    %v660 = vadd.f32 %v634, %v656
    %s661 = sld [smem:[#allocation3 + $0x17]]
    %v662 = vstv %s661
    %v663 = vmul.f32 %v662, %v58
    %v664 = vmul.f32 %v662, %v59
    %v665 = vmul.f32 %v662, %v60
    %v666 = vmul.f32 %v662, %v61
    %s667 = sld [smem:[#allocation5 + $0x17]]
    %v668 = vstv %s667
    %v669 = vadd.f32 %v663, %v668
    %v670 = vadd.f32 %v664, %v668
    %v671 = vadd.f32 %v665, %v668
    %v672 = vadd.f32 %v666, %v668
    %v673 = vmax.f32 %v669, 0.0
    %v674 = vmax.f32 %v670, 0.0
    %v675 = vmax.f32 %v671, 0.0
    %v676 = vmax.f32 %v672, 0.0
    %s677 = sld [smem:[#allocation7 + $0x17]]
    %v678 = vstv %s677
    %v679 = vmul.f32 %v673, %v678
    %v680 = vmul.f32 %v674, %v678
    %v681 = vmul.f32 %v675, %v678
    %v682 = vmul.f32 %v676, %v678
    %v683 = vadd.f32 %v657, %v679
    %v684 = vadd.f32 %v658, %v680
    %v685 = vadd.f32 %v659, %v681
    %v686 = vadd.f32 %v660, %v682
    %s687 = sld [smem:[#allocation3 + $0x18]]
    %v688 = vstv %s687
    %v689 = vmul.f32 %v688, %v58
    %v690 = vmul.f32 %v688, %v59
    %v691 = vmul.f32 %v688, %v60
    %v692 = vmul.f32 %v688, %v61
    %s693 = sld [smem:[#allocation5 + $0x18]]
    %v694 = vstv %s693
    %v695 = vadd.f32 %v689, %v694
    %v696 = vadd.f32 %v690, %v694
    %v697 = vadd.f32 %v691, %v694
    %v698 = vadd.f32 %v692, %v694
    %v699 = vmax.f32 %v695, 0.0
    %v700 = vmax.f32 %v696, 0.0
    %v701 = vmax.f32 %v697, 0.0
    %v702 = vmax.f32 %v698, 0.0
    %s703 = sld [smem:[#allocation7 + $0x18]]
    %v704 = vstv %s703
    %v705 = vmul.f32 %v699, %v704
    %v706 = vmul.f32 %v700, %v704
    %v707 = vmul.f32 %v701, %v704
    %v708 = vmul.f32 %v702, %v704
    %v709 = vadd.f32 %v683, %v705
    %v710 = vadd.f32 %v684, %v706
    %v711 = vadd.f32 %v685, %v707
    %v712 = vadd.f32 %v686, %v708
    %s713 = sld [smem:[#allocation3 + $0x19]]
    %v714 = vstv %s713
    %v715 = vmul.f32 %v714, %v58
    %v716 = vmul.f32 %v714, %v59
    %v717 = vmul.f32 %v714, %v60
    %v718 = vmul.f32 %v714, %v61
    %s719 = sld [smem:[#allocation5 + $0x19]]
    %v720 = vstv %s719
    %v721 = vadd.f32 %v715, %v720
    %v722 = vadd.f32 %v716, %v720
    %v723 = vadd.f32 %v717, %v720
    %v724 = vadd.f32 %v718, %v720
    %v725 = vmax.f32 %v721, 0.0
    %v726 = vmax.f32 %v722, 0.0
    %v727 = vmax.f32 %v723, 0.0
    %v728 = vmax.f32 %v724, 0.0
    %s729 = sld [smem:[#allocation7 + $0x19]]
    %v730 = vstv %s729
    %v731 = vmul.f32 %v725, %v730
    %v732 = vmul.f32 %v726, %v730
    %v733 = vmul.f32 %v727, %v730
    %v734 = vmul.f32 %v728, %v730
    %v735 = vadd.f32 %v709, %v731
    %v736 = vadd.f32 %v710, %v732
    %v737 = vadd.f32 %v711, %v733
    %v738 = vadd.f32 %v712, %v734
    %s739 = sld [smem:[#allocation3 + $0x1a]]
    %v740 = vstv %s739
    %v741 = vmul.f32 %v740, %v58
    %v742 = vmul.f32 %v740, %v59
    %v743 = vmul.f32 %v740, %v60
    %v744 = vmul.f32 %v740, %v61
    %s745 = sld [smem:[#allocation5 + $0x1a]]
    %v746 = vstv %s745
    %v747 = vadd.f32 %v741, %v746
    %v748 = vadd.f32 %v742, %v746
    %v749 = vadd.f32 %v743, %v746
    %v750 = vadd.f32 %v744, %v746
    %v751 = vmax.f32 %v747, 0.0
    %v752 = vmax.f32 %v748, 0.0
    %v753 = vmax.f32 %v749, 0.0
    %v754 = vmax.f32 %v750, 0.0
    %s755 = sld [smem:[#allocation7 + $0x1a]]
    %v756 = vstv %s755
    %v757 = vmul.f32 %v751, %v756
    %v758 = vmul.f32 %v752, %v756
    %v759 = vmul.f32 %v753, %v756
    %v760 = vmul.f32 %v754, %v756
    %v761 = vadd.f32 %v735, %v757
    %v762 = vadd.f32 %v736, %v758
    %v763 = vadd.f32 %v737, %v759
    %v764 = vadd.f32 %v738, %v760
    %s765 = sld [smem:[#allocation3 + $0x1b]]
    %v766 = vstv %s765
    %v767 = vmul.f32 %v766, %v58
    %v768 = vmul.f32 %v766, %v59
    %v769 = vmul.f32 %v766, %v60
    %v770 = vmul.f32 %v766, %v61
    %s771 = sld [smem:[#allocation5 + $0x1b]]
    %v772 = vstv %s771
    %v773 = vadd.f32 %v767, %v772
    %v774 = vadd.f32 %v768, %v772
    %v775 = vadd.f32 %v769, %v772
    %v776 = vadd.f32 %v770, %v772
    %v777 = vmax.f32 %v773, 0.0
    %v778 = vmax.f32 %v774, 0.0
    %v779 = vmax.f32 %v775, 0.0
    %v780 = vmax.f32 %v776, 0.0
    %s781 = sld [smem:[#allocation7 + $0x1b]]
    %v782 = vstv %s781
    %v783 = vmul.f32 %v777, %v782
    %v784 = vmul.f32 %v778, %v782
    %v785 = vmul.f32 %v779, %v782
    %v786 = vmul.f32 %v780, %v782
    %v787 = vadd.f32 %v761, %v783
    %v788 = vadd.f32 %v762, %v784
    %v789 = vadd.f32 %v763, %v785
    %v790 = vadd.f32 %v764, %v786
    %s791 = sld [smem:[#allocation3 + $0x1c]]
    %v792 = vstv %s791
    %v793 = vmul.f32 %v792, %v58
    %v794 = vmul.f32 %v792, %v59
    %v795 = vmul.f32 %v792, %v60
    %v796 = vmul.f32 %v792, %v61
    %s797 = sld [smem:[#allocation5 + $0x1c]]
    %v798 = vstv %s797
    %v799 = vadd.f32 %v793, %v798
    %v800 = vadd.f32 %v794, %v798
    %v801 = vadd.f32 %v795, %v798
    %v802 = vadd.f32 %v796, %v798
    %v803 = vmax.f32 %v799, 0.0
    %v804 = vmax.f32 %v800, 0.0
    %v805 = vmax.f32 %v801, 0.0
    %v806 = vmax.f32 %v802, 0.0
    %s807 = sld [smem:[#allocation7 + $0x1c]]
    %v808 = vstv %s807
    %v809 = vmul.f32 %v803, %v808
    %v810 = vmul.f32 %v804, %v808
    %v811 = vmul.f32 %v805, %v808
    %v812 = vmul.f32 %v806, %v808
    %v813 = vadd.f32 %v787, %v809
    %v814 = vadd.f32 %v788, %v810
    %v815 = vadd.f32 %v789, %v811
    %v816 = vadd.f32 %v790, %v812
    %s817 = sld [smem:[#allocation3 + $0x1d]]
    %v818 = vstv %s817
    %v819 = vmul.f32 %v818, %v58
    %v820 = vmul.f32 %v818, %v59
    %v821 = vmul.f32 %v818, %v60
    %v822 = vmul.f32 %v818, %v61
    %s823 = sld [smem:[#allocation5 + $0x1d]]
    %v824 = vstv %s823
    %v825 = vadd.f32 %v819, %v824
    %v826 = vadd.f32 %v820, %v824
    %v827 = vadd.f32 %v821, %v824
    %v828 = vadd.f32 %v822, %v824
    %v829 = vmax.f32 %v825, 0.0
    %v830 = vmax.f32 %v826, 0.0
    %v831 = vmax.f32 %v827, 0.0
    %v832 = vmax.f32 %v828, 0.0
    %s833 = sld [smem:[#allocation7 + $0x1d]]
    %v834 = vstv %s833
    %v835 = vmul.f32 %v829, %v834
    %v836 = vmul.f32 %v830, %v834
    %v837 = vmul.f32 %v831, %v834
    %v838 = vmul.f32 %v832, %v834
    %v839 = vadd.f32 %v813, %v835
    %v840 = vadd.f32 %v814, %v836
    %v841 = vadd.f32 %v815, %v837
    %v842 = vadd.f32 %v816, %v838
    %s843 = sld [smem:[#allocation3 + $0x1e]]
    %v844 = vstv %s843
    %v845 = vmul.f32 %v844, %v58
    %v846 = vmul.f32 %v844, %v59
    %v847 = vmul.f32 %v844, %v60
    %v848 = vmul.f32 %v844, %v61
    %s849 = sld [smem:[#allocation5 + $0x1e]]
    %v850 = vstv %s849
    %v851 = vadd.f32 %v845, %v850
    %v852 = vadd.f32 %v846, %v850
    %v853 = vadd.f32 %v847, %v850
    %v854 = vadd.f32 %v848, %v850
    %v855 = vmax.f32 %v851, 0.0
    %v856 = vmax.f32 %v852, 0.0
    %v857 = vmax.f32 %v853, 0.0
    %v858 = vmax.f32 %v854, 0.0
    %s859 = sld [smem:[#allocation7 + $0x1e]]
    %v860 = vstv %s859
    %v861 = vmul.f32 %v855, %v860
    %v862 = vmul.f32 %v856, %v860
    %v863 = vmul.f32 %v857, %v860
    %v864 = vmul.f32 %v858, %v860
    %v865 = vadd.f32 %v839, %v861
    %v866 = vadd.f32 %v840, %v862
    %v867 = vadd.f32 %v841, %v863
    %v868 = vadd.f32 %v842, %v864
    %s869 = sld [smem:[#allocation3 + $0x1f]]
    %v870 = vstv %s869
    %v871 = vmul.f32 %v870, %v58
    %v872 = vmul.f32 %v870, %v59
    %v873 = vmul.f32 %v870, %v60
    %v874 = vmul.f32 %v870, %v61
    %s875 = sld [smem:[#allocation5 + $0x1f]]
    %v876 = vstv %s875
    %v877 = vadd.f32 %v871, %v876
    %v878 = vadd.f32 %v872, %v876
    %v879 = vadd.f32 %v873, %v876
    %v880 = vadd.f32 %v874, %v876
    %v881 = vmax.f32 %v877, 0.0
    %v882 = vmax.f32 %v878, 0.0
    %v883 = vmax.f32 %v879, 0.0
    %v884 = vmax.f32 %v880, 0.0
    %s885 = sld [smem:[#allocation7 + $0x1f]]
    %v886 = vstv %s885
    %v887 = vmul.f32 %v881, %v886
    %v888 = vmul.f32 %v882, %v886
    %v889 = vmul.f32 %v883, %v886
    %v890 = vmul.f32 %v884, %v886
    %v891 = vadd.f32 %v865, %v887
    %v892 = vadd.f32 %v866, %v888
    %v893 = vadd.f32 %v867, %v889
    %v894 = vadd.f32 %v868, %v890
    %s895 = sld [smem:[#allocation3 + $0x20]]
    %v896 = vstv %s895
    %v897 = vmul.f32 %v896, %v58
    %v898 = vmul.f32 %v896, %v59
    %v899 = vmul.f32 %v896, %v60
    %v900 = vmul.f32 %v896, %v61
    %s901 = sld [smem:[#allocation5 + $0x20]]
    %v902 = vstv %s901
    %v903 = vadd.f32 %v897, %v902
    %v904 = vadd.f32 %v898, %v902
    %v905 = vadd.f32 %v899, %v902
    %v906 = vadd.f32 %v900, %v902
    %v907 = vmax.f32 %v903, 0.0
    %v908 = vmax.f32 %v904, 0.0
    %v909 = vmax.f32 %v905, 0.0
    %v910 = vmax.f32 %v906, 0.0
    %s911 = sld [smem:[#allocation7 + $0x20]]
    %v912 = vstv %s911
    %v913 = vmul.f32 %v907, %v912
    %v914 = vmul.f32 %v908, %v912
    %v915 = vmul.f32 %v909, %v912
    %v916 = vmul.f32 %v910, %v912
    %v917 = vadd.f32 %v891, %v913
    %v918 = vadd.f32 %v892, %v914
    %v919 = vadd.f32 %v893, %v915
    %v920 = vadd.f32 %v894, %v916
    %s921 = sld [smem:[#allocation3 + $0x21]]
    %v922 = vstv %s921
    %v923 = vmul.f32 %v922, %v58
    %v924 = vmul.f32 %v922, %v59
    %v925 = vmul.f32 %v922, %v60
    %v926 = vmul.f32 %v922, %v61
    %s927 = sld [smem:[#allocation5 + $0x21]]
    %v928 = vstv %s927
    %v929 = vadd.f32 %v923, %v928
    %v930 = vadd.f32 %v924, %v928
    %v931 = vadd.f32 %v925, %v928
    %v932 = vadd.f32 %v926, %v928
    %v933 = vmax.f32 %v929, 0.0
    %v934 = vmax.f32 %v930, 0.0
    %v935 = vmax.f32 %v931, 0.0
    %v936 = vmax.f32 %v932, 0.0
    %s937 = sld [smem:[#allocation7 + $0x21]]
    %v938 = vstv %s937
    %v939 = vmul.f32 %v933, %v938
    %v940 = vmul.f32 %v934, %v938
    %v941 = vmul.f32 %v935, %v938
    %v942 = vmul.f32 %v936, %v938
    %v943 = vadd.f32 %v917, %v939
    %v944 = vadd.f32 %v918, %v940
    %v945 = vadd.f32 %v919, %v941
    %v946 = vadd.f32 %v920, %v942
    %s947 = sld [smem:[#allocation3 + $0x22]]
    %v948 = vstv %s947
    %v949 = vmul.f32 %v948, %v58
    %v950 = vmul.f32 %v948, %v59
    %v951 = vmul.f32 %v948, %v60
    %v952 = vmul.f32 %v948, %v61
    %s953 = sld [smem:[#allocation5 + $0x22]]
    %v954 = vstv %s953
    %v955 = vadd.f32 %v949, %v954
    %v956 = vadd.f32 %v950, %v954
    %v957 = vadd.f32 %v951, %v954
    %v958 = vadd.f32 %v952, %v954
    %v959 = vmax.f32 %v955, 0.0
    %v960 = vmax.f32 %v956, 0.0
    %v961 = vmax.f32 %v957, 0.0
    %v962 = vmax.f32 %v958, 0.0
    %s963 = sld [smem:[#allocation7 + $0x22]]
    %v964 = vstv %s963
    %v965 = vmul.f32 %v959, %v964
    %v966 = vmul.f32 %v960, %v964
    %v967 = vmul.f32 %v961, %v964
    %v968 = vmul.f32 %v962, %v964
    %v969 = vadd.f32 %v943, %v965
    %v970 = vadd.f32 %v944, %v966
    %v971 = vadd.f32 %v945, %v967
    %v972 = vadd.f32 %v946, %v968
    %s973 = sld [smem:[#allocation3 + $0x23]]
    %v974 = vstv %s973
    %v975 = vmul.f32 %v974, %v58
    %v976 = vmul.f32 %v974, %v59
    %v977 = vmul.f32 %v974, %v60
    %v978 = vmul.f32 %v974, %v61
    %s979 = sld [smem:[#allocation5 + $0x23]]
    %v980 = vstv %s979
    %v981 = vadd.f32 %v975, %v980
    %v982 = vadd.f32 %v976, %v980
    %v983 = vadd.f32 %v977, %v980
    %v984 = vadd.f32 %v978, %v980
    %v985 = vmax.f32 %v981, 0.0
    %v986 = vmax.f32 %v982, 0.0
    %v987 = vmax.f32 %v983, 0.0
    %v988 = vmax.f32 %v984, 0.0
    %s989 = sld [smem:[#allocation7 + $0x23]]
    %v990 = vstv %s989
    %v991 = vmul.f32 %v985, %v990
    %v992 = vmul.f32 %v986, %v990
    %v993 = vmul.f32 %v987, %v990
    %v994 = vmul.f32 %v988, %v990
    %v995 = vadd.f32 %v969, %v991
    %v996 = vadd.f32 %v970, %v992
    %v997 = vadd.f32 %v971, %v993
    %v998 = vadd.f32 %v972, %v994
    %s999 = sld [smem:[#allocation3 + $0x24]]
    %v1000 = vstv %s999
    %v1001 = vmul.f32 %v1000, %v58
    %v1002 = vmul.f32 %v1000, %v59
    %v1003 = vmul.f32 %v1000, %v60
    %v1004 = vmul.f32 %v1000, %v61
    %s1005 = sld [smem:[#allocation5 + $0x24]]
    %v1006 = vstv %s1005
    %v1007 = vadd.f32 %v1001, %v1006
    %v1008 = vadd.f32 %v1002, %v1006
    %v1009 = vadd.f32 %v1003, %v1006
    %v1010 = vadd.f32 %v1004, %v1006
    %v1011 = vmax.f32 %v1007, 0.0
    %v1012 = vmax.f32 %v1008, 0.0
    %v1013 = vmax.f32 %v1009, 0.0
    %v1014 = vmax.f32 %v1010, 0.0
    %s1015 = sld [smem:[#allocation7 + $0x24]]
    %v1016 = vstv %s1015
    %v1017 = vmul.f32 %v1011, %v1016
    %v1018 = vmul.f32 %v1012, %v1016
    %v1019 = vmul.f32 %v1013, %v1016
    %v1020 = vmul.f32 %v1014, %v1016
    %v1021 = vadd.f32 %v995, %v1017
    %v1022 = vadd.f32 %v996, %v1018
    %v1023 = vadd.f32 %v997, %v1019
    %v1024 = vadd.f32 %v998, %v1020
    %s1025 = sld [smem:[#allocation3 + $0x25]]
    %v1026 = vstv %s1025
    %v1027 = vmul.f32 %v1026, %v58
    %v1028 = vmul.f32 %v1026, %v59
    %v1029 = vmul.f32 %v1026, %v60
    %v1030 = vmul.f32 %v1026, %v61
    %s1031 = sld [smem:[#allocation5 + $0x25]]
    %v1032 = vstv %s1031
    %v1033 = vadd.f32 %v1027, %v1032
    %v1034 = vadd.f32 %v1028, %v1032
    %v1035 = vadd.f32 %v1029, %v1032
    %v1036 = vadd.f32 %v1030, %v1032
    %v1037 = vmax.f32 %v1033, 0.0
    %v1038 = vmax.f32 %v1034, 0.0
    %v1039 = vmax.f32 %v1035, 0.0
    %v1040 = vmax.f32 %v1036, 0.0
    %s1041 = sld [smem:[#allocation7 + $0x25]]
    %v1042 = vstv %s1041
    %v1043 = vmul.f32 %v1037, %v1042
    %v1044 = vmul.f32 %v1038, %v1042
    %v1045 = vmul.f32 %v1039, %v1042
    %v1046 = vmul.f32 %v1040, %v1042
    %v1047 = vadd.f32 %v1021, %v1043
    %v1048 = vadd.f32 %v1022, %v1044
    %v1049 = vadd.f32 %v1023, %v1045
    %v1050 = vadd.f32 %v1024, %v1046
    %s1051 = sld [smem:[#allocation3 + $0x26]]
    %v1052 = vstv %s1051
    %v1053 = vmul.f32 %v1052, %v58
    %v1054 = vmul.f32 %v1052, %v59
    %v1055 = vmul.f32 %v1052, %v60
    %v1056 = vmul.f32 %v1052, %v61
    %s1057 = sld [smem:[#allocation5 + $0x26]]
    %v1058 = vstv %s1057
    %v1059 = vadd.f32 %v1053, %v1058
    %v1060 = vadd.f32 %v1054, %v1058
    %v1061 = vadd.f32 %v1055, %v1058
    %v1062 = vadd.f32 %v1056, %v1058
    %v1063 = vmax.f32 %v1059, 0.0
    %v1064 = vmax.f32 %v1060, 0.0
    %v1065 = vmax.f32 %v1061, 0.0
    %v1066 = vmax.f32 %v1062, 0.0
    %s1067 = sld [smem:[#allocation7 + $0x26]]
    %v1068 = vstv %s1067
    %v1069 = vmul.f32 %v1063, %v1068
    %v1070 = vmul.f32 %v1064, %v1068
    %v1071 = vmul.f32 %v1065, %v1068
    %v1072 = vmul.f32 %v1066, %v1068
    %v1073 = vadd.f32 %v1047, %v1069
    %v1074 = vadd.f32 %v1048, %v1070
    %v1075 = vadd.f32 %v1049, %v1071
    %v1076 = vadd.f32 %v1050, %v1072
    %s1077 = sld [smem:[#allocation3 + $0x27]]
    %v1078 = vstv %s1077
    %v1079 = vmul.f32 %v1078, %v58
    %v1080 = vmul.f32 %v1078, %v59
    %v1081 = vmul.f32 %v1078, %v60
    %v1082 = vmul.f32 %v1078, %v61
    %s1083 = sld [smem:[#allocation5 + $0x27]]
    %v1084 = vstv %s1083
    %v1085 = vadd.f32 %v1079, %v1084
    %v1086 = vadd.f32 %v1080, %v1084
    %v1087 = vadd.f32 %v1081, %v1084
    %v1088 = vadd.f32 %v1082, %v1084
    %v1089 = vmax.f32 %v1085, 0.0
    %v1090 = vmax.f32 %v1086, 0.0
    %v1091 = vmax.f32 %v1087, 0.0
    %v1092 = vmax.f32 %v1088, 0.0
    %s1093 = sld [smem:[#allocation7 + $0x27]]
    %v1094 = vstv %s1093
    %v1095 = vmul.f32 %v1089, %v1094
    %v1096 = vmul.f32 %v1090, %v1094
    %v1097 = vmul.f32 %v1091, %v1094
    %v1098 = vmul.f32 %v1092, %v1094
    %v1099 = vadd.f32 %v1073, %v1095
    %v1100 = vadd.f32 %v1074, %v1096
    %v1101 = vadd.f32 %v1075, %v1097
    %v1102 = vadd.f32 %v1076, %v1098
    %s1103 = sld [smem:[#allocation3 + $0x28]]
    %v1104 = vstv %s1103
    %v1105 = vmul.f32 %v1104, %v58
    %v1106 = vmul.f32 %v1104, %v59
    %v1107 = vmul.f32 %v1104, %v60
    %v1108 = vmul.f32 %v1104, %v61
    %s1109 = sld [smem:[#allocation5 + $0x28]]
    %v1110 = vstv %s1109
    %v1111 = vadd.f32 %v1105, %v1110
    %v1112 = vadd.f32 %v1106, %v1110
    %v1113 = vadd.f32 %v1107, %v1110
    %v1114 = vadd.f32 %v1108, %v1110
    %v1115 = vmax.f32 %v1111, 0.0
    %v1116 = vmax.f32 %v1112, 0.0
    %v1117 = vmax.f32 %v1113, 0.0
    %v1118 = vmax.f32 %v1114, 0.0
    %s1119 = sld [smem:[#allocation7 + $0x28]]
    %v1120 = vstv %s1119
    %v1121 = vmul.f32 %v1115, %v1120
    %v1122 = vmul.f32 %v1116, %v1120
    %v1123 = vmul.f32 %v1117, %v1120
    %v1124 = vmul.f32 %v1118, %v1120
    %v1125 = vadd.f32 %v1099, %v1121
    %v1126 = vadd.f32 %v1100, %v1122
    %v1127 = vadd.f32 %v1101, %v1123
    %v1128 = vadd.f32 %v1102, %v1124
    %s1129 = sld [smem:[#allocation3 + $0x29]]
    %v1130 = vstv %s1129
    %v1131 = vmul.f32 %v1130, %v58
    %v1132 = vmul.f32 %v1130, %v59
    %v1133 = vmul.f32 %v1130, %v60
    %v1134 = vmul.f32 %v1130, %v61
    %s1135 = sld [smem:[#allocation5 + $0x29]]
    %v1136 = vstv %s1135
    %v1137 = vadd.f32 %v1131, %v1136
    %v1138 = vadd.f32 %v1132, %v1136
    %v1139 = vadd.f32 %v1133, %v1136
    %v1140 = vadd.f32 %v1134, %v1136
    %v1141 = vmax.f32 %v1137, 0.0
    %v1142 = vmax.f32 %v1138, 0.0
    %v1143 = vmax.f32 %v1139, 0.0
    %v1144 = vmax.f32 %v1140, 0.0
    %s1145 = sld [smem:[#allocation7 + $0x29]]
    %v1146 = vstv %s1145
    %v1147 = vmul.f32 %v1141, %v1146
    %v1148 = vmul.f32 %v1142, %v1146
    %v1149 = vmul.f32 %v1143, %v1146
    %v1150 = vmul.f32 %v1144, %v1146
    %v1151 = vadd.f32 %v1125, %v1147
    %v1152 = vadd.f32 %v1126, %v1148
    %v1153 = vadd.f32 %v1127, %v1149
    %v1154 = vadd.f32 %v1128, %v1150
    %s1155 = sld [smem:[#allocation3 + $0x2a]]
    %v1156 = vstv %s1155
    %v1157 = vmul.f32 %v1156, %v58
    %v1158 = vmul.f32 %v1156, %v59
    %v1159 = vmul.f32 %v1156, %v60
    %v1160 = vmul.f32 %v1156, %v61
    %s1161 = sld [smem:[#allocation5 + $0x2a]]
    %v1162 = vstv %s1161
    %v1163 = vadd.f32 %v1157, %v1162
    %v1164 = vadd.f32 %v1158, %v1162
    %v1165 = vadd.f32 %v1159, %v1162
    %v1166 = vadd.f32 %v1160, %v1162
    %v1167 = vmax.f32 %v1163, 0.0
    %v1168 = vmax.f32 %v1164, 0.0
    %v1169 = vmax.f32 %v1165, 0.0
    %v1170 = vmax.f32 %v1166, 0.0
    %s1171 = sld [smem:[#allocation7 + $0x2a]]
    %v1172 = vstv %s1171
    %v1173 = vmul.f32 %v1167, %v1172
    %v1174 = vmul.f32 %v1168, %v1172
    %v1175 = vmul.f32 %v1169, %v1172
    %v1176 = vmul.f32 %v1170, %v1172
    %v1177 = vadd.f32 %v1151, %v1173
    %v1178 = vadd.f32 %v1152, %v1174
    %v1179 = vadd.f32 %v1153, %v1175
    %v1180 = vadd.f32 %v1154, %v1176
    %s1181 = sld [smem:[#allocation3 + $0x2b]]
    %v1182 = vstv %s1181
    %v1183 = vmul.f32 %v1182, %v58
    %v1184 = vmul.f32 %v1182, %v59
    %v1185 = vmul.f32 %v1182, %v60
    %v1186 = vmul.f32 %v1182, %v61
    %s1187 = sld [smem:[#allocation5 + $0x2b]]
    %v1188 = vstv %s1187
    %v1189 = vadd.f32 %v1183, %v1188
    %v1190 = vadd.f32 %v1184, %v1188
    %v1191 = vadd.f32 %v1185, %v1188
    %v1192 = vadd.f32 %v1186, %v1188
    %v1193 = vmax.f32 %v1189, 0.0
    %v1194 = vmax.f32 %v1190, 0.0
    %v1195 = vmax.f32 %v1191, 0.0
    %v1196 = vmax.f32 %v1192, 0.0
    %s1197 = sld [smem:[#allocation7 + $0x2b]]
    %v1198 = vstv %s1197
    %v1199 = vmul.f32 %v1193, %v1198
    %v1200 = vmul.f32 %v1194, %v1198
    %v1201 = vmul.f32 %v1195, %v1198
    %v1202 = vmul.f32 %v1196, %v1198
    %v1203 = vadd.f32 %v1177, %v1199
    %v1204 = vadd.f32 %v1178, %v1200
    %v1205 = vadd.f32 %v1179, %v1201
    %v1206 = vadd.f32 %v1180, %v1202
    %s1207 = sld [smem:[#allocation3 + $0x2c]]
    %v1208 = vstv %s1207
    %v1209 = vmul.f32 %v1208, %v58
    %v1210 = vmul.f32 %v1208, %v59
    %v1211 = vmul.f32 %v1208, %v60
    %v1212 = vmul.f32 %v1208, %v61
    %s1213 = sld [smem:[#allocation5 + $0x2c]]
    %v1214 = vstv %s1213
    %v1215 = vadd.f32 %v1209, %v1214
    %v1216 = vadd.f32 %v1210, %v1214
    %v1217 = vadd.f32 %v1211, %v1214
    %v1218 = vadd.f32 %v1212, %v1214
    %v1219 = vmax.f32 %v1215, 0.0
    %v1220 = vmax.f32 %v1216, 0.0
    %v1221 = vmax.f32 %v1217, 0.0
    %v1222 = vmax.f32 %v1218, 0.0
    %s1223 = sld [smem:[#allocation7 + $0x2c]]
    %v1224 = vstv %s1223
    %v1225 = vmul.f32 %v1219, %v1224
    %v1226 = vmul.f32 %v1220, %v1224
    %v1227 = vmul.f32 %v1221, %v1224
    %v1228 = vmul.f32 %v1222, %v1224
    %v1229 = vadd.f32 %v1203, %v1225
    %v1230 = vadd.f32 %v1204, %v1226
    %v1231 = vadd.f32 %v1205, %v1227
    %v1232 = vadd.f32 %v1206, %v1228
    %s1233 = sld [smem:[#allocation3 + $0x2d]]
    %v1234 = vstv %s1233
    %v1235 = vmul.f32 %v1234, %v58
    %v1236 = vmul.f32 %v1234, %v59
    %v1237 = vmul.f32 %v1234, %v60
    %v1238 = vmul.f32 %v1234, %v61
    %s1239 = sld [smem:[#allocation5 + $0x2d]]
    %v1240 = vstv %s1239
    %v1241 = vadd.f32 %v1235, %v1240
    %v1242 = vadd.f32 %v1236, %v1240
    %v1243 = vadd.f32 %v1237, %v1240
    %v1244 = vadd.f32 %v1238, %v1240
    %v1245 = vmax.f32 %v1241, 0.0
    %v1246 = vmax.f32 %v1242, 0.0
    %v1247 = vmax.f32 %v1243, 0.0
    %v1248 = vmax.f32 %v1244, 0.0
    %s1249 = sld [smem:[#allocation7 + $0x2d]]
    %v1250 = vstv %s1249
    %v1251 = vmul.f32 %v1245, %v1250
    %v1252 = vmul.f32 %v1246, %v1250
    %v1253 = vmul.f32 %v1247, %v1250
    %v1254 = vmul.f32 %v1248, %v1250
    %v1255 = vadd.f32 %v1229, %v1251
    %v1256 = vadd.f32 %v1230, %v1252
    %v1257 = vadd.f32 %v1231, %v1253
    %v1258 = vadd.f32 %v1232, %v1254
    %s1259 = sld [smem:[#allocation3 + $0x2e]]
    %v1260 = vstv %s1259
    %v1261 = vmul.f32 %v1260, %v58
    %v1262 = vmul.f32 %v1260, %v59
    %v1263 = vmul.f32 %v1260, %v60
    %v1264 = vmul.f32 %v1260, %v61
    %s1265 = sld [smem:[#allocation5 + $0x2e]]
    %v1266 = vstv %s1265
    %v1267 = vadd.f32 %v1261, %v1266
    %v1268 = vadd.f32 %v1262, %v1266
    %v1269 = vadd.f32 %v1263, %v1266
    %v1270 = vadd.f32 %v1264, %v1266
    %v1271 = vmax.f32 %v1267, 0.0
    %v1272 = vmax.f32 %v1268, 0.0
    %v1273 = vmax.f32 %v1269, 0.0
    %v1274 = vmax.f32 %v1270, 0.0
    %s1275 = sld [smem:[#allocation7 + $0x2e]]
    %v1276 = vstv %s1275
    %v1277 = vmul.f32 %v1271, %v1276
    %v1278 = vmul.f32 %v1272, %v1276
    %v1279 = vmul.f32 %v1273, %v1276
    %v1280 = vmul.f32 %v1274, %v1276
    %v1281 = vadd.f32 %v1255, %v1277
    %v1282 = vadd.f32 %v1256, %v1278
    %v1283 = vadd.f32 %v1257, %v1279
    %v1284 = vadd.f32 %v1258, %v1280
    %s1285 = sld [smem:[#allocation3 + $0x2f]]
    %v1286 = vstv %s1285
    %v1287 = vmul.f32 %v1286, %v58
    %v1288 = vmul.f32 %v1286, %v59
    %v1289 = vmul.f32 %v1286, %v60
    %v1290 = vmul.f32 %v1286, %v61
    %s1291 = sld [smem:[#allocation5 + $0x2f]]
    %v1292 = vstv %s1291
    %v1293 = vadd.f32 %v1287, %v1292
    %v1294 = vadd.f32 %v1288, %v1292
    %v1295 = vadd.f32 %v1289, %v1292
    %v1296 = vadd.f32 %v1290, %v1292
    %v1297 = vmax.f32 %v1293, 0.0
    %v1298 = vmax.f32 %v1294, 0.0
    %v1299 = vmax.f32 %v1295, 0.0
    %v1300 = vmax.f32 %v1296, 0.0
    %s1301 = sld [smem:[#allocation7 + $0x2f]]
    %v1302 = vstv %s1301
    %v1303 = vmul.f32 %v1297, %v1302
    %v1304 = vmul.f32 %v1298, %v1302
    %v1305 = vmul.f32 %v1299, %v1302
    %v1306 = vmul.f32 %v1300, %v1302
    %v1307 = vadd.f32 %v1281, %v1303
    %v1308 = vadd.f32 %v1282, %v1304
    %v1309 = vadd.f32 %v1283, %v1305
    %v1310 = vadd.f32 %v1284, %v1306
    %s1311 = sld [smem:[#allocation3 + $0x30]]
    %v1312 = vstv %s1311
    %v1313 = vmul.f32 %v1312, %v58
    %v1314 = vmul.f32 %v1312, %v59
    %v1315 = vmul.f32 %v1312, %v60
    %v1316 = vmul.f32 %v1312, %v61
    %s1317 = sld [smem:[#allocation5 + $0x30]]
    %v1318 = vstv %s1317
    %v1319 = vadd.f32 %v1313, %v1318
    %v1320 = vadd.f32 %v1314, %v1318
    %v1321 = vadd.f32 %v1315, %v1318
    %v1322 = vadd.f32 %v1316, %v1318
    %v1323 = vmax.f32 %v1319, 0.0
    %v1324 = vmax.f32 %v1320, 0.0
    %v1325 = vmax.f32 %v1321, 0.0
    %v1326 = vmax.f32 %v1322, 0.0
    %s1327 = sld [smem:[#allocation7 + $0x30]]
    %v1328 = vstv %s1327
    %v1329 = vmul.f32 %v1323, %v1328
    %v1330 = vmul.f32 %v1324, %v1328
    %v1331 = vmul.f32 %v1325, %v1328
    %v1332 = vmul.f32 %v1326, %v1328
    %v1333 = vadd.f32 %v1307, %v1329
    %v1334 = vadd.f32 %v1308, %v1330
    %v1335 = vadd.f32 %v1309, %v1331
    %v1336 = vadd.f32 %v1310, %v1332
    %s1337 = sld [smem:[#allocation3 + $0x31]]
    %v1338 = vstv %s1337
    %v1339 = vmul.f32 %v1338, %v58
    %v1340 = vmul.f32 %v1338, %v59
    %v1341 = vmul.f32 %v1338, %v60
    %v1342 = vmul.f32 %v1338, %v61
    %s1343 = sld [smem:[#allocation5 + $0x31]]
    %v1344 = vstv %s1343
    %v1345 = vadd.f32 %v1339, %v1344
    %v1346 = vadd.f32 %v1340, %v1344
    %v1347 = vadd.f32 %v1341, %v1344
    %v1348 = vadd.f32 %v1342, %v1344
    %v1349 = vmax.f32 %v1345, 0.0
    %v1350 = vmax.f32 %v1346, 0.0
    %v1351 = vmax.f32 %v1347, 0.0
    %v1352 = vmax.f32 %v1348, 0.0
    %s1353 = sld [smem:[#allocation7 + $0x31]]
    %v1354 = vstv %s1353
    %v1355 = vmul.f32 %v1349, %v1354
    %v1356 = vmul.f32 %v1350, %v1354
    %v1357 = vmul.f32 %v1351, %v1354
    %v1358 = vmul.f32 %v1352, %v1354
    %v1359 = vadd.f32 %v1333, %v1355
    %v1360 = vadd.f32 %v1334, %v1356
    %v1361 = vadd.f32 %v1335, %v1357
    %v1362 = vadd.f32 %v1336, %v1358
    %s1363 = sld [smem:[#allocation3 + $0x32]]
    %v1364 = vstv %s1363
    %v1365 = vmul.f32 %v1364, %v58
    %v1366 = vmul.f32 %v1364, %v59
    %v1367 = vmul.f32 %v1364, %v60
    %v1368 = vmul.f32 %v1364, %v61
    %s1369 = sld [smem:[#allocation5 + $0x32]]
    %v1370 = vstv %s1369
    %v1371 = vadd.f32 %v1365, %v1370
    %v1372 = vadd.f32 %v1366, %v1370
    %v1373 = vadd.f32 %v1367, %v1370
    %v1374 = vadd.f32 %v1368, %v1370
    %v1375 = vmax.f32 %v1371, 0.0
    %v1376 = vmax.f32 %v1372, 0.0
    %v1377 = vmax.f32 %v1373, 0.0
    %v1378 = vmax.f32 %v1374, 0.0
    %s1379 = sld [smem:[#allocation7 + $0x32]]
    %v1380 = vstv %s1379
    %v1381 = vmul.f32 %v1375, %v1380
    %v1382 = vmul.f32 %v1376, %v1380
    %v1383 = vmul.f32 %v1377, %v1380
    %v1384 = vmul.f32 %v1378, %v1380
    %v1385 = vadd.f32 %v1359, %v1381
    %v1386 = vadd.f32 %v1360, %v1382
    %v1387 = vadd.f32 %v1361, %v1383
    %v1388 = vadd.f32 %v1362, %v1384
    %s1389 = sld [smem:[#allocation3 + $0x33]]
    %v1390 = vstv %s1389
    %v1391 = vmul.f32 %v1390, %v58
    %v1392 = vmul.f32 %v1390, %v59
    %v1393 = vmul.f32 %v1390, %v60
    %v1394 = vmul.f32 %v1390, %v61
    %s1395 = sld [smem:[#allocation5 + $0x33]]
    %v1396 = vstv %s1395
    %v1397 = vadd.f32 %v1391, %v1396
    %v1398 = vadd.f32 %v1392, %v1396
    %v1399 = vadd.f32 %v1393, %v1396
    %v1400 = vadd.f32 %v1394, %v1396
    %v1401 = vmax.f32 %v1397, 0.0
    %v1402 = vmax.f32 %v1398, 0.0
    %v1403 = vmax.f32 %v1399, 0.0
    %v1404 = vmax.f32 %v1400, 0.0
    %s1405 = sld [smem:[#allocation7 + $0x33]]
    %v1406 = vstv %s1405
    %v1407 = vmul.f32 %v1401, %v1406
    %v1408 = vmul.f32 %v1402, %v1406
    %v1409 = vmul.f32 %v1403, %v1406
    %v1410 = vmul.f32 %v1404, %v1406
    %v1411 = vadd.f32 %v1385, %v1407
    %v1412 = vadd.f32 %v1386, %v1408
    %v1413 = vadd.f32 %v1387, %v1409
    %v1414 = vadd.f32 %v1388, %v1410
    %s1415 = sld [smem:[#allocation3 + $0x34]]
    %v1416 = vstv %s1415
    %v1417 = vmul.f32 %v1416, %v58
    %v1418 = vmul.f32 %v1416, %v59
    %v1419 = vmul.f32 %v1416, %v60
    %v1420 = vmul.f32 %v1416, %v61
    %s1421 = sld [smem:[#allocation5 + $0x34]]
    %v1422 = vstv %s1421
    %v1423 = vadd.f32 %v1417, %v1422
    %v1424 = vadd.f32 %v1418, %v1422
    %v1425 = vadd.f32 %v1419, %v1422
    %v1426 = vadd.f32 %v1420, %v1422
    %v1427 = vmax.f32 %v1423, 0.0
    %v1428 = vmax.f32 %v1424, 0.0
    %v1429 = vmax.f32 %v1425, 0.0
    %v1430 = vmax.f32 %v1426, 0.0
    %s1431 = sld [smem:[#allocation7 + $0x34]]
    %v1432 = vstv %s1431
    %v1433 = vmul.f32 %v1427, %v1432
    %v1434 = vmul.f32 %v1428, %v1432
    %v1435 = vmul.f32 %v1429, %v1432
    %v1436 = vmul.f32 %v1430, %v1432
    %v1437 = vadd.f32 %v1411, %v1433
    %v1438 = vadd.f32 %v1412, %v1434
    %v1439 = vadd.f32 %v1413, %v1435
    %v1440 = vadd.f32 %v1414, %v1436
    %s1441 = sld [smem:[#allocation3 + $0x35]]
    %v1442 = vstv %s1441
    %v1443 = vmul.f32 %v1442, %v58
    %v1444 = vmul.f32 %v1442, %v59
    %v1445 = vmul.f32 %v1442, %v60
    %v1446 = vmul.f32 %v1442, %v61
    %s1447 = sld [smem:[#allocation5 + $0x35]]
    %v1448 = vstv %s1447
    %v1449 = vadd.f32 %v1443, %v1448
    %v1450 = vadd.f32 %v1444, %v1448
    %v1451 = vadd.f32 %v1445, %v1448
    %v1452 = vadd.f32 %v1446, %v1448
    %v1453 = vmax.f32 %v1449, 0.0
    %v1454 = vmax.f32 %v1450, 0.0
    %v1455 = vmax.f32 %v1451, 0.0
    %v1456 = vmax.f32 %v1452, 0.0
    %s1457 = sld [smem:[#allocation7 + $0x35]]
    %v1458 = vstv %s1457
    %v1459 = vmul.f32 %v1453, %v1458
    %v1460 = vmul.f32 %v1454, %v1458
    %v1461 = vmul.f32 %v1455, %v1458
    %v1462 = vmul.f32 %v1456, %v1458
    %v1463 = vadd.f32 %v1437, %v1459
    %v1464 = vadd.f32 %v1438, %v1460
    %v1465 = vadd.f32 %v1439, %v1461
    %v1466 = vadd.f32 %v1440, %v1462
    %s1467 = sld [smem:[#allocation3 + $0x36]]
    %v1468 = vstv %s1467
    %v1469 = vmul.f32 %v1468, %v58
    %v1470 = vmul.f32 %v1468, %v59
    %v1471 = vmul.f32 %v1468, %v60
    %v1472 = vmul.f32 %v1468, %v61
    %s1473 = sld [smem:[#allocation5 + $0x36]]
    %v1474 = vstv %s1473
    %v1475 = vadd.f32 %v1469, %v1474
    %v1476 = vadd.f32 %v1470, %v1474
    %v1477 = vadd.f32 %v1471, %v1474
    %v1478 = vadd.f32 %v1472, %v1474
    %v1479 = vmax.f32 %v1475, 0.0
    %v1480 = vmax.f32 %v1476, 0.0
    %v1481 = vmax.f32 %v1477, 0.0
    %v1482 = vmax.f32 %v1478, 0.0
    %s1483 = sld [smem:[#allocation7 + $0x36]]
    %v1484 = vstv %s1483
    %v1485 = vmul.f32 %v1479, %v1484
    %v1486 = vmul.f32 %v1480, %v1484
    %v1487 = vmul.f32 %v1481, %v1484
    %v1488 = vmul.f32 %v1482, %v1484
    %v1489 = vadd.f32 %v1463, %v1485
    %v1490 = vadd.f32 %v1464, %v1486
    %v1491 = vadd.f32 %v1465, %v1487
    %v1492 = vadd.f32 %v1466, %v1488
    %s1493 = sld [smem:[#allocation3 + $0x37]]
    %v1494 = vstv %s1493
    %v1495 = vmul.f32 %v1494, %v58
    %v1496 = vmul.f32 %v1494, %v59
    %v1497 = vmul.f32 %v1494, %v60
    %v1498 = vmul.f32 %v1494, %v61
    %s1499 = sld [smem:[#allocation5 + $0x37]]
    %v1500 = vstv %s1499
    %v1501 = vadd.f32 %v1495, %v1500
    %v1502 = vadd.f32 %v1496, %v1500
    %v1503 = vadd.f32 %v1497, %v1500
    %v1504 = vadd.f32 %v1498, %v1500
    %v1505 = vmax.f32 %v1501, 0.0
    %v1506 = vmax.f32 %v1502, 0.0
    %v1507 = vmax.f32 %v1503, 0.0
    %v1508 = vmax.f32 %v1504, 0.0
    %s1509 = sld [smem:[#allocation7 + $0x37]]
    %v1510 = vstv %s1509
    %v1511 = vmul.f32 %v1505, %v1510
    %v1512 = vmul.f32 %v1506, %v1510
    %v1513 = vmul.f32 %v1507, %v1510
    %v1514 = vmul.f32 %v1508, %v1510
    %v1515 = vadd.f32 %v1489, %v1511
    %v1516 = vadd.f32 %v1490, %v1512
    %v1517 = vadd.f32 %v1491, %v1513
    %v1518 = vadd.f32 %v1492, %v1514
    %s1519 = sld [smem:[#allocation3 + $0x38]]
    %v1520 = vstv %s1519
    %v1521 = vmul.f32 %v1520, %v58
    %v1522 = vmul.f32 %v1520, %v59
    %v1523 = vmul.f32 %v1520, %v60
    %v1524 = vmul.f32 %v1520, %v61
    %s1525 = sld [smem:[#allocation5 + $0x38]]
    %v1526 = vstv %s1525
    %v1527 = vadd.f32 %v1521, %v1526
    %v1528 = vadd.f32 %v1522, %v1526
    %v1529 = vadd.f32 %v1523, %v1526
    %v1530 = vadd.f32 %v1524, %v1526
    %v1531 = vmax.f32 %v1527, 0.0
    %v1532 = vmax.f32 %v1528, 0.0
    %v1533 = vmax.f32 %v1529, 0.0
    %v1534 = vmax.f32 %v1530, 0.0
    %s1535 = sld [smem:[#allocation7 + $0x38]]
    %v1536 = vstv %s1535
    %v1537 = vmul.f32 %v1531, %v1536
    %v1538 = vmul.f32 %v1532, %v1536
    %v1539 = vmul.f32 %v1533, %v1536
    %v1540 = vmul.f32 %v1534, %v1536
    %v1541 = vadd.f32 %v1515, %v1537
    %v1542 = vadd.f32 %v1516, %v1538
    %v1543 = vadd.f32 %v1517, %v1539
    %v1544 = vadd.f32 %v1518, %v1540
    %s1545 = sld [smem:[#allocation3 + $0x39]]
    %v1546 = vstv %s1545
    %v1547 = vmul.f32 %v1546, %v58
    %v1548 = vmul.f32 %v1546, %v59
    %v1549 = vmul.f32 %v1546, %v60
    %v1550 = vmul.f32 %v1546, %v61
    %s1551 = sld [smem:[#allocation5 + $0x39]]
    %v1552 = vstv %s1551
    %v1553 = vadd.f32 %v1547, %v1552
    %v1554 = vadd.f32 %v1548, %v1552
    %v1555 = vadd.f32 %v1549, %v1552
    %v1556 = vadd.f32 %v1550, %v1552
    %v1557 = vmax.f32 %v1553, 0.0
    %v1558 = vmax.f32 %v1554, 0.0
    %v1559 = vmax.f32 %v1555, 0.0
    %v1560 = vmax.f32 %v1556, 0.0
    %s1561 = sld [smem:[#allocation7 + $0x39]]
    %v1562 = vstv %s1561
    %v1563 = vmul.f32 %v1557, %v1562
    %v1564 = vmul.f32 %v1558, %v1562
    %v1565 = vmul.f32 %v1559, %v1562
    %v1566 = vmul.f32 %v1560, %v1562
    %v1567 = vadd.f32 %v1541, %v1563
    %v1568 = vadd.f32 %v1542, %v1564
    %v1569 = vadd.f32 %v1543, %v1565
    %v1570 = vadd.f32 %v1544, %v1566
    %s1571 = sld [smem:[#allocation3 + $0x3a]]
    %v1572 = vstv %s1571
    %v1573 = vmul.f32 %v1572, %v58
    %v1574 = vmul.f32 %v1572, %v59
    %v1575 = vmul.f32 %v1572, %v60
    %v1576 = vmul.f32 %v1572, %v61
    %s1577 = sld [smem:[#allocation5 + $0x3a]]
    %v1578 = vstv %s1577
    %v1579 = vadd.f32 %v1573, %v1578
    %v1580 = vadd.f32 %v1574, %v1578
    %v1581 = vadd.f32 %v1575, %v1578
    %v1582 = vadd.f32 %v1576, %v1578
    %v1583 = vmax.f32 %v1579, 0.0
    %v1584 = vmax.f32 %v1580, 0.0
    %v1585 = vmax.f32 %v1581, 0.0
    %v1586 = vmax.f32 %v1582, 0.0
    %s1587 = sld [smem:[#allocation7 + $0x3a]]
    %v1588 = vstv %s1587
    %v1589 = vmul.f32 %v1583, %v1588
    %v1590 = vmul.f32 %v1584, %v1588
    %v1591 = vmul.f32 %v1585, %v1588
    %v1592 = vmul.f32 %v1586, %v1588
    %v1593 = vadd.f32 %v1567, %v1589
    %v1594 = vadd.f32 %v1568, %v1590
    %v1595 = vadd.f32 %v1569, %v1591
    %v1596 = vadd.f32 %v1570, %v1592
    %s1597 = sld [smem:[#allocation3 + $0x3b]]
    %v1598 = vstv %s1597
    %v1599 = vmul.f32 %v1598, %v58
    %v1600 = vmul.f32 %v1598, %v59
    %v1601 = vmul.f32 %v1598, %v60
    %v1602 = vmul.f32 %v1598, %v61
    %s1603 = sld [smem:[#allocation5 + $0x3b]]
    %v1604 = vstv %s1603
    %v1605 = vadd.f32 %v1599, %v1604
    %v1606 = vadd.f32 %v1600, %v1604
    %v1607 = vadd.f32 %v1601, %v1604
    %v1608 = vadd.f32 %v1602, %v1604
    %v1609 = vmax.f32 %v1605, 0.0
    %v1610 = vmax.f32 %v1606, 0.0
    %v1611 = vmax.f32 %v1607, 0.0
    %v1612 = vmax.f32 %v1608, 0.0
    %s1613 = sld [smem:[#allocation7 + $0x3b]]
    %v1614 = vstv %s1613
    %v1615 = vmul.f32 %v1609, %v1614
    %v1616 = vmul.f32 %v1610, %v1614
    %v1617 = vmul.f32 %v1611, %v1614
    %v1618 = vmul.f32 %v1612, %v1614
    %v1619 = vadd.f32 %v1593, %v1615
    %v1620 = vadd.f32 %v1594, %v1616
    %v1621 = vadd.f32 %v1595, %v1617
    %v1622 = vadd.f32 %v1596, %v1618
    %s1623 = sld [smem:[#allocation3 + $0x3c]]
    %v1624 = vstv %s1623
    %v1625 = vmul.f32 %v1624, %v58
    %v1626 = vmul.f32 %v1624, %v59
    %v1627 = vmul.f32 %v1624, %v60
    %v1628 = vmul.f32 %v1624, %v61
    %s1629 = sld [smem:[#allocation5 + $0x3c]]
    %v1630 = vstv %s1629
    %v1631 = vadd.f32 %v1625, %v1630
    %v1632 = vadd.f32 %v1626, %v1630
    %v1633 = vadd.f32 %v1627, %v1630
    %v1634 = vadd.f32 %v1628, %v1630
    %v1635 = vmax.f32 %v1631, 0.0
    %v1636 = vmax.f32 %v1632, 0.0
    %v1637 = vmax.f32 %v1633, 0.0
    %v1638 = vmax.f32 %v1634, 0.0
    %s1639 = sld [smem:[#allocation7 + $0x3c]]
    %v1640 = vstv %s1639
    %v1641 = vmul.f32 %v1635, %v1640
    %v1642 = vmul.f32 %v1636, %v1640
    %v1643 = vmul.f32 %v1637, %v1640
    %v1644 = vmul.f32 %v1638, %v1640
    %v1645 = vadd.f32 %v1619, %v1641
    %v1646 = vadd.f32 %v1620, %v1642
    %v1647 = vadd.f32 %v1621, %v1643
    %v1648 = vadd.f32 %v1622, %v1644
    %s1649 = sld [smem:[#allocation3 + $0x3d]]
    %v1650 = vstv %s1649
    %v1651 = vmul.f32 %v1650, %v58
    %v1652 = vmul.f32 %v1650, %v59
    %v1653 = vmul.f32 %v1650, %v60
    %v1654 = vmul.f32 %v1650, %v61
    %s1655 = sld [smem:[#allocation5 + $0x3d]]
    %v1656 = vstv %s1655
    %v1657 = vadd.f32 %v1651, %v1656
    %v1658 = vadd.f32 %v1652, %v1656
    %v1659 = vadd.f32 %v1653, %v1656
    %v1660 = vadd.f32 %v1654, %v1656
    %v1661 = vmax.f32 %v1657, 0.0
    %v1662 = vmax.f32 %v1658, 0.0
    %v1663 = vmax.f32 %v1659, 0.0
    %v1664 = vmax.f32 %v1660, 0.0
    %s1665 = sld [smem:[#allocation7 + $0x3d]]
    %v1666 = vstv %s1665
    %v1667 = vmul.f32 %v1661, %v1666
    %v1668 = vmul.f32 %v1662, %v1666
    %v1669 = vmul.f32 %v1663, %v1666
    %v1670 = vmul.f32 %v1664, %v1666
    %v1671 = vadd.f32 %v1645, %v1667
    %v1672 = vadd.f32 %v1646, %v1668
    %v1673 = vadd.f32 %v1647, %v1669
    %v1674 = vadd.f32 %v1648, %v1670
    %s1675 = sld [smem:[#allocation3 + $0x3e]]
    %v1676 = vstv %s1675
    %v1677 = vmul.f32 %v1676, %v58
    %v1678 = vmul.f32 %v1676, %v59
    %v1679 = vmul.f32 %v1676, %v60
    %v1680 = vmul.f32 %v1676, %v61
    %s1681 = sld [smem:[#allocation5 + $0x3e]]
    %v1682 = vstv %s1681
    %v1683 = vadd.f32 %v1677, %v1682
    %v1684 = vadd.f32 %v1678, %v1682
    %v1685 = vadd.f32 %v1679, %v1682
    %v1686 = vadd.f32 %v1680, %v1682
    %v1687 = vmax.f32 %v1683, 0.0
    %v1688 = vmax.f32 %v1684, 0.0
    %v1689 = vmax.f32 %v1685, 0.0
    %v1690 = vmax.f32 %v1686, 0.0
    %s1691 = sld [smem:[#allocation7 + $0x3e]]
    %v1692 = vstv %s1691
    %v1693 = vmul.f32 %v1687, %v1692
    %v1694 = vmul.f32 %v1688, %v1692
    %v1695 = vmul.f32 %v1689, %v1692
    %v1696 = vmul.f32 %v1690, %v1692
    %v1697 = vadd.f32 %v1671, %v1693
    %v1698 = vadd.f32 %v1672, %v1694
    %v1699 = vadd.f32 %v1673, %v1695
    %v1700 = vadd.f32 %v1674, %v1696
    %s1701 = sld [smem:[#allocation3 + $0x3f]]
    %v1702 = vstv %s1701
    %v1703 = vmul.f32 %v1702, %v58
    %v1704 = vmul.f32 %v1702, %v59
    %v1705 = vmul.f32 %v1702, %v60
    %v1706 = vmul.f32 %v1702, %v61
    %s1707 = sld [smem:[#allocation5 + $0x3f]]
    %v1708 = vstv %s1707
    %v1709 = vadd.f32 %v1703, %v1708
    %v1710 = vadd.f32 %v1704, %v1708
    %v1711 = vadd.f32 %v1705, %v1708
    %v1712 = vadd.f32 %v1706, %v1708
    %v1713 = vmax.f32 %v1709, 0.0
    %v1714 = vmax.f32 %v1710, 0.0
    %v1715 = vmax.f32 %v1711, 0.0
    %v1716 = vmax.f32 %v1712, 0.0
    %s1717 = sld [smem:[#allocation7 + $0x3f]]
    %v1718 = vstv %s1717
    %v1719 = vmul.f32 %v1713, %v1718
    %v1720 = vmul.f32 %v1714, %v1718
    %v1721 = vmul.f32 %v1715, %v1718
    %v1722 = vmul.f32 %v1716, %v1718
    %v1723 = vadd.f32 %v1697, %v1719
    %v1724 = vadd.f32 %v1698, %v1720
    %v1725 = vadd.f32 %v1699, %v1721
    %v1726 = vadd.f32 %v1700, %v1722
    %s1727 = sld [smem:[#allocation3 + $0x40]]
    %v1728 = vstv %s1727
    %v1729 = vmul.f32 %v1728, %v58
    %v1730 = vmul.f32 %v1728, %v59
    %v1731 = vmul.f32 %v1728, %v60
    %v1732 = vmul.f32 %v1728, %v61
    %s1733 = sld [smem:[#allocation5 + $0x40]]
    %v1734 = vstv %s1733
    %v1735 = vadd.f32 %v1729, %v1734
    %v1736 = vadd.f32 %v1730, %v1734
    %v1737 = vadd.f32 %v1731, %v1734
    %v1738 = vadd.f32 %v1732, %v1734
    %v1739 = vmax.f32 %v1735, 0.0
    %v1740 = vmax.f32 %v1736, 0.0
    %v1741 = vmax.f32 %v1737, 0.0
    %v1742 = vmax.f32 %v1738, 0.0
    %s1743 = sld [smem:[#allocation7 + $0x40]]
    %v1744 = vstv %s1743
    %v1745 = vmul.f32 %v1739, %v1744
    %v1746 = vmul.f32 %v1740, %v1744
    %v1747 = vmul.f32 %v1741, %v1744
    %v1748 = vmul.f32 %v1742, %v1744
    %v1749 = vadd.f32 %v1723, %v1745
    %v1750 = vadd.f32 %v1724, %v1746
    %v1751 = vadd.f32 %v1725, %v1747
    %v1752 = vadd.f32 %v1726, %v1748
    %s1753 = sld [smem:[#allocation3 + $0x41]]
    %v1754 = vstv %s1753
    %v1755 = vmul.f32 %v1754, %v58
    %v1756 = vmul.f32 %v1754, %v59
    %v1757 = vmul.f32 %v1754, %v60
    %v1758 = vmul.f32 %v1754, %v61
    %s1759 = sld [smem:[#allocation5 + $0x41]]
    %v1760 = vstv %s1759
    %v1761 = vadd.f32 %v1755, %v1760
    %v1762 = vadd.f32 %v1756, %v1760
    %v1763 = vadd.f32 %v1757, %v1760
    %v1764 = vadd.f32 %v1758, %v1760
    %v1765 = vmax.f32 %v1761, 0.0
    %v1766 = vmax.f32 %v1762, 0.0
    %v1767 = vmax.f32 %v1763, 0.0
    %v1768 = vmax.f32 %v1764, 0.0
    %s1769 = sld [smem:[#allocation7 + $0x41]]
    %v1770 = vstv %s1769
    %v1771 = vmul.f32 %v1765, %v1770
    %v1772 = vmul.f32 %v1766, %v1770
    %v1773 = vmul.f32 %v1767, %v1770
    %v1774 = vmul.f32 %v1768, %v1770
    %v1775 = vadd.f32 %v1749, %v1771
    %v1776 = vadd.f32 %v1750, %v1772
    %v1777 = vadd.f32 %v1751, %v1773
    %v1778 = vadd.f32 %v1752, %v1774
    %s1779 = sld [smem:[#allocation3 + $0x42]]
    %v1780 = vstv %s1779
    %v1781 = vmul.f32 %v1780, %v58
    %v1782 = vmul.f32 %v1780, %v59
    %v1783 = vmul.f32 %v1780, %v60
    %v1784 = vmul.f32 %v1780, %v61
    %s1785 = sld [smem:[#allocation5 + $0x42]]
    %v1786 = vstv %s1785
    %v1787 = vadd.f32 %v1781, %v1786
    %v1788 = vadd.f32 %v1782, %v1786
    %v1789 = vadd.f32 %v1783, %v1786
    %v1790 = vadd.f32 %v1784, %v1786
    %v1791 = vmax.f32 %v1787, 0.0
    %v1792 = vmax.f32 %v1788, 0.0
    %v1793 = vmax.f32 %v1789, 0.0
    %v1794 = vmax.f32 %v1790, 0.0
    %s1795 = sld [smem:[#allocation7 + $0x42]]
    %v1796 = vstv %s1795
    %v1797 = vmul.f32 %v1791, %v1796
    %v1798 = vmul.f32 %v1792, %v1796
    %v1799 = vmul.f32 %v1793, %v1796
    %v1800 = vmul.f32 %v1794, %v1796
    %v1801 = vadd.f32 %v1775, %v1797
    %v1802 = vadd.f32 %v1776, %v1798
    %v1803 = vadd.f32 %v1777, %v1799
    %v1804 = vadd.f32 %v1778, %v1800
    %s1805 = sld [smem:[#allocation3 + $0x43]]
    %v1806 = vstv %s1805
    %v1807 = vmul.f32 %v1806, %v58
    %v1808 = vmul.f32 %v1806, %v59
    %v1809 = vmul.f32 %v1806, %v60
    %v1810 = vmul.f32 %v1806, %v61
    %s1811 = sld [smem:[#allocation5 + $0x43]]
    %v1812 = vstv %s1811
    %v1813 = vadd.f32 %v1807, %v1812
    %v1814 = vadd.f32 %v1808, %v1812
    %v1815 = vadd.f32 %v1809, %v1812
    %v1816 = vadd.f32 %v1810, %v1812
    %v1817 = vmax.f32 %v1813, 0.0
    %v1818 = vmax.f32 %v1814, 0.0
    %v1819 = vmax.f32 %v1815, 0.0
    %v1820 = vmax.f32 %v1816, 0.0
    %s1821 = sld [smem:[#allocation7 + $0x43]]
    %v1822 = vstv %s1821
    %v1823 = vmul.f32 %v1817, %v1822
    %v1824 = vmul.f32 %v1818, %v1822
    %v1825 = vmul.f32 %v1819, %v1822
    %v1826 = vmul.f32 %v1820, %v1822
    %v1827 = vadd.f32 %v1801, %v1823
    %v1828 = vadd.f32 %v1802, %v1824
    %v1829 = vadd.f32 %v1803, %v1825
    %v1830 = vadd.f32 %v1804, %v1826
    %s1831 = sld [smem:[#allocation3 + $0x44]]
    %v1832 = vstv %s1831
    %v1833 = vmul.f32 %v1832, %v58
    %v1834 = vmul.f32 %v1832, %v59
    %v1835 = vmul.f32 %v1832, %v60
    %v1836 = vmul.f32 %v1832, %v61
    %s1837 = sld [smem:[#allocation5 + $0x44]]
    %v1838 = vstv %s1837
    %v1839 = vadd.f32 %v1833, %v1838
    %v1840 = vadd.f32 %v1834, %v1838
    %v1841 = vadd.f32 %v1835, %v1838
    %v1842 = vadd.f32 %v1836, %v1838
    %v1843 = vmax.f32 %v1839, 0.0
    %v1844 = vmax.f32 %v1840, 0.0
    %v1845 = vmax.f32 %v1841, 0.0
    %v1846 = vmax.f32 %v1842, 0.0
    %s1847 = sld [smem:[#allocation7 + $0x44]]
    %v1848 = vstv %s1847
    %v1849 = vmul.f32 %v1843, %v1848
    %v1850 = vmul.f32 %v1844, %v1848
    %v1851 = vmul.f32 %v1845, %v1848
    %v1852 = vmul.f32 %v1846, %v1848
    %v1853 = vadd.f32 %v1827, %v1849
    %v1854 = vadd.f32 %v1828, %v1850
    %v1855 = vadd.f32 %v1829, %v1851
    %v1856 = vadd.f32 %v1830, %v1852
    %s1857 = sld [smem:[#allocation3 + $0x45]]
    %v1858 = vstv %s1857
    %v1859 = vmul.f32 %v1858, %v58
    %v1860 = vmul.f32 %v1858, %v59
    %v1861 = vmul.f32 %v1858, %v60
    %v1862 = vmul.f32 %v1858, %v61
    %s1863 = sld [smem:[#allocation5 + $0x45]]
    %v1864 = vstv %s1863
    %v1865 = vadd.f32 %v1859, %v1864
    %v1866 = vadd.f32 %v1860, %v1864
    %v1867 = vadd.f32 %v1861, %v1864
    %v1868 = vadd.f32 %v1862, %v1864
    %v1869 = vmax.f32 %v1865, 0.0
    %v1870 = vmax.f32 %v1866, 0.0
    %v1871 = vmax.f32 %v1867, 0.0
    %v1872 = vmax.f32 %v1868, 0.0
    %s1873 = sld [smem:[#allocation7 + $0x45]]
    %v1874 = vstv %s1873
    %v1875 = vmul.f32 %v1869, %v1874
    %v1876 = vmul.f32 %v1870, %v1874
    %v1877 = vmul.f32 %v1871, %v1874
    %v1878 = vmul.f32 %v1872, %v1874
    %v1879 = vadd.f32 %v1853, %v1875
    %v1880 = vadd.f32 %v1854, %v1876
    %v1881 = vadd.f32 %v1855, %v1877
    %v1882 = vadd.f32 %v1856, %v1878
    %s1883 = sld [smem:[#allocation3 + $0x46]]
    %v1884 = vstv %s1883
    %v1885 = vmul.f32 %v1884, %v58
    %v1886 = vmul.f32 %v1884, %v59
    %v1887 = vmul.f32 %v1884, %v60
    %v1888 = vmul.f32 %v1884, %v61
    %s1889 = sld [smem:[#allocation5 + $0x46]]
    %v1890 = vstv %s1889
    %v1891 = vadd.f32 %v1885, %v1890
    %v1892 = vadd.f32 %v1886, %v1890
    %v1893 = vadd.f32 %v1887, %v1890
    %v1894 = vadd.f32 %v1888, %v1890
    %v1895 = vmax.f32 %v1891, 0.0
    %v1896 = vmax.f32 %v1892, 0.0
    %v1897 = vmax.f32 %v1893, 0.0
    %v1898 = vmax.f32 %v1894, 0.0
    %s1899 = sld [smem:[#allocation7 + $0x46]]
    %v1900 = vstv %s1899
    %v1901 = vmul.f32 %v1895, %v1900
    %v1902 = vmul.f32 %v1896, %v1900
    %v1903 = vmul.f32 %v1897, %v1900
    %v1904 = vmul.f32 %v1898, %v1900
    %v1905 = vadd.f32 %v1879, %v1901
    %v1906 = vadd.f32 %v1880, %v1902
    %v1907 = vadd.f32 %v1881, %v1903
    %v1908 = vadd.f32 %v1882, %v1904
    %s1909 = sld [smem:[#allocation3 + $0x47]]
    %v1910 = vstv %s1909
    %v1911 = vmul.f32 %v1910, %v58
    %v1912 = vmul.f32 %v1910, %v59
    %v1913 = vmul.f32 %v1910, %v60
    %v1914 = vmul.f32 %v1910, %v61
    %s1915 = sld [smem:[#allocation5 + $0x47]]
    %v1916 = vstv %s1915
    %v1917 = vadd.f32 %v1911, %v1916
    %v1918 = vadd.f32 %v1912, %v1916
    %v1919 = vadd.f32 %v1913, %v1916
    %v1920 = vadd.f32 %v1914, %v1916
    %v1921 = vmax.f32 %v1917, 0.0
    %v1922 = vmax.f32 %v1918, 0.0
    %v1923 = vmax.f32 %v1919, 0.0
    %v1924 = vmax.f32 %v1920, 0.0
    %s1925 = sld [smem:[#allocation7 + $0x47]]
    %v1926 = vstv %s1925
    %v1927 = vmul.f32 %v1921, %v1926
    %v1928 = vmul.f32 %v1922, %v1926
    %v1929 = vmul.f32 %v1923, %v1926
    %v1930 = vmul.f32 %v1924, %v1926
    %v1931 = vadd.f32 %v1905, %v1927
    %v1932 = vadd.f32 %v1906, %v1928
    %v1933 = vadd.f32 %v1907, %v1929
    %v1934 = vadd.f32 %v1908, %v1930
    %s1935 = sld [smem:[#allocation3 + $0x48]]
    %v1936 = vstv %s1935
    %v1937 = vmul.f32 %v1936, %v58
    %v1938 = vmul.f32 %v1936, %v59
    %v1939 = vmul.f32 %v1936, %v60
    %v1940 = vmul.f32 %v1936, %v61
    %s1941 = sld [smem:[#allocation5 + $0x48]]
    %v1942 = vstv %s1941
    %v1943 = vadd.f32 %v1937, %v1942
    %v1944 = vadd.f32 %v1938, %v1942
    %v1945 = vadd.f32 %v1939, %v1942
    %v1946 = vadd.f32 %v1940, %v1942
    %v1947 = vmax.f32 %v1943, 0.0
    %v1948 = vmax.f32 %v1944, 0.0
    %v1949 = vmax.f32 %v1945, 0.0
    %v1950 = vmax.f32 %v1946, 0.0
    %s1951 = sld [smem:[#allocation7 + $0x48]]
    %v1952 = vstv %s1951
    %v1953 = vmul.f32 %v1947, %v1952
    %v1954 = vmul.f32 %v1948, %v1952
    %v1955 = vmul.f32 %v1949, %v1952
    %v1956 = vmul.f32 %v1950, %v1952
    %v1957 = vadd.f32 %v1931, %v1953
    %v1958 = vadd.f32 %v1932, %v1954
    %v1959 = vadd.f32 %v1933, %v1955
    %v1960 = vadd.f32 %v1934, %v1956
    %s1961 = sld [smem:[#allocation3 + $0x49]]
    %v1962 = vstv %s1961
    %v1963 = vmul.f32 %v1962, %v58
    %v1964 = vmul.f32 %v1962, %v59
    %v1965 = vmul.f32 %v1962, %v60
    %v1966 = vmul.f32 %v1962, %v61
    %s1967 = sld [smem:[#allocation5 + $0x49]]
    %v1968 = vstv %s1967
    %v1969 = vadd.f32 %v1963, %v1968
    %v1970 = vadd.f32 %v1964, %v1968
    %v1971 = vadd.f32 %v1965, %v1968
    %v1972 = vadd.f32 %v1966, %v1968
    %v1973 = vmax.f32 %v1969, 0.0
    %v1974 = vmax.f32 %v1970, 0.0
    %v1975 = vmax.f32 %v1971, 0.0
    %v1976 = vmax.f32 %v1972, 0.0
    %s1977 = sld [smem:[#allocation7 + $0x49]]
    %v1978 = vstv %s1977
    %v1979 = vmul.f32 %v1973, %v1978
    %v1980 = vmul.f32 %v1974, %v1978
    %v1981 = vmul.f32 %v1975, %v1978
    %v1982 = vmul.f32 %v1976, %v1978
    %v1983 = vadd.f32 %v1957, %v1979
    %v1984 = vadd.f32 %v1958, %v1980
    %v1985 = vadd.f32 %v1959, %v1981
    %v1986 = vadd.f32 %v1960, %v1982
    %s1987 = sld [smem:[#allocation3 + $0x4a]]
    %v1988 = vstv %s1987
    %v1989 = vmul.f32 %v1988, %v58
    %v1990 = vmul.f32 %v1988, %v59
    %v1991 = vmul.f32 %v1988, %v60
    %v1992 = vmul.f32 %v1988, %v61
    %s1993 = sld [smem:[#allocation5 + $0x4a]]
    %v1994 = vstv %s1993
    %v1995 = vadd.f32 %v1989, %v1994
    %v1996 = vadd.f32 %v1990, %v1994
    %v1997 = vadd.f32 %v1991, %v1994
    %v1998 = vadd.f32 %v1992, %v1994
    %v1999 = vmax.f32 %v1995, 0.0
    %v2000 = vmax.f32 %v1996, 0.0
    %v2001 = vmax.f32 %v1997, 0.0
    %v2002 = vmax.f32 %v1998, 0.0
    %s2003 = sld [smem:[#allocation7 + $0x4a]]
    %v2004 = vstv %s2003
    %v2005 = vmul.f32 %v1999, %v2004
    %v2006 = vmul.f32 %v2000, %v2004
    %v2007 = vmul.f32 %v2001, %v2004
    %v2008 = vmul.f32 %v2002, %v2004
    %v2009 = vadd.f32 %v1983, %v2005
    %v2010 = vadd.f32 %v1984, %v2006
    %v2011 = vadd.f32 %v1985, %v2007
    %v2012 = vadd.f32 %v1986, %v2008
    %s2013 = sld [smem:[#allocation3 + $0x4b]]
    %v2014 = vstv %s2013
    %v2015 = vmul.f32 %v2014, %v58
    %v2016 = vmul.f32 %v2014, %v59
    %v2017 = vmul.f32 %v2014, %v60
    %v2018 = vmul.f32 %v2014, %v61
    %s2019 = sld [smem:[#allocation5 + $0x4b]]
    %v2020 = vstv %s2019
    %v2021 = vadd.f32 %v2015, %v2020
    %v2022 = vadd.f32 %v2016, %v2020
    %v2023 = vadd.f32 %v2017, %v2020
    %v2024 = vadd.f32 %v2018, %v2020
    %v2025 = vmax.f32 %v2021, 0.0
    %v2026 = vmax.f32 %v2022, 0.0
    %v2027 = vmax.f32 %v2023, 0.0
    %v2028 = vmax.f32 %v2024, 0.0
    %s2029 = sld [smem:[#allocation7 + $0x4b]]
    %v2030 = vstv %s2029
    %v2031 = vmul.f32 %v2025, %v2030
    %v2032 = vmul.f32 %v2026, %v2030
    %v2033 = vmul.f32 %v2027, %v2030
    %v2034 = vmul.f32 %v2028, %v2030
    %v2035 = vadd.f32 %v2009, %v2031
    %v2036 = vadd.f32 %v2010, %v2032
    %v2037 = vadd.f32 %v2011, %v2033
    %v2038 = vadd.f32 %v2012, %v2034
    %s2039 = sld [smem:[#allocation3 + $0x4c]]
    %v2040 = vstv %s2039
    %v2041 = vmul.f32 %v2040, %v58
    %v2042 = vmul.f32 %v2040, %v59
    %v2043 = vmul.f32 %v2040, %v60
    %v2044 = vmul.f32 %v2040, %v61
    %s2045 = sld [smem:[#allocation5 + $0x4c]]
    %v2046 = vstv %s2045
    %v2047 = vadd.f32 %v2041, %v2046
    %v2048 = vadd.f32 %v2042, %v2046
    %v2049 = vadd.f32 %v2043, %v2046
    %v2050 = vadd.f32 %v2044, %v2046
    %v2051 = vmax.f32 %v2047, 0.0
    %v2052 = vmax.f32 %v2048, 0.0
    %v2053 = vmax.f32 %v2049, 0.0
    %v2054 = vmax.f32 %v2050, 0.0
    %s2055 = sld [smem:[#allocation7 + $0x4c]]
    %v2056 = vstv %s2055
    %v2057 = vmul.f32 %v2051, %v2056
    %v2058 = vmul.f32 %v2052, %v2056
    %v2059 = vmul.f32 %v2053, %v2056
    %v2060 = vmul.f32 %v2054, %v2056
    %v2061 = vadd.f32 %v2035, %v2057
    %v2062 = vadd.f32 %v2036, %v2058
    %v2063 = vadd.f32 %v2037, %v2059
    %v2064 = vadd.f32 %v2038, %v2060
    %s2065 = sld [smem:[#allocation3 + $0x4d]]
    %v2066 = vstv %s2065
    %v2067 = vmul.f32 %v2066, %v58
    %v2068 = vmul.f32 %v2066, %v59
    %v2069 = vmul.f32 %v2066, %v60
    %v2070 = vmul.f32 %v2066, %v61
    %s2071 = sld [smem:[#allocation5 + $0x4d]]
    %v2072 = vstv %s2071
    %v2073 = vadd.f32 %v2067, %v2072
    %v2074 = vadd.f32 %v2068, %v2072
    %v2075 = vadd.f32 %v2069, %v2072
    %v2076 = vadd.f32 %v2070, %v2072
    %v2077 = vmax.f32 %v2073, 0.0
    %v2078 = vmax.f32 %v2074, 0.0
    %v2079 = vmax.f32 %v2075, 0.0
    %v2080 = vmax.f32 %v2076, 0.0
    %s2081 = sld [smem:[#allocation7 + $0x4d]]
    %v2082 = vstv %s2081
    %v2083 = vmul.f32 %v2077, %v2082
    %v2084 = vmul.f32 %v2078, %v2082
    %v2085 = vmul.f32 %v2079, %v2082
    %v2086 = vmul.f32 %v2080, %v2082
    %v2087 = vadd.f32 %v2061, %v2083
    %v2088 = vadd.f32 %v2062, %v2084
    %v2089 = vadd.f32 %v2063, %v2085
    %v2090 = vadd.f32 %v2064, %v2086
    %s2091 = sld [smem:[#allocation3 + $0x4e]]
    %v2092 = vstv %s2091
    %v2093 = vmul.f32 %v2092, %v58
    %v2094 = vmul.f32 %v2092, %v59
    %v2095 = vmul.f32 %v2092, %v60
    %v2096 = vmul.f32 %v2092, %v61
    %s2097 = sld [smem:[#allocation5 + $0x4e]]
    %v2098 = vstv %s2097
    %v2099 = vadd.f32 %v2093, %v2098
    %v2100 = vadd.f32 %v2094, %v2098
    %v2101 = vadd.f32 %v2095, %v2098
    %v2102 = vadd.f32 %v2096, %v2098
    %v2103 = vmax.f32 %v2099, 0.0
    %v2104 = vmax.f32 %v2100, 0.0
    %v2105 = vmax.f32 %v2101, 0.0
    %v2106 = vmax.f32 %v2102, 0.0
    %s2107 = sld [smem:[#allocation7 + $0x4e]]
    %v2108 = vstv %s2107
    %v2109 = vmul.f32 %v2103, %v2108
    %v2110 = vmul.f32 %v2104, %v2108
    %v2111 = vmul.f32 %v2105, %v2108
    %v2112 = vmul.f32 %v2106, %v2108
    %v2113 = vadd.f32 %v2087, %v2109
    %v2114 = vadd.f32 %v2088, %v2110
    %v2115 = vadd.f32 %v2089, %v2111
    %v2116 = vadd.f32 %v2090, %v2112
    %s2117 = sld [smem:[#allocation3 + $0x4f]]
    %v2118 = vstv %s2117
    %v2119 = vmul.f32 %v2118, %v58
    %v2120 = vmul.f32 %v2118, %v59
    %v2121 = vmul.f32 %v2118, %v60
    %v2122 = vmul.f32 %v2118, %v61
    %s2123 = sld [smem:[#allocation5 + $0x4f]]
    %v2124 = vstv %s2123
    %v2125 = vadd.f32 %v2119, %v2124
    %v2126 = vadd.f32 %v2120, %v2124
    %v2127 = vadd.f32 %v2121, %v2124
    %v2128 = vadd.f32 %v2122, %v2124
    %v2129 = vmax.f32 %v2125, 0.0
    %v2130 = vmax.f32 %v2126, 0.0
    %v2131 = vmax.f32 %v2127, 0.0
    %v2132 = vmax.f32 %v2128, 0.0
    %s2133 = sld [smem:[#allocation7 + $0x4f]]
    %v2134 = vstv %s2133
    %v2135 = vmul.f32 %v2129, %v2134
    %v2136 = vmul.f32 %v2130, %v2134
    %v2137 = vmul.f32 %v2131, %v2134
    %v2138 = vmul.f32 %v2132, %v2134
    %v2139 = vadd.f32 %v2113, %v2135
    %v2140 = vadd.f32 %v2114, %v2136
    %v2141 = vadd.f32 %v2115, %v2137
    %v2142 = vadd.f32 %v2116, %v2138
    %2143 = vst [vmem:[%s5] sm:$0xff] %v2139
    %2144 = vst [vmem:[%s5 + $0x8] sm:$0xff] %v2140
    %2145 = vst [vmem:[%s5 + $0x10] sm:$0xff] %v2141
    %2146 = vst [vmem:[%s5 + $0x18] sm:$0xff] %v2142
    // Predicated region
    $region34: #{l2_forward.1} parent=1 // pred_check
      _
    $region35: #{l2_forward.1} parent=1 // pred_check_branch
      %2148 = sbr.rel (0) target = $region37
    $region36: #{l2_forward.1} parent=1 // pred_region
      _
    $region37: #{l2_forward.1} parent=1 // pred_fallthru
      _
    // Predicated region
    $region38: #{l2_forward.1} parent=1 // pred_check
      _
    $region39: #{l2_forward.1} parent=1 // pred_check_branch
      %2150 = sbr.rel (0) target = $region41
    $region40: #{l2_forward.1} parent=1 // pred_region
      _
    $region41: #{l2_forward.1} parent=1 // pred_fallthru
      _
    %2151 = vsyncpa [#allocation4], 1
    %2152 = vsyncpa [#allocation6], 1

</llo_original>
